<compile_context>
chip_gen: v7x
topology: tpu7x:2x2x1
jax: 0.10.0
libtpu: 0.0.40
codegen_flags: <defaults>
</compile_context>

<pallas_src>
import functools

import jax
import jax.numpy as jnp
from jax.experimental import pallas as pl
from jax.experimental.pallas import tpu as pltpu

# ----------------------------- configuration (Model.__init__ kwargs) ---------
GRID_SIZE = 8              # grid_size (256 % grid_size == 0)
EMB_CHANNELS = 4           # emb_channels (<= grid_size)
INNER_ITERS = 2            # inner_iters
OUTER_ITERS = 2            # outer_iters
OUTER_RESIDUAL = True      # outer_residual
INIT_SCALE = 0.05          # init_scale
RESIDUAL_SCALE = 0.5       # residual_scale
SEPARATE_PARAMS = False    # separate_params
BLOCK_SIZE = 8             # Gridnet block size (the literal `8` in make_model)
IMG_SIZE = 256
PATCH = IMG_SIZE // GRID_SIZE
N_CELLS = GRID_SIZE ** 3           # 512 (lane-dense)
N_CLASSES = 1000
N_CLASSES_PAD = 1024               # padded readout width (8 x 128)
RO_TILE_N = 512                    # readout column tile (2 parallel tiles)
LN_EPS = 1e-5

assert IMG_SIZE % GRID_SIZE == 0
assert EMB_CHANNELS <= GRID_SIZE
# With BLOCK_SIZE >= GRID_SIZE every valid 3x3x3 neighbour lies in the same
# block, so the out-of-block ("frozen") transfer matrix is identically zero and
# the frozen term of a Gridnet step reduces to the bias -> drop that matmul.
assert BLOCK_SIZE >= GRID_SIZE


# ----------------------------- in-kernel helpers ------------------------------
def _layer_norm(x, gamma, beta):
    mean = jnp.mean(x, axis=-1, keepdims=True)
    var = jnp.mean(jnp.square(x - mean), axis=-1, keepdims=True)
    return (x - mean) * jax.lax.rsqrt(var + LN_EPS) * gamma + beta


# ----------------------------- kernel 1: patch embedding ----------------------
def _patch_embed_kernel(p_ref, w_ref, add_ref, o_ref):
    # p   : (Dg*Dg, 3*P*P) patches of one image
    # w   : (3*P*P, Dg)    conv weights; columns >= EMB_CHANNELS are zero
    # add : (Dg*Dg, Dg)    conv bias for cols < EMB, init_in for cols >= EMB
    # Output is directly in grid-cell layout -> the scatter
    # `init_acts[..., :emb] = patch_emb(x)` is fused away.
    o_ref[...] = (
        jnp.dot(p_ref[...], w_ref[...], preferred_element_type=jnp.float32)
        + add_ref[...]
    )


def patch_embed(patches, w8, add):
    m, k = patches.shape                      # (B*Dg*Dg, 3*P*P)
    rows = GRID_SIZE * GRID_SIZE
    b = m // rows
    return pl.pallas_call(
        _patch_embed_kernel,
        out_shape=jax.ShapeDtypeStruct((m, GRID_SIZE), jnp.float32),
        grid=(b,),
        in_specs=[
            pl.BlockSpec((rows, k), lambda i: (i, 0)),
            pl.BlockSpec((k, GRID_SIZE), lambda i: (0, 0)),
            pl.BlockSpec((rows, GRID_SIZE), lambda i: (0, 0)),
        ],
        out_specs=pl.BlockSpec((rows, GRID_SIZE), lambda i: (i, 0)),
        compiler_params=pltpu.CompilerParams(dimension_semantics=("parallel",)),
    )(patches, w8, add)


# ----------------------------- kernel 2: fused outer loop ---------------------
def _fused_outer_kernel(h_ref, w_ref, gb_ref, ng_ref, nb_ref, rg_ref, rb_ref,
                        o_ref, *, outer_iters, inner_iters, residual_scale,
                        outer_residual, separate_params):
    h = h_ref[...]                             # (B, N) f32
    ng, nb = ng_ref[...], nb_ref[...]
    for i in range(outer_iters):               # static unroll; weights resident
        wi = i if separate_params else 0
        w = w_ref[wi]                          # (N, N) bf16 in-block transfer
        gb = gb_ref[wi]                        # (1, N)  gridnet bias (= frozen)
        x = _layer_norm(h, ng, nb) if outer_residual else h
        acts = x
        for _ in range(inner_iters):           # synchronous inner iterations
            pre = jnp.dot(acts.astype(jnp.bfloat16), w,
                          preferred_element_type=jnp.float32) + gb
            acts = pre * jax.nn.sigmoid(pre)    # SiLU (EUP slot, ~free)
        if outer_residual:
            # h + (gridnet(x) - x)  ==  h + residual_scale * (acts - x)
            h = h + residual_scale * (acts - x)
        else:
            h = x + residual_scale * (acts - x)
            h = _layer_norm(h, ng, nb)
    # Readout LayerNorm fused into the epilogue (saves another launch).
    o_ref[...] = _layer_norm(h, rg_ref[...], rb_ref[...])


def gridnet_outer(h, min_t, g_bias, norm_g, norm_b, ro_g, ro_b):
    bsz, n = h.shape
    n_nets = min_t.shape[0]
    kern = functools.partial(
        _fused_outer_kernel,
        outer_iters=OUTER_ITERS, inner_iters=INNER_ITERS,
        residual_scale=RESIDUAL_SCALE, outer_residual=OUTER_RESIDUAL,
        separate_params=SEPARATE_PARAMS,
    )
    return pl.pallas_call(
        kern,
        out_shape=jax.ShapeDtypeStruct((bsz, n), jnp.float32),
        grid=(1,),
        in_specs=[
            pl.BlockSpec((bsz, n), lambda i: (0, 0)),
            pl.BlockSpec((n_nets, n, n), lambda i: (0, 0, 0)),
            pl.BlockSpec((n_nets, 1, n), lambda i: (0, 0, 0)),
            pl.BlockSpec((1, n), lambda i: (0, 0)),
            pl.BlockSpec((1, n), lambda i: (0, 0)),
            pl.BlockSpec((1, n), lambda i: (0, 0)),
            pl.BlockSpec((1, n), lambda i: (0, 0)),
        ],
        out_specs=pl.BlockSpec((bsz, n), lambda i: (0, 0)),
        compiler_params=pltpu.CompilerParams(dimension_semantics=("arbitrary",)),
    )(h, min_t, g_bias, norm_g, norm_b, ro_g, ro_b)


# ----------------------------- kernel 3: readout matmul -----------------------
def _readout_kernel(h_ref, w_ref, b_ref, o_ref):
    o_ref[...] = (
        jnp.dot(h_ref[...].astype(jnp.bfloat16), w_ref[...],
                preferred_element_type=jnp.float32)
        + b_ref[...]
    )


def readout_matmul(hn, ro_w, ro_b):
    bsz, n = hn.shape
    n_pad = ro_w.shape[1]
    return pl.pallas_call(
        _readout_kernel,
        out_shape=jax.ShapeDtypeStruct((bsz, n_pad), jnp.float32),
        grid=(n_pad // RO_TILE_N,),
        in_specs=[
            pl.BlockSpec((bsz, n), lambda j: (0, 0)),
            pl.BlockSpec((n, RO_TILE_N), lambda j: (0, j)),
            pl.BlockSpec((1, RO_TILE_N), lambda j: (0, j)),
        ],
        out_specs=pl.BlockSpec((bsz, RO_TILE_N), lambda j: (0, j)),
        compiler_params=pltpu.CompilerParams(dimension_semantics=("parallel",)),
    )(hn, ro_w, ro_b)


# ----------------------------- glue: parameter construction -------------------
def build_in_block_transfer(w27, d, bs):
    """Per-cell 27 taps (27, d, d, d) -> dense (N, N) matrix M_T such that
    `acts @ M_T` sums in-block 3x3x3 neighbour contributions; out-of-grid or
    out-of-block neighbours contribute zero."""
    idx = jnp.arange(d)
    zz, yy, xx = jnp.meshgrid(idx, idx, idx, indexing="ij")
    c_flat = ((zz * d + yy) * d + xx).ravel()
    n = d ** 3
    m = jnp.zeros((n, n), jnp.float32)
    k = 0
    for dz in (-1, 0, 1):
        for dy in (-1, 0, 1):
            for dx in (-1, 0, 1):
                nz, ny, nx = zz + dz, yy + dy, xx + dx
                valid = ((nz >= 0) & (nz < d) & (ny >= 0) & (ny < d)
                         & (nx >= 0) & (nx < d))
                same_block = ((nz // bs == zz // bs) & (ny // bs == yy // bs)
                              & (nx // bs == xx // bs))
                n_flat = ((jnp.clip(nz, 0, d - 1) * d
                           + jnp.clip(ny, 0, d - 1)) * d
                          + jnp.clip(nx, 0, d - 1)).ravel()
                vals = jnp.where((valid & same_block).ravel(), w27[k].ravel(), 0.0)
                m = m.at[c_flat, n_flat].add(vals)
                k += 1
    return m.T


def init_params(key):
    ks = jax.random.split(key, 8)
    d = GRID_SIZE
    params = {}
    params["init_in"] = jax.random.normal(ks[0], (d, d, d), jnp.float32)

    # patch_emb = Conv2d(3, emb_channels, kernel=PATCH, stride=PATCH)
    fan_in = 3 * PATCH * PATCH
    params["patch_w"] = jax.random.normal(
        ks[1], (EMB_CHANNELS, 3, PATCH, PATCH), jnp.float32) / jnp.sqrt(fan_in)
    params["patch_b"] = 0.01 * jax.random.normal(ks[2], (EMB_CHANNELS,), jnp.float32)

    # Gridnet parameter sets
    n_nets = OUTER_ITERS if SEPARATE_PARAMS else 1
    net_keys = jax.random.split(ks[3], n_nets)
    params["nets"] = [
        {"w27": jax.random.normal(net_keys[i], (27, d, d, d), jnp.float32) * INIT_SCALE,
         "bias": jnp.zeros((d, d, d), jnp.float32)}
        for i in range(n_nets)
    ]

    # outer nn.LayerNorm((d,d,d))
    params["norm_g"] = jnp.ones((N_CELLS,), jnp.float32)
    params["norm_b"] = jnp.zeros((N_CELLS,), jnp.float32)

    # Readout: LayerNorm((d,d,d)) + Linear(d**3, 1000)
    params["ro_norm_g"] = jnp.ones((N_CELLS,), jnp.float32)
    params["ro_norm_b"] = jnp.zeros((N_CELLS,), jnp.float32)
    params["ro_w"] = jax.random.normal(
        ks[4], (N_CELLS, N_CLASSES), jnp.float32) / jnp.sqrt(N_CELLS)
    params["ro_b"] = jnp.zeros((N_CLASSES,), jnp.float32)
    return params


def prepare_params(params):
    """One-time conversion of raw params into kernel-ready tensors (done outside
    the jitted forward so no derived-weight work happens per step)."""
    d = GRID_SIZE
    kpp = 3 * PATCH * PATCH
    prep = {}

    # Patch embedding in grid-cell layout: cols >= EMB_CHANNELS have zero weight
    # and carry init_in through the additive term (fuses the init_acts scatter).
    w2d = params["patch_w"].reshape(EMB_CHANNELS, kpp).T                 # (kpp, emb)
    prep["patch_w8"] = (
        jnp.zeros((kpp, d), jnp.float32).at[:, :EMB_CHANNELS].set(w2d))  # (kpp, Dg)
    pb8 = jnp.zeros((d,), jnp.float32).at[:EMB_CHANNELS].set(params["patch_b"])
    col = jnp.arange(d)
    prep["patch_add"] = jnp.where(
        col[None, :] < EMB_CHANNELS,
        pb8[None, :],
        params["init_in"].reshape(d * d, d),
    )                                                                    # (Dg*Dg, Dg)

    # Gridnet in-block transfer matrices -> bf16 (f32 MXU accumulation).
    min_t = jnp.stack(
        [build_in_block_transfer(net["w27"], d, BLOCK_SIZE) for net in params["nets"]])
    prep["min_t"] = min_t.astype(jnp.bfloat16)                           # (n_nets, N, N)
    prep["g_bias"] = jnp.stack(
        [net["bias"].reshape(1, N_CELLS) for net in params["nets"]])     # (n_nets, 1, N)

    prep["norm_g"] = params["norm_g"].reshape(1, N_CELLS)
    prep["norm_b"] = params["norm_b"].reshape(1, N_CELLS)
    prep["ro_norm_g"] = params["ro_norm_g"].reshape(1, N_CELLS)
    prep["ro_norm_b"] = params["ro_norm_b"].reshape(1, N_CELLS)

    # Readout weights padded 1000 -> 1024 (lane-dense, two 512-wide tiles), bf16.
    prep["ro_w"] = (
        jnp.zeros((N_CELLS, N_CLASSES_PAD), jnp.float32)
        .at[:, :N_CLASSES].set(params["ro_w"]).astype(jnp.bfloat16))
    prep["ro_b"] = (
        jnp.zeros((1, N_CLASSES_PAD), jnp.float32)
        .at[0, :N_CLASSES].set(params["ro_b"]))
    return prep


# ----------------------------- forward pass -----------------------------------
def model_forward(prep, images):
    b = images.shape[0]
    d = GRID_SIZE

    # im2col for the stride==kernel Conv2d: (B,3,256,256) -> (B*Dg*Dg, 3*P*P)
    patches = (images.reshape(b, 3, d, PATCH, d, PATCH)
               .transpose(0, 2, 4, 1, 3, 5)
               .reshape(b * d * d, 3 * PATCH * PATCH))

    # Patch embedding directly in grid-cell layout (incl. init_in merge).
    emb = patch_embed(patches, prep["patch_w8"], prep["patch_add"])  # (B*Dg*Dg, Dg)
    h = emb.reshape(b, N_CELLS)

    # Fused outer loop (LayerNorm + Gridnet inner iters + residual) + readout LN.
    hn = gridnet_outer(h, prep["min_t"], prep["g_bias"],
                       prep["norm_g"], prep["norm_b"],
                       prep["ro_norm_g"], prep["ro_norm_b"])         # (B, N)

    # Readout matmul, tiled lane-dense over padded classes (parallel tiles).
    logits = readout_matmul(hn, prep["ro_w"], prep["ro_b"])          # (B, 1024)
    return logits[:, :N_CLASSES]


# ----------------------------- main -------------------------------------------
if __name__ == "__main__":
    key = jax.random.PRNGKey(0)
    pkey, xkey = jax.random.split(key)
    params = init_params(pkey)
    prep = prepare_params(params)
    images = jax.random.normal(xkey, (2, 3, IMG_SIZE, IMG_SIZE), jnp.float32)

    logits = jax.jit(model_forward)(prep, images)
    logits = jax.block_until_ready(logits)

    assert logits.shape == (2, N_CLASSES), logits.shape
    assert bool(jnp.all(jnp.isfinite(logits)))
    print("KERNEL_OK")
</pallas_src>

<mosaic_0001>
module attributes {stable_mosaic.version = 11 : i64} {
  func.func @_patch_embed_kernel(%arg0: i32, %arg1: memref<64x3072xf32, #tpu.memory_space<vmem>>, %arg2: memref<3072x8xf32, #tpu.memory_space<vmem>>, %arg3: memref<64x8xf32, #tpu.memory_space<vmem>>, %arg4: memref<64x8xf32, #tpu.memory_space<vmem>>) attributes {dimension_semantics = [#tpu.dimension_semantics<parallel>], iteration_bounds = array<i64: 2>, scalar_prefetch = 0 : i64, scratch_operands = 0 : i64, tpu.core_type = #tpu.core_type<tc>, window_params = [{transform_indices = @transform_0, window_bounds = array<i64: 64, 3072>}, {pipeline_mode = #tpu.pipeline_mode<synchronous>, transform_indices = @transform_1, window_bounds = array<i64: 3072, 8>}, {pipeline_mode = #tpu.pipeline_mode<synchronous>, transform_indices = @transform_2, window_bounds = array<i64: 64, 8>}, {transform_indices = @transform_3, window_bounds = array<i64: 64, 8>}]} {
    %c0 = arith.constant 0 : index
    %c0_0 = arith.constant 0 : index
    %0 = vector.load %arg1[%c0, %c0_0] : memref<64x3072xf32, #tpu.memory_space<vmem>>, vector<64x3072xf32>
    %c0_1 = arith.constant 0 : index
    %c0_2 = arith.constant 0 : index
    %1 = vector.load %arg2[%c0_1, %c0_2] : memref<3072x8xf32, #tpu.memory_space<vmem>>, vector<3072x8xf32>
    %cst = arith.constant dense<0.000000e+00> : vector<64x8xf32>
    %2 = tpu.matmul %0, %1, %cst {dimension_numbers = #tpu.dot_dimension_numbers<[1], [0], [0], [1], [0, 0, 1, 1], [], []>} : vector<64x3072xf32>, vector<3072x8xf32>, vector<64x8xf32> -> vector<64x8xf32>
    %c0_3 = arith.constant 0 : index
    %c0_4 = arith.constant 0 : index
    %3 = vector.load %arg3[%c0_3, %c0_4] : memref<64x8xf32, #tpu.memory_space<vmem>>, vector<64x8xf32>
    %4 = arith.addf %2, %3 : vector<64x8xf32>
    %c0_5 = arith.constant 0 : index
    %c0_6 = arith.constant 0 : index
    %5 = vector.load %arg4[%c0_5, %c0_6] : memref<64x8xf32, #tpu.memory_space<vmem>>, vector<64x8xf32>
    tpu.vector_store %arg4[%c0_5, %c0_6], %4 {strides = array<i32>} : memref<64x8xf32, #tpu.memory_space<vmem>>, vector<64x8xf32>,
    return
  }
  func.func @transform_0(%arg0: i32) -> (i32, i32) {
    %c0_i32 = arith.constant 0 : i32
    %c0_i32_0 = arith.constant 0 : i32
    return %arg0, %c0_i32 : i32, i32
  }
  func.func @transform_1(%arg0: i32) -> (i32, i32) {
    %c0_i32 = arith.constant 0 : i32
    %c0_i32_0 = arith.constant 0 : i32
    %c0_i32_1 = arith.constant 0 : i32
    return %c0_i32, %c0_i32_0 : i32, i32
  }
  func.func @transform_2(%arg0: i32) -> (i32, i32) {
    %c0_i32 = arith.constant 0 : i32
    %c0_i32_0 = arith.constant 0 : i32
    %c0_i32_1 = arith.constant 0 : i32
    return %c0_i32, %c0_i32_0 : i32, i32
  }
  func.func @transform_3(%arg0: i32) -> (i32, i32) {
    %c0_i32 = arith.constant 0 : i32
    %c0_i32_0 = arith.constant 0 : i32
    return %arg0, %c0_i32 : i32, i32
  }
}

module attributes {stable_mosaic.version = 11 : i64} {
  func.func @_fused_outer_kernel(%arg0: i32, %arg1: memref<2x512xf32, #tpu.memory_space<vmem>>, %arg2: memref<1x512x512xbf16, #tpu.memory_space<vmem>>, %arg3: memref<1x1x512xf32, #tpu.memory_space<vmem>>, %arg4: memref<1x512xf32, #tpu.memory_space<vmem>>, %arg5: memref<1x512xf32, #tpu.memory_space<vmem>>, %arg6: memref<1x512xf32, #tpu.memory_space<vmem>>, %arg7: memref<1x512xf32, #tpu.memory_space<vmem>>, %arg8: memref<2x512xf32, #tpu.memory_space<vmem>>) attributes {dimension_semantics = [#tpu.dimension_semantics<arbitrary>], iteration_bounds = array<i64: 1>, scalar_prefetch = 0 : i64, scratch_operands = 0 : i64, tpu.core_type = #tpu.core_type<tc>, window_params = [{pipeline_mode = #tpu.pipeline_mode<synchronous>, transform_indices = @transform_0, window_bounds = array<i64: 2, 512>}, {pipeline_mode = #tpu.pipeline_mode<synchronous>, transform_indices = @transform_1, window_bounds = array<i64: 1, 512, 512>}, {pipeline_mode = #tpu.pipeline_mode<synchronous>, transform_indices = @transform_2, window_bounds = array<i64: 1, 1, 512>}, {pipeline_mode = #tpu.pipeline_mode<synchronous>, transform_indices = @transform_3, window_bounds = array<i64: 1, 512>}, {pipeline_mode = #tpu.pipeline_mode<synchronous>, transform_indices = @transform_4, window_bounds = array<i64: 1, 512>}, {pipeline_mode = #tpu.pipeline_mode<synchronous>, transform_indices = @transform_5, window_bounds = array<i64: 1, 512>}, {pipeline_mode = #tpu.pipeline_mode<synchronous>, transform_indices = @transform_6, window_bounds = array<i64: 1, 512>}, {pipeline_mode = #tpu.pipeline_mode<synchronous>, transform_indices = @transform_7, window_bounds = array<i64: 2, 512>}]} {
    %c0 = arith.constant 0 : index
    %c0_0 = arith.constant 0 : index
    %0 = vector.load %arg1[%c0, %c0_0] : memref<2x512xf32, #tpu.memory_space<vmem>>, vector<2x512xf32>
    %c0_1 = arith.constant 0 : index
    %c0_2 = arith.constant 0 : index
    %1 = vector.load %arg4[%c0_1, %c0_2] : memref<1x512xf32, #tpu.memory_space<vmem>>, vector<1x512xf32>
    %c0_3 = arith.constant 0 : index
    %c0_4 = arith.constant 0 : index
    %2 = vector.load %arg5[%c0_3, %c0_4] : memref<1x512xf32, #tpu.memory_space<vmem>>, vector<1x512xf32>
    %c0_5 = arith.constant 0 : index
    %c0_6 = arith.constant 0 : index
    %c0_7 = arith.constant 0 : index
    %3 = vector.load %arg2[%c0_5, %c0_6, %c0_7] : memref<1x512x512xbf16, #tpu.memory_space<vmem>>, vector<1x512x512xbf16>
    %4 = vector.shape_cast %3 : vector<1x512x512xbf16> to vector<512x512xbf16>
    %c0_8 = arith.constant 0 : index
    %c0_9 = arith.constant 0 : index
    %c0_10 = arith.constant 0 : index
    %5 = vector.load %arg3[%c0_8, %c0_9, %c0_10] : memref<1x1x512xf32, #tpu.memory_space<vmem>>, vector<1x1x512xf32>
    %6 = vector.shape_cast %5 : vector<1x1x512xf32> to vector<1x512xf32>
    %cst = arith.constant dense<0.000000e+00> : vector<2xf32>
    %7 = vector.multi_reduction <add>, %0, %cst [1] : vector<2x512xf32> to vector<2xf32>
    %8 = vector.shape_cast %7 : vector<2xf32> to vector<2x1xf32>
    %cst_11 = arith.constant 5.120000e+02 : f32
    %9 = vector.broadcast %cst_11 : f32 to vector<2x1xf32>
    %10 = arith.divf %8, %9 : vector<2x1xf32>
    %11 = vector.broadcast %10 : vector<2x1xf32> to vector<2x512xf32>
    %12 = arith.subf %0, %11 : vector<2x512xf32>
    %13 = arith.mulf %12, %12 : vector<2x512xf32>
    %cst_12 = arith.constant dense<0.000000e+00> : vector<2xf32>
    %14 = vector.multi_reduction <add>, %13, %cst_12 [1] : vector<2x512xf32> to vector<2xf32>
    %15 = vector.shape_cast %14 : vector<2xf32> to vector<2x1xf32>
    %cst_13 = arith.constant 5.120000e+02 : f32
    %16 = vector.broadcast %cst_13 : f32 to vector<2x1xf32>
    %17 = arith.divf %15, %16 : vector<2x1xf32>
    %18 = vector.broadcast %10 : vector<2x1xf32> to vector<2x512xf32>
    %19 = arith.subf %0, %18 : vector<2x512xf32>
    %cst_14 = arith.constant 9.99999974E-6 : f32
    %20 = vector.broadcast %cst_14 : f32 to vector<2x1xf32>
    %21 = arith.addf %17, %20 : vector<2x1xf32>
    %22 = math.rsqrt %21 : vector<2x1xf32>
    %23 = vector.broadcast %22 : vector<2x1xf32> to vector<2x512xf32>
    %24 = arith.mulf %19, %23 : vector<2x512xf32>
    %25 = vector.broadcast %1 : vector<1x512xf32> to vector<2x512xf32>
    %26 = arith.mulf %24, %25 : vector<2x512xf32>
    %27 = vector.broadcast %2 : vector<1x512xf32> to vector<2x512xf32>
    %28 = arith.addf %26, %27 : vector<2x512xf32>
    %29 = arith.truncf %28 : vector<2x512xf32> to vector<2x512xbf16>
    %cst_15 = arith.constant dense<0.000000e+00> : vector<2x512xf32>
    %30 = tpu.matmul %29, %4, %cst_15 {dimension_numbers = #tpu.dot_dimension_numbers<[1], [0], [0], [1], [0, 0, 1, 1], [], []>} : vector<2x512xbf16>, vector<512x512xbf16>, vector<2x512xf32> -> vector<2x512xf32>
    %31 = vector.broadcast %6 : vector<1x512xf32> to vector<2x512xf32>
    %32 = arith.addf %30, %31 : vector<2x512xf32>
    %33 = arith.negf %32 : vector<2x512xf32>
    %34 = math.exp %33 : vector<2x512xf32>
    %cst_16 = arith.constant 1.000000e+00 : f32
    %35 = vector.broadcast %cst_16 : f32 to vector<2x512xf32>
    %36 = arith.addf %35, %34 : vector<2x512xf32>
    %37 = arith.divf %35, %36 : vector<2x512xf32>
    %38 = arith.mulf %32, %37 : vector<2x512xf32>
    %39 = arith.truncf %38 : vector<2x512xf32> to vector<2x512xbf16>
    %cst_17 = arith.constant dense<0.000000e+00> : vector<2x512xf32>
    %40 = tpu.matmul %39, %4, %cst_17 {dimension_numbers = #tpu.dot_dimension_numbers<[1], [0], [0], [1], [0, 0, 1, 1], [], []>} : vector<2x512xbf16>, vector<512x512xbf16>, vector<2x512xf32> -> vector<2x512xf32>
    %41 = vector.broadcast %6 : vector<1x512xf32> to vector<2x512xf32>
    %42 = arith.addf %40, %41 : vector<2x512xf32>
    %43 = arith.negf %42 : vector<2x512xf32>
    %44 = math.exp %43 : vector<2x512xf32>
    %cst_18 = arith.constant 1.000000e+00 : f32
    %45 = vector.broadcast %cst_18 : f32 to vector<2x512xf32>
    %46 = arith.addf %45, %44 : vector<2x512xf32>
    %47 = arith.divf %45, %46 : vector<2x512xf32>
    %48 = arith.mulf %42, %47 : vector<2x512xf32>
    %49 = arith.subf %48, %28 : vector<2x512xf32>
    %cst_19 = arith.constant 5.000000e-01 : f32
    %50 = vector.broadcast %cst_19 : f32 to vector<2x512xf32>
    %51 = arith.mulf %50, %49 : vector<2x512xf32>
    %52 = arith.addf %0, %51 : vector<2x512xf32>
    %c0_20 = arith.constant 0 : index
    %c0_21 = arith.constant 0 : index
    %c0_22 = arith.constant 0 : index
    %53 = vector.load %arg2[%c0_20, %c0_21, %c0_22] : memref<1x512x512xbf16, #tpu.memory_space<vmem>>, vector<1x512x512xbf16>
    %54 = vector.shape_cast %53 : vector<1x512x512xbf16> to vector<512x512xbf16>
    %c0_23 = arith.constant 0 : index
    %c0_24 = arith.constant 0 : index
    %c0_25 = arith.constant 0 : index
    %55 = vector.load %arg3[%c0_23, %c0_24, %c0_25] : memref<1x1x512xf32, #tpu.memory_space<vmem>>, vector<1x1x512xf32>
    %56 = vector.shape_cast %55 : vector<1x1x512xf32> to vector<1x512xf32>
    %cst_26 = arith.constant dense<0.000000e+00> : vector<2xf32>
    %57 = vector.multi_reduction <add>, %52, %cst_26 [1] : vector<2x512xf32> to vector<2xf32>
    %58 = vector.shape_cast %57 : vector<2xf32> to vector<2x1xf32>
    %cst_27 = arith.constant 5.120000e+02 : f32
    %59 = vector.broadcast %cst_27 : f32 to vector<2x1xf32>
    %60 = arith.divf %58, %59 : vector<2x1xf32>
    %61 = vector.broadcast %60 : vector<2x1xf32> to vector<2x512xf32>
    %62 = arith.subf %52, %61 : vector<2x512xf32>
    %63 = arith.mulf %62, %62 : vector<2x512xf32>
    %cst_28 = arith.constant dense<0.000000e+00> : vector<2xf32>
    %64 = vector.multi_reduction <add>, %63, %cst_28 [1] : vector<2x512xf32> to vector<2xf32>
    %65 = vector.shape_cast %64 : vector<2xf32> to vector<2x1xf32>
    %cst_29 = arith.constant 5.120000e+02 : f32
    %66 = vector.broadcast %cst_29 : f32 to vector<2x1xf32>
    %67 = arith.divf %65, %66 : vector<2x1xf32>
    %68 = vector.broadcast %60 : vector<2x1xf32> to vector<2x512xf32>
    %69 = arith.subf %52, %68 : vector<2x512xf32>
    %cst_30 = arith.constant 9.99999974E-6 : f32
    %70 = vector.broadcast %cst_30 : f32 to vector<2x1xf32>
    %71 = arith.addf %67, %70 : vector<2x1xf32>
    %72 = math.rsqrt %71 : vector<2x1xf32>
    %73 = vector.broadcast %72 : vector<2x1xf32> to vector<2x512xf32>
    %74 = arith.mulf %69, %73 : vector<2x512xf32>
    %75 = vector.broadcast %1 : vector<1x512xf32> to vector<2x512xf32>
    %76 = arith.mulf %74, %75 : vector<2x512xf32>
    %77 = vector.broadcast %2 : vector<1x512xf32> to vector<2x512xf32>
    %78 = arith.addf %76, %77 : vector<2x512xf32>
    %79 = arith.truncf %78 : vector<2x512xf32> to vector<2x512xbf16>
    %cst_31 = arith.constant dense<0.000000e+00> : vector<2x512xf32>
    %80 = tpu.matmul %79, %54, %cst_31 {dimension_numbers = #tpu.dot_dimension_numbers<[1], [0], [0], [1], [0, 0, 1, 1], [], []>} : vector<2x512xbf16>, vector<512x512xbf16>, vector<2x512xf32> -> vector<2x512xf32>
    %81 = vector.broadcast %56 : vector<1x512xf32> to vector<2x512xf32>
    %82 = arith.addf %80, %81 : vector<2x512xf32>
    %83 = arith.negf %82 : vector<2x512xf32>
    %84 = math.exp %83 : vector<2x512xf32>
    %cst_32 = arith.constant 1.000000e+00 : f32
    %85 = vector.broadcast %cst_32 : f32 to vector<2x512xf32>
    %86 = arith.addf %85, %84 : vector<2x512xf32>
    %87 = arith.divf %85, %86 : vector<2x512xf32>
    %88 = arith.mulf %82, %87 : vector<2x512xf32>
    %89 = arith.truncf %88 : vector<2x512xf32> to vector<2x512xbf16>
    %cst_33 = arith.constant dense<0.000000e+00> : vector<2x512xf32>
    %90 = tpu.matmul %89, %54, %cst_33 {dimension_numbers = #tpu.dot_dimension_numbers<[1], [0], [0], [1], [0, 0, 1, 1], [], []>} : vector<2x512xbf16>, vector<512x512xbf16>, vector<2x512xf32> -> vector<2x512xf32>
    %91 = vector.broadcast %56 : vector<1x512xf32> to vector<2x512xf32>
    %92 = arith.addf %90, %91 : vector<2x512xf32>
    %93 = arith.negf %92 : vector<2x512xf32>
    %94 = math.exp %93 : vector<2x512xf32>
    %cst_34 = arith.constant 1.000000e+00 : f32
    %95 = vector.broadcast %cst_34 : f32 to vector<2x512xf32>
    %96 = arith.addf %95, %94 : vector<2x512xf32>
    %97 = arith.divf %95, %96 : vector<2x512xf32>
    %98 = arith.mulf %92, %97 : vector<2x512xf32>
    %99 = arith.subf %98, %78 : vector<2x512xf32>
    %cst_35 = arith.constant 5.000000e-01 : f32
    %100 = vector.broadcast %cst_35 : f32 to vector<2x512xf32>
    %101 = arith.mulf %100, %99 : vector<2x512xf32>
    %102 = arith.addf %52, %101 : vector<2x512xf32>
    %c0_36 = arith.constant 0 : index
    %c0_37 = arith.constant 0 : index
    %103 = vector.load %arg6[%c0_36, %c0_37] : memref<1x512xf32, #tpu.memory_space<vmem>>, vector<1x512xf32>
    %c0_38 = arith.constant 0 : index
    %c0_39 = arith.constant 0 : index
    %104 = vector.load %arg7[%c0_38, %c0_39] : memref<1x512xf32, #tpu.memory_space<vmem>>, vector<1x512xf32>
    %cst_40 = arith.constant dense<0.000000e+00> : vector<2xf32>
    %105 = vector.multi_reduction <add>, %102, %cst_40 [1] : vector<2x512xf32> to vector<2xf32>
    %106 = vector.shape_cast %105 : vector<2xf32> to vector<2x1xf32>
    %cst_41 = arith.constant 5.120000e+02 : f32
    %107 = vector.broadcast %cst_41 : f32 to vector<2x1xf32>
    %108 = arith.divf %106, %107 : vector<2x1xf32>
    %109 = vector.broadcast %108 : vector<2x1xf32> to vector<2x512xf32>
    %110 = arith.subf %102, %109 : vector<2x512xf32>
    %111 = arith.mulf %110, %110 : vector<2x512xf32>
    %cst_42 = arith.constant dense<0.000000e+00> : vector<2xf32>
    %112 = vector.multi_reduction <add>, %111, %cst_42 [1] : vector<2x512xf32> to vector<2xf32>
    %113 = vector.shape_cast %112 : vector<2xf32> to vector<2x1xf32>
    %cst_43 = arith.constant 5.120000e+02 : f32
    %114 = vector.broadcast %cst_43 : f32 to vector<2x1xf32>
    %115 = arith.divf %113, %114 : vector<2x1xf32>
    %116 = vector.broadcast %108 : vector<2x1xf32> to vector<2x512xf32>
    %117 = arith.subf %102, %116 : vector<2x512xf32>
    %cst_44 = arith.constant 9.99999974E-6 : f32
    %118 = vector.broadcast %cst_44 : f32 to vector<2x1xf32>
    %119 = arith.addf %115, %118 : vector<2x1xf32>
    %120 = math.rsqrt %119 : vector<2x1xf32>
    %121 = vector.broadcast %120 : vector<2x1xf32> to vector<2x512xf32>
    %122 = arith.mulf %117, %121 : vector<2x512xf32>
    %123 = vector.broadcast %103 : vector<1x512xf32> to vector<2x512xf32>
    %124 = arith.mulf %122, %123 : vector<2x512xf32>
    %125 = vector.broadcast %104 : vector<1x512xf32> to vector<2x512xf32>
    %126 = arith.addf %124, %125 : vector<2x512xf32>
    %c0_45 = arith.constant 0 : index
    %c0_46 = arith.constant 0 : index
    %127 = vector.load %arg8[%c0_45, %c0_46] : memref<2x512xf32, #tpu.memory_space<vmem>>, vector<2x512xf32>
    tpu.vector_store %arg8[%c0_45, %c0_46], %126 {strides = array<i32>} : memref<2x512xf32, #tpu.memory_space<vmem>>, vector<2x512xf32>,
    return
  }
  func.func @transform_0(%arg0: i32) -> (i32, i32) {
    %c0_i32 = arith.constant 0 : i32
    %c0_i32_0 = arith.constant 0 : i32
    %c0_i32_1 = arith.constant 0 : i32
    return %c0_i32, %c0_i32_0 : i32, i32
  }
  func.func @transform_1(%arg0: i32) -> (i32, i32, i32) {
    %c0_i32 = arith.constant 0 : i32
    %c0_i32_0 = arith.constant 0 : i32
    %c0_i32_1 = arith.constant 0 : i32
    %c0_i32_2 = arith.constant 0 : i32
    return %c0_i32, %c0_i32_0, %c0_i32_1 : i32, i32, i32
  }
  func.func @transform_2(%arg0: i32) -> (i32, i32, i32) {
    %c0_i32 = arith.constant 0 : i32
    %c0_i32_0 = arith.constant 0 : i32
    %c0_i32_1 = arith.constant 0 : i32
    %c0_i32_2 = arith.constant 0 : i32
    return %c0_i32, %c0_i32_0, %c0_i32_1 : i32, i32, i32
  }
  func.func @transform_3(%arg0: i32) -> (i32, i32) {
    %c0_i32 = arith.constant 0 : i32
    %c0_i32_0 = arith.constant 0 : i32
    %c0_i32_1 = arith.constant 0 : i32
    return %c0_i32, %c0_i32_0 : i32, i32
  }
  func.func @transform_4(%arg0: i32) -> (i32, i32) {
    %c0_i32 = arith.constant 0 : i32
    %c0_i32_0 = arith.constant 0 : i32
    %c0_i32_1 = arith.constant 0 : i32
    return %c0_i32, %c0_i32_0 : i32, i32
  }
  func.func @transform_5(%arg0: i32) -> (i32, i32) {
    %c0_i32 = arith.constant 0 : i32
    %c0_i32_0 = arith.constant 0 : i32
    %c0_i32_1 = arith.constant 0 : i32
    return %c0_i32, %c0_i32_0 : i32, i32
  }
  func.func @transform_6(%arg0: i32) -> (i32, i32) {
    %c0_i32 = arith.constant 0 : i32
    %c0_i32_0 = arith.constant 0 : i32
    %c0_i32_1 = arith.constant 0 : i32
    return %c0_i32, %c0_i32_0 : i32, i32
  }
  func.func @transform_7(%arg0: i32) -> (i32, i32) {
    %c0_i32 = arith.constant 0 : i32
    %c0_i32_0 = arith.constant 0 : i32
    %c0_i32_1 = arith.constant 0 : i32
    return %c0_i32, %c0_i32_0 : i32, i32
  }
}

module attributes {stable_mosaic.version = 11 : i64} {
  func.func @_readout_kernel(%arg0: i32, %arg1: memref<2x512xf32, #tpu.memory_space<vmem>>, %arg2: memref<512x512xbf16, #tpu.memory_space<vmem>>, %arg3: memref<1x512xf32, #tpu.memory_space<vmem>>, %arg4: memref<2x512xf32, #tpu.memory_space<vmem>>) attributes {dimension_semantics = [#tpu.dimension_semantics<parallel>], iteration_bounds = array<i64: 2>, scalar_prefetch = 0 : i64, scratch_operands = 0 : i64, tpu.core_type = #tpu.core_type<tc>, window_params = [{pipeline_mode = #tpu.pipeline_mode<synchronous>, transform_indices = @transform_0, window_bounds = array<i64: 2, 512>}, {transform_indices = @transform_1, window_bounds = array<i64: 512, 512>}, {transform_indices = @transform_2, window_bounds = array<i64: 1, 512>}, {transform_indices = @transform_3, window_bounds = array<i64: 2, 512>}]} {
    %c0 = arith.constant 0 : index
    %c0_0 = arith.constant 0 : index
    %0 = vector.load %arg1[%c0, %c0_0] : memref<2x512xf32, #tpu.memory_space<vmem>>, vector<2x512xf32>
    %1 = arith.truncf %0 : vector<2x512xf32> to vector<2x512xbf16>
    %c0_1 = arith.constant 0 : index
    %c0_2 = arith.constant 0 : index
    %2 = vector.load %arg2[%c0_1, %c0_2] : memref<512x512xbf16, #tpu.memory_space<vmem>>, vector<512x512xbf16>
    %cst = arith.constant dense<0.000000e+00> : vector<2x512xf32>
    %3 = tpu.matmul %1, %2, %cst {dimension_numbers = #tpu.dot_dimension_numbers<[1], [0], [0], [1], [0, 0, 1, 1], [], []>} : vector<2x512xbf16>, vector<512x512xbf16>, vector<2x512xf32> -> vector<2x512xf32>
    %c0_3 = arith.constant 0 : index
    %c0_4 = arith.constant 0 : index
    %4 = vector.load %arg3[%c0_3, %c0_4] : memref<1x512xf32, #tpu.memory_space<vmem>>, vector<1x512xf32>
    %5 = vector.broadcast %4 : vector<1x512xf32> to vector<2x512xf32>
    %6 = arith.addf %3, %5 : vector<2x512xf32>
    %c0_5 = arith.constant 0 : index
    %c0_6 = arith.constant 0 : index
    %7 = vector.load %arg4[%c0_5, %c0_6] : memref<2x512xf32, #tpu.memory_space<vmem>>, vector<2x512xf32>
    tpu.vector_store %arg4[%c0_5, %c0_6], %6 {strides = array<i32>} : memref<2x512xf32, #tpu.memory_space<vmem>>, vector<2x512xf32>,
    return
  }
  func.func @transform_0(%arg0: i32) -> (i32, i32) {
    %c0_i32 = arith.constant 0 : i32
    %c0_i32_0 = arith.constant 0 : i32
    %c0_i32_1 = arith.constant 0 : i32
    return %c0_i32, %c0_i32_0 : i32, i32
  }
  func.func @transform_1(%arg0: i32) -> (i32, i32) {
    %c0_i32 = arith.constant 0 : i32
    %c0_i32_0 = arith.constant 0 : i32
    return %c0_i32, %arg0 : i32, i32
  }
  func.func @transform_2(%arg0: i32) -> (i32, i32) {
    %c0_i32 = arith.constant 0 : i32
    %c0_i32_0 = arith.constant 0 : i32
    return %c0_i32, %arg0 : i32, i32
  }
  func.func @transform_3(%arg0: i32) -> (i32, i32) {
    %c0_i32 = arith.constant 0 : i32
    %c0_i32_0 = arith.constant 0 : i32
    return %c0_i32, %arg0 : i32, i32
  }
}

</mosaic_0001>

<llo_original>
// kernel: model_forward.3
$region0: #{model_forward.3}
  #allocation0 [shape = 'u32[]', space=smem, size = 0x4, offset = 0x4, fixed_abs, tag = 'smem constant byte address 0x4 - core index']
  #allocation1 [shape = 'u32[144,128]{1,0:T(1,128)}', space=vmem, size = 0x12000, scoped, tag = 'internal scratch']
  %s0 = inlined_call_operand.vmem [shape: f32[128,3072], index: 0, kind: input, shape index: {}]
  %s1 = inlined_call_operand.vmem [shape: f32[3072,8], index: 1, kind: input, shape index: {}]
  %s2 = inlined_call_operand.vmem [shape: f32[64,8], index: 2, kind: input, shape index: {}]
  %s3 = inlined_call_operand.vmem [shape: f32[128,8], index: 3, kind: output, shape index: {}]
  %s4 = sld [smem:[#allocation0]]
  $region45: #{model_forward.3} parent=0
    _
  %s6 = ssub.s32 1, %s4
  %s7 = scalar_select 0, %s6, %s4
  loop: start=0, step=1, limit=4
  $region2: #{model_forward.3} parent=0 // loop_pre_header
    _
  $region3: #{model_forward.3} parent=0 // loop_header
    %s9 = sphi 0, %s13
    %p10 = scmp.ge.s32.totalorder %s9, 4
    %s19 = sphi 0, %s21
    %s22 = sphi 0, %s19
    %s23 = sphi 0, %s22
    %s39 = sphi 0, %s23
    %s43 = sphi 0, %s43
    %s45 = sphi 0, %s43
    %s46 = sphi 0, %s45
    %s60 = sphi 0, %s46
    %s64 = sphi 0, %s64
    %s66 = sphi 0, %s64
    %s67 = sphi 0, %s66
    %s81 = sphi 0, %s67
    %s87 = sphi 0, %s89
    %s90 = sphi 0, %s87
    %s91 = sphi 0, %s90
    %s107 = sphi 0, %s91
  $region4: #{model_forward.3} parent=0 // loop_header_branch
    %12 = sbr.rel (%p10) target = $region8
  $region5: #{model_forward.3} parent=0 // loop_body
    %s14 = ssub.s32 %s9, 1
    %s15 = ssub.s32 %s9, 2
    %s16 = sadd.s32 %s9, 1
    %s17 = ssub.s32 %s9, %s16
    %p18 = scmp.eq.s32.totalorder %s17, 0
    %s20 = sadd.s32 %s19, 1
    %s21 = scalar_select %p18, %s19, %s20
    %p24 = pneg %p18
    %p25 = scmp.eq.s32.totalorder %s9, 1
    %p26 = por %p24, %p25
    %p27 = scmp.ne.s32.totalorder %s19, %s22
    %p28 = scmp.eq.s32.totalorder %s9, 0
    %p29 = por %p27, %p28
    %p30 = scmp.ne.s32.totalorder %s19, %s22
    %p31 = scmp.eq.s32.totalorder %s14, 1
    %p32 = por %p30, %p31
    %p33 = scmp.ne.s32.totalorder %s22, %s23
    %p34 = scmp.eq.s32.totalorder %s14, 0
    %p35 = por %p33, %p34
    %p36 = scmp.ne.s32.totalorder %s22, %s23
    %p37 = scmp.eq.s32.totalorder %s15, 1
    %p38 = por %p36, %p37
    %p40 = scmp.ne.s32.totalorder %s23, %s39
    %p41 = scmp.eq.s32.totalorder %s15, 0
    %p42 = por %p40, %p41
    %s44 = sadd.s32 %s43, 1
    %p47 = scmp.eq.s32.totalorder %s9, 1
    %p48 = scmp.ne.s32.totalorder %s43, %s45
    %p49 = scmp.eq.s32.totalorder %s9, 0
    %p50 = por %p48, %p49
    %p51 = scmp.ne.s32.totalorder %s43, %s45
    %p52 = scmp.eq.s32.totalorder %s14, 1
    %p53 = por %p51, %p52
    %p54 = scmp.ne.s32.totalorder %s45, %s46
    %p55 = scmp.eq.s32.totalorder %s14, 0
    %p56 = por %p54, %p55
    %p57 = scmp.ne.s32.totalorder %s45, %s46
    %p58 = scmp.eq.s32.totalorder %s15, 1
    %p59 = por %p57, %p58
    %p61 = scmp.ne.s32.totalorder %s46, %s60
    %p62 = scmp.eq.s32.totalorder %s15, 0
    %p63 = por %p61, %p62
    %s65 = sadd.s32 %s64, 1
    %p68 = scmp.eq.s32.totalorder %s9, 1
    %p69 = scmp.ne.s32.totalorder %s64, %s66
    %p70 = scmp.eq.s32.totalorder %s9, 0
    %p71 = por %p69, %p70
    %p72 = scmp.ne.s32.totalorder %s64, %s66
    %p73 = scmp.eq.s32.totalorder %s14, 1
    %p74 = por %p72, %p73
    %p75 = scmp.ne.s32.totalorder %s66, %s67
    %p76 = scmp.eq.s32.totalorder %s14, 0
    %p77 = por %p75, %p76
    %p78 = scmp.ne.s32.totalorder %s66, %s67
    %p79 = scmp.eq.s32.totalorder %s15, 1
    %p80 = por %p78, %p79
    %p82 = scmp.ne.s32.totalorder %s67, %s81
    %p83 = scmp.eq.s32.totalorder %s15, 0
    %p84 = por %p82, %p83
    %s85 = ssub.s32 %s9, %s16
    %p86 = scmp.eq.s32.totalorder %s85, 0
    %s88 = sadd.s32 %s87, 1
    %s89 = scalar_select %p86, %s87, %s88
    %p92 = pneg %p86
    %p93 = scmp.eq.s32.totalorder %s9, 1
    %p94 = por %p92, %p93
    %p95 = scmp.ne.s32.totalorder %s87, %s90
    %p96 = scmp.eq.s32.totalorder %s9, 0
    %p97 = por %p95, %p96
    %p98 = scmp.ne.s32.totalorder %s87, %s90
    %p99 = scmp.eq.s32.totalorder %s14, 1
    %p100 = por %p98, %p99
    %p101 = scmp.ne.s32.totalorder %s90, %s91
    %p102 = scmp.eq.s32.totalorder %s14, 0
    %p103 = por %p101, %p102
    %p104 = scmp.ne.s32.totalorder %s90, %s91
    %p105 = scmp.eq.s32.totalorder %s15, 1
    %p106 = por %p104, %p105
    %p108 = scmp.ne.s32.totalorder %s91, %s107
    %p109 = scmp.eq.s32.totalorder %s15, 0
    %p110 = por %p108, %p109
    %p111 = scmp.le.s32.totalorder 1, %s9
    %p112 = scmp.lt.s32.totalorder %s9, 3
    %p113 = pnand %p111, %p112
    %p114 = pneg %p113
    // Predicated region
    $region9: #{model_forward.3} parent=5 // pred_check
      _
    $region10: #{model_forward.3} parent=5 // pred_check_branch
      %116 = sbr.rel (%p113) target = $region12
    $region11: #{model_forward.3} parent=5 // pred_region
      %s117 = ssub.s32 %s9, 1
      // Predicated region
      $region13: #{model_forward.3} parent=11 // pred_check
        %p118 = pneg %p56
      $region14: #{model_forward.3} parent=11 // pred_check_branch
        %120 = sbr.rel (%p118) target = $region16
      $region15: #{model_forward.3} parent=11 // pred_region
        _
      $region16: #{model_forward.3} parent=11 // pred_fallthru
        _
      // Predicated region
      $region17: #{model_forward.3} parent=11 // pred_check
        %p121 = pneg %p77
      $region18: #{model_forward.3} parent=11 // pred_check_branch
        %123 = sbr.rel (%p121) target = $region20
      $region19: #{model_forward.3} parent=11 // pred_region
        _
      $region20: #{model_forward.3} parent=11 // pred_fallthru
        _
    $region12: #{model_forward.3} parent=5 // pred_fallthru
      _
    %p124 = scmp.lt.s32.totalorder %s9, 2
    // Predicated region
    $region21: #{model_forward.3} parent=5 // pred_check
      %p125 = pneg %p124
    $region22: #{model_forward.3} parent=5 // pred_check_branch
      %127 = sbr.rel (%p125) target = $region24
    $region23: #{model_forward.3} parent=5 // pred_region
      // Predicated region
      $region25: #{model_forward.3} parent=23 // pred_check
        %p128 = pneg %p29
      $region26: #{model_forward.3} parent=23 // pred_check_branch
        %130 = sbr.rel (%p128) target = $region28
      $region27: #{model_forward.3} parent=23 // pred_region
        %s131 = smul.u32 8, %s9
        %p132 = scmp.lt.s32.totalorder %s131, 15
        %s133 = scalar_select %p132, %s131, 15
        %s134 = smul.addr %s133, 24
        %s135 = smul.addr %s134, 8
        %s136 = scalar_lea.vmem %s0, %s135
        %s137 = smul.u32 8, %s9
      $region28: #{model_forward.3} parent=23 // pred_fallthru
        _
    $region24: #{model_forward.3} parent=5 // pred_fallthru
      _
    %p138 = scmp.le.s32.totalorder 1, %s9
    %p139 = scmp.lt.s32.totalorder %s9, 3
    %p140 = pnand %p138, %p139
    %p141 = pneg %p140
    // Predicated region
    $region29: #{model_forward.3} parent=5 // pred_check
      _
    $region30: #{model_forward.3} parent=5 // pred_check_branch
      %143 = sbr.rel (%p140) target = $region32
    $region31: #{model_forward.3} parent=5 // pred_region
      %s144 = ssub.s32 %s9, 1
      %s145 = smul.u32 8, %s14
      %p146 = scmp.lt.s32.totalorder %s145, 15
      %s147 = scalar_select %p146, %s145, 15
      %s148 = smul.addr %s147, 24
      %s149 = smul.addr %s148, 8
      %s150 = scalar_lea.vmem %s0, %s149
      %p151 = pneg %p35
      %p152 = pneg %p32
      %p153 = pneg %p56
      %p154 = pneg %p53
      %p155 = pneg %p77
      %p156 = pneg %p74
      %p157 = pneg %p103
      %p158 = pneg %p100
      %s159 = smul.u32 8, %s14
      %p160 = scmp.lt.s32.totalorder %s159, 15
      %s161 = scalar_select %p160, %s159, 15
      %s162 = smul.addr %s161, 8
      %s163 = scalar_lea.vmem %s3, %s162
      %s164 = smul.u32 8, %s14
      %p165 = scmp.lt.s32.totalorder %s164, 15
      %s166 = scalar_select %p165, %s164, 15
      %s167 = smul.addr %s166, 24
      %s168 = smul.addr %s167, 8
      %s169 = scalar_lea.vmem %s0, %s168
      %s170 = smul.u32 8, %s14
      %s171 = smul.u32 8, %s14
      %p172 = scmp.lt.s32.totalorder %s171, 15
      %s173 = scalar_select %p172, %s171, 15
      %s174 = smul.addr %s173, 8
      %s175 = scalar_lea.vmem %s3, %s174
      %s176 = smul.u32 8, %s14
      %v177 = vld [vmem:[%s169] sm:$0xff]
      %v178 = vld [vmem:[%s169 + $0x8] sm:$0xff]
      %v179 = vld [vmem:[%s169 + $0x10] sm:$0xff]
      %v180 = vld [vmem:[%s169 + $0x18] sm:$0xff]
      %v181 = vld [vmem:[%s169 + $0x20] sm:$0xff]
      %v182 = vld [vmem:[%s169 + $0x28] sm:$0xff]
      %v183 = vld [vmem:[%s169 + $0x30] sm:$0xff]
      %v184 = vld [vmem:[%s169 + $0x38] sm:$0xff]
      %v185 = vld [vmem:[%s169 + $0x40] sm:$0xff]
      %v186 = vld [vmem:[%s169 + $0x48] sm:$0xff]
      %v187 = vld [vmem:[%s169 + $0x50] sm:$0xff]
      %v188 = vld [vmem:[%s169 + $0x58] sm:$0xff]
      %v189 = vld [vmem:[%s169 + $0x60] sm:$0xff]
      %v190 = vld [vmem:[%s169 + $0x68] sm:$0xff]
      %v191 = vld [vmem:[%s169 + $0x70] sm:$0xff]
      %v192 = vld [vmem:[%s169 + $0x78] sm:$0xff]
      %v193 = vld [vmem:[%s169 + $0x80] sm:$0xff]
      %v194 = vld [vmem:[%s169 + $0x88] sm:$0xff]
      %v195 = vld [vmem:[%s169 + $0x90] sm:$0xff]
      %v196 = vld [vmem:[%s169 + $0x98] sm:$0xff]
      %v197 = vld [vmem:[%s169 + $0xa0] sm:$0xff]
      %v198 = vld [vmem:[%s169 + $0xa8] sm:$0xff]
      %v199 = vld [vmem:[%s169 + $0xb0] sm:$0xff]
      %v200 = vld [vmem:[%s169 + $0xb8] sm:$0xff]
      %v201 = vld [vmem:[%s169 + $0xc0] sm:$0xff]
      %v202 = vld [vmem:[%s169 + $0xc8] sm:$0xff]
      %v203 = vld [vmem:[%s169 + $0xd0] sm:$0xff]
      %v204 = vld [vmem:[%s169 + $0xd8] sm:$0xff]
      %v205 = vld [vmem:[%s169 + $0xe0] sm:$0xff]
      %v206 = vld [vmem:[%s169 + $0xe8] sm:$0xff]
      %v207 = vld [vmem:[%s169 + $0xf0] sm:$0xff]
      %v208 = vld [vmem:[%s169 + $0xf8] sm:$0xff]
      %v209 = vld [vmem:[%s169 + $0x100] sm:$0xff]
      %v210 = vld [vmem:[%s169 + $0x108] sm:$0xff]
      %v211 = vld [vmem:[%s169 + $0x110] sm:$0xff]
      %v212 = vld [vmem:[%s169 + $0x118] sm:$0xff]
      %v213 = vld [vmem:[%s169 + $0x120] sm:$0xff]
      %v214 = vld [vmem:[%s169 + $0x128] sm:$0xff]
      %v215 = vld [vmem:[%s169 + $0x130] sm:$0xff]
      %v216 = vld [vmem:[%s169 + $0x138] sm:$0xff]
      %v217 = vld [vmem:[%s169 + $0x140] sm:$0xff]
      %v218 = vld [vmem:[%s169 + $0x148] sm:$0xff]
      %v219 = vld [vmem:[%s169 + $0x150] sm:$0xff]
      %v220 = vld [vmem:[%s169 + $0x158] sm:$0xff]
      %v221 = vld [vmem:[%s169 + $0x160] sm:$0xff]
      %v222 = vld [vmem:[%s169 + $0x168] sm:$0xff]
      %v223 = vld [vmem:[%s169 + $0x170] sm:$0xff]
      %v224 = vld [vmem:[%s169 + $0x178] sm:$0xff]
      %v225 = vld [vmem:[%s169 + $0x180] sm:$0xff]
      %v226 = vld [vmem:[%s169 + $0x188] sm:$0xff]
      %v227 = vld [vmem:[%s169 + $0x190] sm:$0xff]
      %v228 = vld [vmem:[%s169 + $0x198] sm:$0xff]
      %v229 = vld [vmem:[%s169 + $0x1a0] sm:$0xff]
      %v230 = vld [vmem:[%s169 + $0x1a8] sm:$0xff]
      %v231 = vld [vmem:[%s169 + $0x1b0] sm:$0xff]
      %v232 = vld [vmem:[%s169 + $0x1b8] sm:$0xff]
      %v233 = vld [vmem:[%s169 + $0x1c0] sm:$0xff]
      %v234 = vld [vmem:[%s169 + $0x1c8] sm:$0xff]
      %v235 = vld [vmem:[%s169 + $0x1d0] sm:$0xff]
      %v236 = vld [vmem:[%s169 + $0x1d8] sm:$0xff]
      %v237 = vld [vmem:[%s169 + $0x1e0] sm:$0xff]
      %v238 = vld [vmem:[%s169 + $0x1e8] sm:$0xff]
      %v239 = vld [vmem:[%s169 + $0x1f0] sm:$0xff]
      %v240 = vld [vmem:[%s169 + $0x1f8] sm:$0xff]
      %v241 = vld [vmem:[%s169 + $0x200] sm:$0xff]
      %v242 = vld [vmem:[%s169 + $0x208] sm:$0xff]
      %v243 = vld [vmem:[%s169 + $0x210] sm:$0xff]
      %v244 = vld [vmem:[%s169 + $0x218] sm:$0xff]
      %v245 = vld [vmem:[%s169 + $0x220] sm:$0xff]
      %v246 = vld [vmem:[%s169 + $0x228] sm:$0xff]
      %v247 = vld [vmem:[%s169 + $0x230] sm:$0xff]
      %v248 = vld [vmem:[%s169 + $0x238] sm:$0xff]
      %v249 = vld [vmem:[%s169 + $0x240] sm:$0xff]
      %v250 = vld [vmem:[%s169 + $0x248] sm:$0xff]
      %v251 = vld [vmem:[%s169 + $0x250] sm:$0xff]
      %v252 = vld [vmem:[%s169 + $0x258] sm:$0xff]
      %v253 = vld [vmem:[%s169 + $0x260] sm:$0xff]
      %v254 = vld [vmem:[%s169 + $0x268] sm:$0xff]
      %v255 = vld [vmem:[%s169 + $0x270] sm:$0xff]
      %v256 = vld [vmem:[%s169 + $0x278] sm:$0xff]
      %v257 = vld [vmem:[%s169 + $0x280] sm:$0xff]
      %v258 = vld [vmem:[%s169 + $0x288] sm:$0xff]
      %v259 = vld [vmem:[%s169 + $0x290] sm:$0xff]
      %v260 = vld [vmem:[%s169 + $0x298] sm:$0xff]
      %v261 = vld [vmem:[%s169 + $0x2a0] sm:$0xff]
      %v262 = vld [vmem:[%s169 + $0x2a8] sm:$0xff]
      %v263 = vld [vmem:[%s169 + $0x2b0] sm:$0xff]
      %v264 = vld [vmem:[%s169 + $0x2b8] sm:$0xff]
      %v265 = vld [vmem:[%s169 + $0x2c0] sm:$0xff]
      %v266 = vld [vmem:[%s169 + $0x2c8] sm:$0xff]
      %v267 = vld [vmem:[%s169 + $0x2d0] sm:$0xff]
      %v268 = vld [vmem:[%s169 + $0x2d8] sm:$0xff]
      %v269 = vld [vmem:[%s169 + $0x2e0] sm:$0xff]
      %v270 = vld [vmem:[%s169 + $0x2e8] sm:$0xff]
      %v271 = vld [vmem:[%s169 + $0x2f0] sm:$0xff]
      %v272 = vld [vmem:[%s169 + $0x2f8] sm:$0xff]
      %v273 = vld [vmem:[%s169 + $0x300] sm:$0xff]
      %v274 = vld [vmem:[%s169 + $0x308] sm:$0xff]
      %v275 = vld [vmem:[%s169 + $0x310] sm:$0xff]
      %v276 = vld [vmem:[%s169 + $0x318] sm:$0xff]
      %v277 = vld [vmem:[%s169 + $0x320] sm:$0xff]
      %v278 = vld [vmem:[%s169 + $0x328] sm:$0xff]
      %v279 = vld [vmem:[%s169 + $0x330] sm:$0xff]
      %v280 = vld [vmem:[%s169 + $0x338] sm:$0xff]
      %v281 = vld [vmem:[%s169 + $0x340] sm:$0xff]
      %v282 = vld [vmem:[%s169 + $0x348] sm:$0xff]
      %v283 = vld [vmem:[%s169 + $0x350] sm:$0xff]
      %v284 = vld [vmem:[%s169 + $0x358] sm:$0xff]
      %v285 = vld [vmem:[%s169 + $0x360] sm:$0xff]
      %v286 = vld [vmem:[%s169 + $0x368] sm:$0xff]
      %v287 = vld [vmem:[%s169 + $0x370] sm:$0xff]
      %v288 = vld [vmem:[%s169 + $0x378] sm:$0xff]
      %v289 = vld [vmem:[%s169 + $0x380] sm:$0xff]
      %v290 = vld [vmem:[%s169 + $0x388] sm:$0xff]
      %v291 = vld [vmem:[%s169 + $0x390] sm:$0xff]
      %v292 = vld [vmem:[%s169 + $0x398] sm:$0xff]
      %v293 = vld [vmem:[%s169 + $0x3a0] sm:$0xff]
      %v294 = vld [vmem:[%s169 + $0x3a8] sm:$0xff]
      %v295 = vld [vmem:[%s169 + $0x3b0] sm:$0xff]
      %v296 = vld [vmem:[%s169 + $0x3b8] sm:$0xff]
      %v297 = vld [vmem:[%s169 + $0x3c0] sm:$0xff]
      %v298 = vld [vmem:[%s169 + $0x3c8] sm:$0xff]
      %v299 = vld [vmem:[%s169 + $0x3d0] sm:$0xff]
      %v300 = vld [vmem:[%s169 + $0x3d8] sm:$0xff]
      %v301 = vld [vmem:[%s169 + $0x3e0] sm:$0xff]
      %v302 = vld [vmem:[%s169 + $0x3e8] sm:$0xff]
      %v303 = vld [vmem:[%s169 + $0x3f0] sm:$0xff]
      %v304 = vld [vmem:[%s169 + $0x3f8] sm:$0xff]
      %v305 = vld [vmem:[%s169 + $0x400] sm:$0xff]
      %v306 = vld [vmem:[%s169 + $0x408] sm:$0xff]
      %v307 = vld [vmem:[%s169 + $0x410] sm:$0xff]
      %v308 = vld [vmem:[%s169 + $0x418] sm:$0xff]
      %v309 = vld [vmem:[%s169 + $0x420] sm:$0xff]
      %v310 = vld [vmem:[%s169 + $0x428] sm:$0xff]
      %v311 = vld [vmem:[%s169 + $0x430] sm:$0xff]
      %v312 = vld [vmem:[%s169 + $0x438] sm:$0xff]
      %v313 = vld [vmem:[%s169 + $0x440] sm:$0xff]
      %v314 = vld [vmem:[%s169 + $0x448] sm:$0xff]
      %v315 = vld [vmem:[%s169 + $0x450] sm:$0xff]
      %v316 = vld [vmem:[%s169 + $0x458] sm:$0xff]
      %v317 = vld [vmem:[%s169 + $0x460] sm:$0xff]
      %v318 = vld [vmem:[%s169 + $0x468] sm:$0xff]
      %v319 = vld [vmem:[%s169 + $0x470] sm:$0xff]
      %v320 = vld [vmem:[%s169 + $0x478] sm:$0xff]
      %v321 = vld [vmem:[%s169 + $0x480] sm:$0xff]
      %v322 = vld [vmem:[%s169 + $0x488] sm:$0xff]
      %v323 = vld [vmem:[%s169 + $0x490] sm:$0xff]
      %v324 = vld [vmem:[%s169 + $0x498] sm:$0xff]
      %v325 = vld [vmem:[%s169 + $0x4a0] sm:$0xff]
      %v326 = vld [vmem:[%s169 + $0x4a8] sm:$0xff]
      %v327 = vld [vmem:[%s169 + $0x4b0] sm:$0xff]
      %v328 = vld [vmem:[%s169 + $0x4b8] sm:$0xff]
      %v329 = vld [vmem:[%s169 + $0x4c0] sm:$0xff]
      %v330 = vld [vmem:[%s169 + $0x4c8] sm:$0xff]
      %v331 = vld [vmem:[%s169 + $0x4d0] sm:$0xff]
      %v332 = vld [vmem:[%s169 + $0x4d8] sm:$0xff]
      %v333 = vld [vmem:[%s169 + $0x4e0] sm:$0xff]
      %v334 = vld [vmem:[%s169 + $0x4e8] sm:$0xff]
      %v335 = vld [vmem:[%s169 + $0x4f0] sm:$0xff]
      %v336 = vld [vmem:[%s169 + $0x4f8] sm:$0xff]
      %v337 = vld [vmem:[%s169 + $0x500] sm:$0xff]
      %v338 = vld [vmem:[%s169 + $0x508] sm:$0xff]
      %v339 = vld [vmem:[%s169 + $0x510] sm:$0xff]
      %v340 = vld [vmem:[%s169 + $0x518] sm:$0xff]
      %v341 = vld [vmem:[%s169 + $0x520] sm:$0xff]
      %v342 = vld [vmem:[%s169 + $0x528] sm:$0xff]
      %v343 = vld [vmem:[%s169 + $0x530] sm:$0xff]
      %v344 = vld [vmem:[%s169 + $0x538] sm:$0xff]
      %v345 = vld [vmem:[%s169 + $0x540] sm:$0xff]
      %v346 = vld [vmem:[%s169 + $0x548] sm:$0xff]
      %v347 = vld [vmem:[%s169 + $0x550] sm:$0xff]
      %v348 = vld [vmem:[%s169 + $0x558] sm:$0xff]
      %v349 = vld [vmem:[%s169 + $0x560] sm:$0xff]
      %v350 = vld [vmem:[%s169 + $0x568] sm:$0xff]
      %v351 = vld [vmem:[%s169 + $0x570] sm:$0xff]
      %v352 = vld [vmem:[%s169 + $0x578] sm:$0xff]
      %v353 = vld [vmem:[%s169 + $0x580] sm:$0xff]
      %v354 = vld [vmem:[%s169 + $0x588] sm:$0xff]
      %v355 = vld [vmem:[%s169 + $0x590] sm:$0xff]
      %v356 = vld [vmem:[%s169 + $0x598] sm:$0xff]
      %v357 = vld [vmem:[%s169 + $0x5a0] sm:$0xff]
      %v358 = vld [vmem:[%s169 + $0x5a8] sm:$0xff]
      %v359 = vld [vmem:[%s169 + $0x5b0] sm:$0xff]
      %v360 = vld [vmem:[%s169 + $0x5b8] sm:$0xff]
      %v361 = vld [vmem:[%s169 + $0x5c0] sm:$0xff]
      %v362 = vld [vmem:[%s169 + $0x5c8] sm:$0xff]
      %v363 = vld [vmem:[%s169 + $0x5d0] sm:$0xff]
      %v364 = vld [vmem:[%s169 + $0x5d8] sm:$0xff]
      %v365 = vld [vmem:[%s169 + $0x5e0] sm:$0xff]
      %v366 = vld [vmem:[%s169 + $0x5e8] sm:$0xff]
      %v367 = vld [vmem:[%s169 + $0x5f0] sm:$0xff]
      %v368 = vld [vmem:[%s169 + $0x5f8] sm:$0xff]
      %v369 = vld [vmem:[%s1] sm:$0xff]
      %v370 = vld [vmem:[%s1 + $0x8] sm:$0xff]
      %v371 = vld [vmem:[%s1 + $0x10] sm:$0xff]
      %v372 = vld [vmem:[%s1 + $0x18] sm:$0xff]
      %v373 = vld [vmem:[%s1 + $0x20] sm:$0xff]
      %v374 = vld [vmem:[%s1 + $0x28] sm:$0xff]
      %v375 = vld [vmem:[%s1 + $0x30] sm:$0xff]
      %v376 = vld [vmem:[%s1 + $0x38] sm:$0xff]
      %v377 = vld [vmem:[%s1 + $0x40] sm:$0xff]
      %v378 = vld [vmem:[%s1 + $0x48] sm:$0xff]
      %v379 = vld [vmem:[%s1 + $0x50] sm:$0xff]
      %v380 = vld [vmem:[%s1 + $0x58] sm:$0xff]
      %v381 = vld [vmem:[%s1 + $0x60] sm:$0xff]
      %v382 = vld [vmem:[%s1 + $0x68] sm:$0xff]
      %v383 = vld [vmem:[%s1 + $0x70] sm:$0xff]
      %v384 = vld [vmem:[%s1 + $0x78] sm:$0xff]
      %v385 = vld [vmem:[%s1 + $0x80] sm:$0xff]
      %v386 = vld [vmem:[%s1 + $0x88] sm:$0xff]
      %v387 = vld [vmem:[%s1 + $0x90] sm:$0xff]
      %v388 = vld [vmem:[%s1 + $0x98] sm:$0xff]
      %v389 = vld [vmem:[%s1 + $0xa0] sm:$0xff]
      %v390 = vld [vmem:[%s1 + $0xa8] sm:$0xff]
      %v391 = vld [vmem:[%s1 + $0xb0] sm:$0xff]
      %v392 = vld [vmem:[%s1 + $0xb8] sm:$0xff]
      %v393 = vld [vmem:[%s1 + $0xc0] sm:$0xff]
      %v394 = vld [vmem:[%s1 + $0xc8] sm:$0xff]
      %v395 = vld [vmem:[%s1 + $0xd0] sm:$0xff]
      %v396 = vld [vmem:[%s1 + $0xd8] sm:$0xff]
      %v397 = vld [vmem:[%s1 + $0xe0] sm:$0xff]
      %v398 = vld [vmem:[%s1 + $0xe8] sm:$0xff]
      %v399 = vld [vmem:[%s1 + $0xf0] sm:$0xff]
      %v400 = vld [vmem:[%s1 + $0xf8] sm:$0xff]
      %v401 = vld [vmem:[%s1 + $0x100] sm:$0xff]
      %v402 = vld [vmem:[%s1 + $0x108] sm:$0xff]
      %v403 = vld [vmem:[%s1 + $0x110] sm:$0xff]
      %v404 = vld [vmem:[%s1 + $0x118] sm:$0xff]
      %v405 = vld [vmem:[%s1 + $0x120] sm:$0xff]
      %v406 = vld [vmem:[%s1 + $0x128] sm:$0xff]
      %v407 = vld [vmem:[%s1 + $0x130] sm:$0xff]
      %v408 = vld [vmem:[%s1 + $0x138] sm:$0xff]
      %v409 = vld [vmem:[%s1 + $0x140] sm:$0xff]
      %v410 = vld [vmem:[%s1 + $0x148] sm:$0xff]
      %v411 = vld [vmem:[%s1 + $0x150] sm:$0xff]
      %v412 = vld [vmem:[%s1 + $0x158] sm:$0xff]
      %v413 = vld [vmem:[%s1 + $0x160] sm:$0xff]
      %v414 = vld [vmem:[%s1 + $0x168] sm:$0xff]
      %v415 = vld [vmem:[%s1 + $0x170] sm:$0xff]
      %v416 = vld [vmem:[%s1 + $0x178] sm:$0xff]
      %v417 = vld [vmem:[%s1 + $0x180] sm:$0xff]
      %v418 = vld [vmem:[%s1 + $0x188] sm:$0xff]
      %v419 = vld [vmem:[%s1 + $0x190] sm:$0xff]
      %v420 = vld [vmem:[%s1 + $0x198] sm:$0xff]
      %v421 = vld [vmem:[%s1 + $0x1a0] sm:$0xff]
      %v422 = vld [vmem:[%s1 + $0x1a8] sm:$0xff]
      %v423 = vld [vmem:[%s1 + $0x1b0] sm:$0xff]
      %v424 = vld [vmem:[%s1 + $0x1b8] sm:$0xff]
      %v425 = vld [vmem:[%s1 + $0x1c0] sm:$0xff]
      %v426 = vld [vmem:[%s1 + $0x1c8] sm:$0xff]
      %v427 = vld [vmem:[%s1 + $0x1d0] sm:$0xff]
      %v428 = vld [vmem:[%s1 + $0x1d8] sm:$0xff]
      %v429 = vld [vmem:[%s1 + $0x1e0] sm:$0xff]
      %v430 = vld [vmem:[%s1 + $0x1e8] sm:$0xff]
      %v431 = vld [vmem:[%s1 + $0x1f0] sm:$0xff]
      %v432 = vld [vmem:[%s1 + $0x1f8] sm:$0xff]
      %v433 = vld [vmem:[%s1 + $0x200] sm:$0xff]
      %v434 = vld [vmem:[%s1 + $0x208] sm:$0xff]
      %v435 = vld [vmem:[%s1 + $0x210] sm:$0xff]
      %v436 = vld [vmem:[%s1 + $0x218] sm:$0xff]
      %v437 = vld [vmem:[%s1 + $0x220] sm:$0xff]
      %v438 = vld [vmem:[%s1 + $0x228] sm:$0xff]
      %v439 = vld [vmem:[%s1 + $0x230] sm:$0xff]
      %v440 = vld [vmem:[%s1 + $0x238] sm:$0xff]
      %v441 = vld [vmem:[%s1 + $0x240] sm:$0xff]
      %v442 = vld [vmem:[%s1 + $0x248] sm:$0xff]
      %v443 = vld [vmem:[%s1 + $0x250] sm:$0xff]
      %v444 = vld [vmem:[%s1 + $0x258] sm:$0xff]
      %v445 = vld [vmem:[%s1 + $0x260] sm:$0xff]
      %v446 = vld [vmem:[%s1 + $0x268] sm:$0xff]
      %v447 = vld [vmem:[%s1 + $0x270] sm:$0xff]
      %v448 = vld [vmem:[%s1 + $0x278] sm:$0xff]
      %v449 = vld [vmem:[%s1 + $0x280] sm:$0xff]
      %v450 = vld [vmem:[%s1 + $0x288] sm:$0xff]
      %v451 = vld [vmem:[%s1 + $0x290] sm:$0xff]
      %v452 = vld [vmem:[%s1 + $0x298] sm:$0xff]
      %v453 = vld [vmem:[%s1 + $0x2a0] sm:$0xff]
      %v454 = vld [vmem:[%s1 + $0x2a8] sm:$0xff]
      %v455 = vld [vmem:[%s1 + $0x2b0] sm:$0xff]
      %v456 = vld [vmem:[%s1 + $0x2b8] sm:$0xff]
      %v457 = vld [vmem:[%s1 + $0x2c0] sm:$0xff]
      %v458 = vld [vmem:[%s1 + $0x2c8] sm:$0xff]
      %v459 = vld [vmem:[%s1 + $0x2d0] sm:$0xff]
      %v460 = vld [vmem:[%s1 + $0x2d8] sm:$0xff]
      %v461 = vld [vmem:[%s1 + $0x2e0] sm:$0xff]
      %v462 = vld [vmem:[%s1 + $0x2e8] sm:$0xff]
      %v463 = vld [vmem:[%s1 + $0x2f0] sm:$0xff]
      %v464 = vld [vmem:[%s1 + $0x2f8] sm:$0xff]
      %v465 = vld [vmem:[%s1 + $0x300] sm:$0xff]
      %v466 = vld [vmem:[%s1 + $0x308] sm:$0xff]
      %v467 = vld [vmem:[%s1 + $0x310] sm:$0xff]
      %v468 = vld [vmem:[%s1 + $0x318] sm:$0xff]
      %v469 = vld [vmem:[%s1 + $0x320] sm:$0xff]
      %v470 = vld [vmem:[%s1 + $0x328] sm:$0xff]
      %v471 = vld [vmem:[%s1 + $0x330] sm:$0xff]
      %v472 = vld [vmem:[%s1 + $0x338] sm:$0xff]
      %v473 = vld [vmem:[%s1 + $0x340] sm:$0xff]
      %v474 = vld [vmem:[%s1 + $0x348] sm:$0xff]
      %v475 = vld [vmem:[%s1 + $0x350] sm:$0xff]
      %v476 = vld [vmem:[%s1 + $0x358] sm:$0xff]
      %v477 = vld [vmem:[%s1 + $0x360] sm:$0xff]
      %v478 = vld [vmem:[%s1 + $0x368] sm:$0xff]
      %v479 = vld [vmem:[%s1 + $0x370] sm:$0xff]
      %v480 = vld [vmem:[%s1 + $0x378] sm:$0xff]
      %v481 = vld [vmem:[%s1 + $0x380] sm:$0xff]
      %v482 = vld [vmem:[%s1 + $0x388] sm:$0xff]
      %v483 = vld [vmem:[%s1 + $0x390] sm:$0xff]
      %v484 = vld [vmem:[%s1 + $0x398] sm:$0xff]
      %v485 = vld [vmem:[%s1 + $0x3a0] sm:$0xff]
      %v486 = vld [vmem:[%s1 + $0x3a8] sm:$0xff]
      %v487 = vld [vmem:[%s1 + $0x3b0] sm:$0xff]
      %v488 = vld [vmem:[%s1 + $0x3b8] sm:$0xff]
      %v489 = vld [vmem:[%s1 + $0x3c0] sm:$0xff]
      %v490 = vld [vmem:[%s1 + $0x3c8] sm:$0xff]
      %v491 = vld [vmem:[%s1 + $0x3d0] sm:$0xff]
      %v492 = vld [vmem:[%s1 + $0x3d8] sm:$0xff]
      %v493 = vld [vmem:[%s1 + $0x3e0] sm:$0xff]
      %v494 = vld [vmem:[%s1 + $0x3e8] sm:$0xff]
      %v495 = vld [vmem:[%s1 + $0x3f0] sm:$0xff]
      %v496 = vld [vmem:[%s1 + $0x3f8] sm:$0xff]
      %v497 = vld [vmem:[%s1 + $0x400] sm:$0xff]
      %v498 = vld [vmem:[%s1 + $0x408] sm:$0xff]
      %v499 = vld [vmem:[%s1 + $0x410] sm:$0xff]
      %v500 = vld [vmem:[%s1 + $0x418] sm:$0xff]
      %v501 = vld [vmem:[%s1 + $0x420] sm:$0xff]
      %v502 = vld [vmem:[%s1 + $0x428] sm:$0xff]
      %v503 = vld [vmem:[%s1 + $0x430] sm:$0xff]
      %v504 = vld [vmem:[%s1 + $0x438] sm:$0xff]
      %v505 = vld [vmem:[%s1 + $0x440] sm:$0xff]
      %v506 = vld [vmem:[%s1 + $0x448] sm:$0xff]
      %v507 = vld [vmem:[%s1 + $0x450] sm:$0xff]
      %v508 = vld [vmem:[%s1 + $0x458] sm:$0xff]
      %v509 = vld [vmem:[%s1 + $0x460] sm:$0xff]
      %v510 = vld [vmem:[%s1 + $0x468] sm:$0xff]
      %v511 = vld [vmem:[%s1 + $0x470] sm:$0xff]
      %v512 = vld [vmem:[%s1 + $0x478] sm:$0xff]
      %v513 = vld [vmem:[%s1 + $0x480] sm:$0xff]
      %v514 = vld [vmem:[%s1 + $0x488] sm:$0xff]
      %v515 = vld [vmem:[%s1 + $0x490] sm:$0xff]
      %v516 = vld [vmem:[%s1 + $0x498] sm:$0xff]
      %v517 = vld [vmem:[%s1 + $0x4a0] sm:$0xff]
      %v518 = vld [vmem:[%s1 + $0x4a8] sm:$0xff]
      %v519 = vld [vmem:[%s1 + $0x4b0] sm:$0xff]
      %v520 = vld [vmem:[%s1 + $0x4b8] sm:$0xff]
      %v521 = vld [vmem:[%s1 + $0x4c0] sm:$0xff]
      %v522 = vld [vmem:[%s1 + $0x4c8] sm:$0xff]
      %v523 = vld [vmem:[%s1 + $0x4d0] sm:$0xff]
      %v524 = vld [vmem:[%s1 + $0x4d8] sm:$0xff]
      %v525 = vld [vmem:[%s1 + $0x4e0] sm:$0xff]
      %v526 = vld [vmem:[%s1 + $0x4e8] sm:$0xff]
      %v527 = vld [vmem:[%s1 + $0x4f0] sm:$0xff]
      %v528 = vld [vmem:[%s1 + $0x4f8] sm:$0xff]
      %v529 = vld [vmem:[%s1 + $0x500] sm:$0xff]
      %v530 = vld [vmem:[%s1 + $0x508] sm:$0xff]
      %v531 = vld [vmem:[%s1 + $0x510] sm:$0xff]
      %v532 = vld [vmem:[%s1 + $0x518] sm:$0xff]
      %v533 = vld [vmem:[%s1 + $0x520] sm:$0xff]
      %v534 = vld [vmem:[%s1 + $0x528] sm:$0xff]
      %v535 = vld [vmem:[%s1 + $0x530] sm:$0xff]
      %v536 = vld [vmem:[%s1 + $0x538] sm:$0xff]
      %v537 = vld [vmem:[%s1 + $0x540] sm:$0xff]
      %v538 = vld [vmem:[%s1 + $0x548] sm:$0xff]
      %v539 = vld [vmem:[%s1 + $0x550] sm:$0xff]
      %v540 = vld [vmem:[%s1 + $0x558] sm:$0xff]
      %v541 = vld [vmem:[%s1 + $0x560] sm:$0xff]
      %v542 = vld [vmem:[%s1 + $0x568] sm:$0xff]
      %v543 = vld [vmem:[%s1 + $0x570] sm:$0xff]
      %v544 = vld [vmem:[%s1 + $0x578] sm:$0xff]
      %v545 = vld [vmem:[%s1 + $0x580] sm:$0xff]
      %v546 = vld [vmem:[%s1 + $0x588] sm:$0xff]
      %v547 = vld [vmem:[%s1 + $0x590] sm:$0xff]
      %v548 = vld [vmem:[%s1 + $0x598] sm:$0xff]
      %v549 = vld [vmem:[%s1 + $0x5a0] sm:$0xff]
      %v550 = vld [vmem:[%s1 + $0x5a8] sm:$0xff]
      %v551 = vld [vmem:[%s1 + $0x5b0] sm:$0xff]
      %v552 = vld [vmem:[%s1 + $0x5b8] sm:$0xff]
      %v553 = vld [vmem:[%s1 + $0x5c0] sm:$0xff]
      %v554 = vld [vmem:[%s1 + $0x5c8] sm:$0xff]
      %v555 = vld [vmem:[%s1 + $0x5d0] sm:$0xff]
      %v556 = vld [vmem:[%s1 + $0x5d8] sm:$0xff]
      %v557 = vld [vmem:[%s1 + $0x5e0] sm:$0xff]
      %v558 = vld [vmem:[%s1 + $0x5e8] sm:$0xff]
      %v559 = vld [vmem:[%s1 + $0x5f0] sm:$0xff]
      %v560 = vld [vmem:[%s1 + $0x5f8] sm:$0xff]
      %v561 = vld [vmem:[%s1 + $0x600] sm:$0xff]
      %v562 = vld [vmem:[%s1 + $0x608] sm:$0xff]
      %v563 = vld [vmem:[%s1 + $0x610] sm:$0xff]
      %v564 = vld [vmem:[%s1 + $0x618] sm:$0xff]
      %v565 = vld [vmem:[%s1 + $0x620] sm:$0xff]
      %v566 = vld [vmem:[%s1 + $0x628] sm:$0xff]
      %v567 = vld [vmem:[%s1 + $0x630] sm:$0xff]
      %v568 = vld [vmem:[%s1 + $0x638] sm:$0xff]
      %v569 = vld [vmem:[%s1 + $0x640] sm:$0xff]
      %v570 = vld [vmem:[%s1 + $0x648] sm:$0xff]
      %v571 = vld [vmem:[%s1 + $0x650] sm:$0xff]
      %v572 = vld [vmem:[%s1 + $0x658] sm:$0xff]
      %v573 = vld [vmem:[%s1 + $0x660] sm:$0xff]
      %v574 = vld [vmem:[%s1 + $0x668] sm:$0xff]
      %v575 = vld [vmem:[%s1 + $0x670] sm:$0xff]
      %v576 = vld [vmem:[%s1 + $0x678] sm:$0xff]
      %v577 = vld [vmem:[%s1 + $0x680] sm:$0xff]
      %v578 = vld [vmem:[%s1 + $0x688] sm:$0xff]
      %v579 = vld [vmem:[%s1 + $0x690] sm:$0xff]
      %v580 = vld [vmem:[%s1 + $0x698] sm:$0xff]
      %v581 = vld [vmem:[%s1 + $0x6a0] sm:$0xff]
      %v582 = vld [vmem:[%s1 + $0x6a8] sm:$0xff]
      %v583 = vld [vmem:[%s1 + $0x6b0] sm:$0xff]
      %v584 = vld [vmem:[%s1 + $0x6b8] sm:$0xff]
      %v585 = vld [vmem:[%s1 + $0x6c0] sm:$0xff]
      %v586 = vld [vmem:[%s1 + $0x6c8] sm:$0xff]
      %v587 = vld [vmem:[%s1 + $0x6d0] sm:$0xff]
      %v588 = vld [vmem:[%s1 + $0x6d8] sm:$0xff]
      %v589 = vld [vmem:[%s1 + $0x6e0] sm:$0xff]
      %v590 = vld [vmem:[%s1 + $0x6e8] sm:$0xff]
      %v591 = vld [vmem:[%s1 + $0x6f0] sm:$0xff]
      %v592 = vld [vmem:[%s1 + $0x6f8] sm:$0xff]
      %v593 = vld [vmem:[%s1 + $0x700] sm:$0xff]
      %v594 = vld [vmem:[%s1 + $0x708] sm:$0xff]
      %v595 = vld [vmem:[%s1 + $0x710] sm:$0xff]
      %v596 = vld [vmem:[%s1 + $0x718] sm:$0xff]
      %v597 = vld [vmem:[%s1 + $0x720] sm:$0xff]
      %v598 = vld [vmem:[%s1 + $0x728] sm:$0xff]
      %v599 = vld [vmem:[%s1 + $0x730] sm:$0xff]
      %v600 = vld [vmem:[%s1 + $0x738] sm:$0xff]
      %v601 = vld [vmem:[%s1 + $0x740] sm:$0xff]
      %v602 = vld [vmem:[%s1 + $0x748] sm:$0xff]
      %v603 = vld [vmem:[%s1 + $0x750] sm:$0xff]
      %v604 = vld [vmem:[%s1 + $0x758] sm:$0xff]
      %v605 = vld [vmem:[%s1 + $0x760] sm:$0xff]
      %v606 = vld [vmem:[%s1 + $0x768] sm:$0xff]
      %v607 = vld [vmem:[%s1 + $0x770] sm:$0xff]
      %v608 = vld [vmem:[%s1 + $0x778] sm:$0xff]
      %v609 = vld [vmem:[%s1 + $0x780] sm:$0xff]
      %v610 = vld [vmem:[%s1 + $0x788] sm:$0xff]
      %v611 = vld [vmem:[%s1 + $0x790] sm:$0xff]
      %v612 = vld [vmem:[%s1 + $0x798] sm:$0xff]
      %v613 = vld [vmem:[%s1 + $0x7a0] sm:$0xff]
      %v614 = vld [vmem:[%s1 + $0x7a8] sm:$0xff]
      %v615 = vld [vmem:[%s1 + $0x7b0] sm:$0xff]
      %v616 = vld [vmem:[%s1 + $0x7b8] sm:$0xff]
      %v617 = vld [vmem:[%s1 + $0x7c0] sm:$0xff]
      %v618 = vld [vmem:[%s1 + $0x7c8] sm:$0xff]
      %v619 = vld [vmem:[%s1 + $0x7d0] sm:$0xff]
      %v620 = vld [vmem:[%s1 + $0x7d8] sm:$0xff]
      %v621 = vld [vmem:[%s1 + $0x7e0] sm:$0xff]
      %v622 = vld [vmem:[%s1 + $0x7e8] sm:$0xff]
      %v623 = vld [vmem:[%s1 + $0x7f0] sm:$0xff]
      %v624 = vld [vmem:[%s1 + $0x7f8] sm:$0xff]
      %v625 = vld [vmem:[%s1 + $0x800] sm:$0xff]
      %v626 = vld [vmem:[%s1 + $0x808] sm:$0xff]
      %v627 = vld [vmem:[%s1 + $0x810] sm:$0xff]
      %v628 = vld [vmem:[%s1 + $0x818] sm:$0xff]
      %v629 = vld [vmem:[%s1 + $0x820] sm:$0xff]
      %v630 = vld [vmem:[%s1 + $0x828] sm:$0xff]
      %v631 = vld [vmem:[%s1 + $0x830] sm:$0xff]
      %v632 = vld [vmem:[%s1 + $0x838] sm:$0xff]
      %v633 = vld [vmem:[%s1 + $0x840] sm:$0xff]
      %v634 = vld [vmem:[%s1 + $0x848] sm:$0xff]
      %v635 = vld [vmem:[%s1 + $0x850] sm:$0xff]
      %v636 = vld [vmem:[%s1 + $0x858] sm:$0xff]
      %v637 = vld [vmem:[%s1 + $0x860] sm:$0xff]
      %v638 = vld [vmem:[%s1 + $0x868] sm:$0xff]
      %v639 = vld [vmem:[%s1 + $0x870] sm:$0xff]
      %v640 = vld [vmem:[%s1 + $0x878] sm:$0xff]
      %v641 = vld [vmem:[%s1 + $0x880] sm:$0xff]
      %v642 = vld [vmem:[%s1 + $0x888] sm:$0xff]
      %v643 = vld [vmem:[%s1 + $0x890] sm:$0xff]
      %v644 = vld [vmem:[%s1 + $0x898] sm:$0xff]
      %v645 = vld [vmem:[%s1 + $0x8a0] sm:$0xff]
      %v646 = vld [vmem:[%s1 + $0x8a8] sm:$0xff]
      %v647 = vld [vmem:[%s1 + $0x8b0] sm:$0xff]
      %v648 = vld [vmem:[%s1 + $0x8b8] sm:$0xff]
      %v649 = vld [vmem:[%s1 + $0x8c0] sm:$0xff]
      %v650 = vld [vmem:[%s1 + $0x8c8] sm:$0xff]
      %v651 = vld [vmem:[%s1 + $0x8d0] sm:$0xff]
      %v652 = vld [vmem:[%s1 + $0x8d8] sm:$0xff]
      %v653 = vld [vmem:[%s1 + $0x8e0] sm:$0xff]
      %v654 = vld [vmem:[%s1 + $0x8e8] sm:$0xff]
      %v655 = vld [vmem:[%s1 + $0x8f0] sm:$0xff]
      %v656 = vld [vmem:[%s1 + $0x8f8] sm:$0xff]
      %v657 = vld [vmem:[%s1 + $0x900] sm:$0xff]
      %v658 = vld [vmem:[%s1 + $0x908] sm:$0xff]
      %v659 = vld [vmem:[%s1 + $0x910] sm:$0xff]
      %v660 = vld [vmem:[%s1 + $0x918] sm:$0xff]
      %v661 = vld [vmem:[%s1 + $0x920] sm:$0xff]
      %v662 = vld [vmem:[%s1 + $0x928] sm:$0xff]
      %v663 = vld [vmem:[%s1 + $0x930] sm:$0xff]
      %v664 = vld [vmem:[%s1 + $0x938] sm:$0xff]
      %v665 = vld [vmem:[%s1 + $0x940] sm:$0xff]
      %v666 = vld [vmem:[%s1 + $0x948] sm:$0xff]
      %v667 = vld [vmem:[%s1 + $0x950] sm:$0xff]
      %v668 = vld [vmem:[%s1 + $0x958] sm:$0xff]
      %v669 = vld [vmem:[%s1 + $0x960] sm:$0xff]
      %v670 = vld [vmem:[%s1 + $0x968] sm:$0xff]
      %v671 = vld [vmem:[%s1 + $0x970] sm:$0xff]
      %v672 = vld [vmem:[%s1 + $0x978] sm:$0xff]
      %v673 = vld [vmem:[%s1 + $0x980] sm:$0xff]
      %v674 = vld [vmem:[%s1 + $0x988] sm:$0xff]
      %v675 = vld [vmem:[%s1 + $0x990] sm:$0xff]
      %v676 = vld [vmem:[%s1 + $0x998] sm:$0xff]
      %v677 = vld [vmem:[%s1 + $0x9a0] sm:$0xff]
      %v678 = vld [vmem:[%s1 + $0x9a8] sm:$0xff]
      %v679 = vld [vmem:[%s1 + $0x9b0] sm:$0xff]
      %v680 = vld [vmem:[%s1 + $0x9b8] sm:$0xff]
      %v681 = vld [vmem:[%s1 + $0x9c0] sm:$0xff]
      %v682 = vld [vmem:[%s1 + $0x9c8] sm:$0xff]
      %v683 = vld [vmem:[%s1 + $0x9d0] sm:$0xff]
      %v684 = vld [vmem:[%s1 + $0x9d8] sm:$0xff]
      %v685 = vld [vmem:[%s1 + $0x9e0] sm:$0xff]
      %v686 = vld [vmem:[%s1 + $0x9e8] sm:$0xff]
      %v687 = vld [vmem:[%s1 + $0x9f0] sm:$0xff]
      %v688 = vld [vmem:[%s1 + $0x9f8] sm:$0xff]
      %v689 = vld [vmem:[%s1 + $0xa00] sm:$0xff]
      %v690 = vld [vmem:[%s1 + $0xa08] sm:$0xff]
      %v691 = vld [vmem:[%s1 + $0xa10] sm:$0xff]
      %v692 = vld [vmem:[%s1 + $0xa18] sm:$0xff]
      %v693 = vld [vmem:[%s1 + $0xa20] sm:$0xff]
      %v694 = vld [vmem:[%s1 + $0xa28] sm:$0xff]
      %v695 = vld [vmem:[%s1 + $0xa30] sm:$0xff]
      %v696 = vld [vmem:[%s1 + $0xa38] sm:$0xff]
      %v697 = vld [vmem:[%s1 + $0xa40] sm:$0xff]
      %v698 = vld [vmem:[%s1 + $0xa48] sm:$0xff]
      %v699 = vld [vmem:[%s1 + $0xa50] sm:$0xff]
      %v700 = vld [vmem:[%s1 + $0xa58] sm:$0xff]
      %v701 = vld [vmem:[%s1 + $0xa60] sm:$0xff]
      %v702 = vld [vmem:[%s1 + $0xa68] sm:$0xff]
      %v703 = vld [vmem:[%s1 + $0xa70] sm:$0xff]
      %v704 = vld [vmem:[%s1 + $0xa78] sm:$0xff]
      %v705 = vld [vmem:[%s1 + $0xa80] sm:$0xff]
      %v706 = vld [vmem:[%s1 + $0xa88] sm:$0xff]
      %v707 = vld [vmem:[%s1 + $0xa90] sm:$0xff]
      %v708 = vld [vmem:[%s1 + $0xa98] sm:$0xff]
      %v709 = vld [vmem:[%s1 + $0xaa0] sm:$0xff]
      %v710 = vld [vmem:[%s1 + $0xaa8] sm:$0xff]
      %v711 = vld [vmem:[%s1 + $0xab0] sm:$0xff]
      %v712 = vld [vmem:[%s1 + $0xab8] sm:$0xff]
      %v713 = vld [vmem:[%s1 + $0xac0] sm:$0xff]
      %v714 = vld [vmem:[%s1 + $0xac8] sm:$0xff]
      %v715 = vld [vmem:[%s1 + $0xad0] sm:$0xff]
      %v716 = vld [vmem:[%s1 + $0xad8] sm:$0xff]
      %v717 = vld [vmem:[%s1 + $0xae0] sm:$0xff]
      %v718 = vld [vmem:[%s1 + $0xae8] sm:$0xff]
      %v719 = vld [vmem:[%s1 + $0xaf0] sm:$0xff]
      %v720 = vld [vmem:[%s1 + $0xaf8] sm:$0xff]
      %v721 = vld [vmem:[%s1 + $0xb00] sm:$0xff]
      %v722 = vld [vmem:[%s1 + $0xb08] sm:$0xff]
      %v723 = vld [vmem:[%s1 + $0xb10] sm:$0xff]
      %v724 = vld [vmem:[%s1 + $0xb18] sm:$0xff]
      %v725 = vld [vmem:[%s1 + $0xb20] sm:$0xff]
      %v726 = vld [vmem:[%s1 + $0xb28] sm:$0xff]
      %v727 = vld [vmem:[%s1 + $0xb30] sm:$0xff]
      %v728 = vld [vmem:[%s1 + $0xb38] sm:$0xff]
      %v729 = vld [vmem:[%s1 + $0xb40] sm:$0xff]
      %v730 = vld [vmem:[%s1 + $0xb48] sm:$0xff]
      %v731 = vld [vmem:[%s1 + $0xb50] sm:$0xff]
      %v732 = vld [vmem:[%s1 + $0xb58] sm:$0xff]
      %v733 = vld [vmem:[%s1 + $0xb60] sm:$0xff]
      %v734 = vld [vmem:[%s1 + $0xb68] sm:$0xff]
      %v735 = vld [vmem:[%s1 + $0xb70] sm:$0xff]
      %v736 = vld [vmem:[%s1 + $0xb78] sm:$0xff]
      %v737 = vld [vmem:[%s1 + $0xb80] sm:$0xff]
      %v738 = vld [vmem:[%s1 + $0xb88] sm:$0xff]
      %v739 = vld [vmem:[%s1 + $0xb90] sm:$0xff]
      %v740 = vld [vmem:[%s1 + $0xb98] sm:$0xff]
      %v741 = vld [vmem:[%s1 + $0xba0] sm:$0xff]
      %v742 = vld [vmem:[%s1 + $0xba8] sm:$0xff]
      %v743 = vld [vmem:[%s1 + $0xbb0] sm:$0xff]
      %v744 = vld [vmem:[%s1 + $0xbb8] sm:$0xff]
      %v745 = vld [vmem:[%s1 + $0xbc0] sm:$0xff]
      %v746 = vld [vmem:[%s1 + $0xbc8] sm:$0xff]
      %v747 = vld [vmem:[%s1 + $0xbd0] sm:$0xff]
      %v748 = vld [vmem:[%s1 + $0xbd8] sm:$0xff]
      %v749 = vld [vmem:[%s1 + $0xbe0] sm:$0xff]
      %v750 = vld [vmem:[%s1 + $0xbe8] sm:$0xff]
      %v751 = vld [vmem:[%s1 + $0xbf0] sm:$0xff]
      %v752 = vld [vmem:[%s1 + $0xbf8] sm:$0xff]
      %v753 = vld [vmem:[%s2] sm:$0xff]
      %v754 = vld [vmem:[%s2 + $0x8] sm:$0xff]
      %v755 = vld [vmem:[%s2 + $0x10] sm:$0xff]
      %v756 = vld [vmem:[%s2 + $0x18] sm:$0xff]
      %v757 = vld [vmem:[%s2 + $0x20] sm:$0xff]
      %v758 = vld [vmem:[%s2 + $0x28] sm:$0xff]
      %v759 = vld [vmem:[%s2 + $0x30] sm:$0xff]
      %v760 = vld [vmem:[%s2 + $0x38] sm:$0xff]
      %761 = vmatprep.subr.mxu0 0.0
      %762 = vmatpush1.msra.mxu0 %v369
      %763 = vmatprep.subr.mxu0 0.0
      %764 = vmatpush1.msra.mxu0 %v370
      %765 = vmatprep.subr.mxu0 0.0
      %766 = vmatpush1.msra.mxu0 %v371
      %767 = vmatprep.subr.mxu0 0.0
      %768 = vmatpush1.msra.mxu0 %v372
      %769 = vmatprep.subr.mxu0 0.0
      %770 = vmatpush1.msra.mxu0 %v373
      %771 = vmatprep.subr.mxu0 0.0
      %772 = vmatpush1.msra.mxu0 %v374
      %773 = vmatprep.subr.mxu0 0.0
      %774 = vmatpush1.msra.mxu0 %v375
      %775 = vmatprep.subr.mxu0 0.0
      %776 = vmatpush1.msra.mxu0 %v376
      %777 = vmatprep.subr.mxu0 0.0
      %778 = vmatpush1.msra.mxu0 %v377
      %779 = vmatprep.subr.mxu0 0.0
      %780 = vmatpush1.msra.mxu0 %v378
      %781 = vmatprep.subr.mxu0 0.0
      %782 = vmatpush1.msra.mxu0 %v379
      %783 = vmatprep.subr.mxu0 0.0
      %784 = vmatpush1.msra.mxu0 %v380
      %785 = vmatprep.subr.mxu0 0.0
      %786 = vmatpush1.msra.mxu0 %v381
      %787 = vmatprep.subr.mxu0 0.0
      %788 = vmatpush1.msra.mxu0 %v382
      %789 = vmatprep.subr.mxu0 0.0
      %790 = vmatpush1.msra.mxu0 %v383
      %791 = vmatprep.subr.mxu0 0.0
      %792 = vmatpush1.msra.mxu0 %v384
      %793 = vmatprep.subr.mxu0 0.0
      %794 = vmatpush1.msra.mxu0 %v385
      %795 = vmatprep.subr.mxu0 0.0
      %796 = vmatpush1.msra.mxu0 %v386
      %797 = vmatprep.subr.mxu0 0.0
      %798 = vmatpush1.msra.mxu0 %v387
      %799 = vmatprep.subr.mxu0 0.0
      %800 = vmatpush1.msra.mxu0 %v388
      %801 = vmatprep.subr.mxu0 0.0
      %802 = vmatpush1.msra.mxu0 %v389
      %803 = vmatprep.subr.mxu0 0.0
      %804 = vmatpush1.msra.mxu0 %v390
      %805 = vmatprep.subr.mxu0 0.0
      %806 = vmatpush1.msra.mxu0 %v391
      %807 = vmatprep.subr.mxu0 0.0
      %808 = vmatpush1.msra.mxu0 %v392
      %809 = vmatprep.subr.mxu0 0.0
      %810 = vmatpush1.msra.mxu0 %v393
      %811 = vmatprep.subr.mxu0 0.0
      %812 = vmatpush1.msra.mxu0 %v394
      %813 = vmatprep.subr.mxu0 0.0
      %814 = vmatpush1.msra.mxu0 %v395
      %815 = vmatprep.subr.mxu0 0.0
      %816 = vmatpush1.msra.mxu0 %v396
      %817 = vmatprep.subr.mxu0 0.0
      %818 = vmatpush1.msra.mxu0 %v397
      %819 = vmatprep.subr.mxu0 0.0
      %820 = vmatpush1.msra.mxu0 %v398
      %821 = vmatprep.subr.mxu0 0.0
      %822 = vmatpush1.msra.mxu0 %v399
      %823 = vmatprep.subr.mxu0 0.0
      %824 = vmatpush1.msra.mxu0 %v400
      %825 = vmatprep.mubr.f32.mxu0 %v178
      %826 = vmatmul.mubr.f32.gmra.mrb[0].mxu0 %v177
      %v827 = vpop.f32.mrb[0].mxu0
      %v828 = vadd.f32 %v753, %v827
      %v829 = vpop.f32.mrb[0].mxu0
      %830 = vmatprep.mubr.f32.mxu0 %v202
      %831 = vmatmul.mubr.f32.gmra.mrb[0].mxu0 %v201
      %v832 = vpop.f32.mrb[0].mxu0
      %v833 = vadd.f32 %v754, %v832
      %v834 = vpop.f32.mrb[0].mxu0
      %835 = vmatprep.mubr.f32.mxu0 %v226
      %836 = vmatmul.mubr.f32.gmra.mrb[0].mxu0 %v225
      %v837 = vpop.f32.mrb[0].mxu0
      %v838 = vadd.f32 %v755, %v837
      %v839 = vpop.f32.mrb[0].mxu0
      %840 = vmatprep.mubr.f32.mxu0 %v250
      %841 = vmatmul.mubr.f32.gmra.mrb[0].mxu0 %v249
      %v842 = vpop.f32.mrb[0].mxu0
      %v843 = vadd.f32 %v756, %v842
      %v844 = vpop.f32.mrb[0].mxu0
      %845 = vmatprep.mubr.f32.mxu0 %v274
      %846 = vmatmul.mubr.f32.gmra.mrb[0].mxu0 %v273
      %v847 = vpop.f32.mrb[0].mxu0
      %v848 = vadd.f32 %v757, %v847
      %v849 = vpop.f32.mrb[0].mxu0
      %850 = vmatprep.mubr.f32.mxu0 %v298
      %851 = vmatmul.mubr.f32.gmra.mrb[0].mxu0 %v297
      %v852 = vpop.f32.mrb[0].mxu0
      %v853 = vadd.f32 %v758, %v852
      %v854 = vpop.f32.mrb[0].mxu0
      %855 = vmatprep.mubr.f32.mxu0 %v322
      %856 = vmatmul.mubr.f32.gmra.mrb[0].mxu0 %v321
      %v857 = vpop.f32.mrb[0].mxu0
      %v858 = vadd.f32 %v759, %v857
      %v859 = vpop.f32.mrb[0].mxu0
      %860 = vmatprep.mubr.f32.mxu0 %v346
      %861 = vmatmul.mubr.f32.gmra.mrb[0].mxu0 %v345
      %v862 = vpop.f32.mrb[0].mxu0
      %v863 = vadd.f32 %v760, %v862
      %v864 = vpop.f32.mrb[0].mxu0
      %865 = vdwg.mxu0
      %866 = vmatprep.subr.mxu0 0.0
      %867 = vmatpush1.msra.mxu0 %v401
      %868 = vmatprep.subr.mxu0 0.0
      %869 = vmatpush1.msra.mxu0 %v402
      %870 = vmatprep.subr.mxu0 0.0
      %871 = vmatpush1.msra.mxu0 %v403
      %872 = vmatprep.subr.mxu0 0.0
      %873 = vmatpush1.msra.mxu0 %v404
      %874 = vmatprep.subr.mxu0 0.0
      %875 = vmatpush1.msra.mxu0 %v405
      %876 = vmatprep.subr.mxu0 0.0
      %877 = vmatpush1.msra.mxu0 %v406
      %878 = vmatprep.subr.mxu0 0.0
      %879 = vmatpush1.msra.mxu0 %v407
      %880 = vmatprep.subr.mxu0 0.0
      %881 = vmatpush1.msra.mxu0 %v408
      %882 = vmatprep.subr.mxu0 0.0
      %883 = vmatpush1.msra.mxu0 %v409
      %884 = vmatprep.subr.mxu0 0.0
      %885 = vmatpush1.msra.mxu0 %v410
      %886 = vmatprep.subr.mxu0 0.0
      %887 = vmatpush1.msra.mxu0 %v411
      %888 = vmatprep.subr.mxu0 0.0
      %889 = vmatpush1.msra.mxu0 %v412
      %890 = vmatprep.subr.mxu0 0.0
      %891 = vmatpush1.msra.mxu0 %v413
      %892 = vmatprep.subr.mxu0 0.0
      %893 = vmatpush1.msra.mxu0 %v414
      %894 = vmatprep.subr.mxu0 0.0
      %895 = vmatpush1.msra.mxu0 %v415
      %896 = vmatprep.subr.mxu0 0.0
      %897 = vmatpush1.msra.mxu0 %v416
      %898 = vmatprep.subr.mxu0 0.0
      %899 = vmatpush1.msra.mxu0 %v417
      %900 = vmatprep.subr.mxu0 0.0
      %901 = vmatpush1.msra.mxu0 %v418
      %902 = vmatprep.subr.mxu0 0.0
      %903 = vmatpush1.msra.mxu0 %v419
      %904 = vmatprep.subr.mxu0 0.0
      %905 = vmatpush1.msra.mxu0 %v420
      %906 = vmatprep.subr.mxu0 0.0
      %907 = vmatpush1.msra.mxu0 %v421
      %908 = vmatprep.subr.mxu0 0.0
      %909 = vmatpush1.msra.mxu0 %v422
      %910 = vmatprep.subr.mxu0 0.0
      %911 = vmatpush1.msra.mxu0 %v423
      %912 = vmatprep.subr.mxu0 0.0
      %913 = vmatpush1.msra.mxu0 %v424
      %914 = vmatprep.subr.mxu0 0.0
      %915 = vmatpush1.msra.mxu0 %v425
      %916 = vmatprep.subr.mxu0 0.0
      %917 = vmatpush1.msra.mxu0 %v426
      %918 = vmatprep.subr.mxu0 0.0
      %919 = vmatpush1.msra.mxu0 %v427
      %920 = vmatprep.subr.mxu0 0.0
      %921 = vmatpush1.msra.mxu0 %v428
      %922 = vmatprep.subr.mxu0 0.0
      %923 = vmatpush1.msra.mxu0 %v429
      %924 = vmatprep.subr.mxu0 0.0
      %925 = vmatpush1.msra.mxu0 %v430
      %926 = vmatprep.subr.mxu0 0.0
      %927 = vmatpush1.msra.mxu0 %v431
      %928 = vmatprep.subr.mxu0 0.0
      %929 = vmatpush1.msra.mxu0 %v432
      %930 = vmatprep.mubr.f32.mxu0 %v180
      %931 = vmatmul.mubr.f32.gmra.mrb[0].mxu0 %v179
      %v932 = vpop.f32.mrb[0].mxu0
      %v933 = vadd.f32 %v828, %v932
      %v934 = vpop.f32.mrb[0].mxu0
      %935 = vmatprep.mubr.f32.mxu0 %v204
      %936 = vmatmul.mubr.f32.gmra.mrb[0].mxu0 %v203
      %v937 = vpop.f32.mrb[0].mxu0
      %v938 = vadd.f32 %v833, %v937
      %v939 = vpop.f32.mrb[0].mxu0
      %940 = vmatprep.mubr.f32.mxu0 %v228
      %941 = vmatmul.mubr.f32.gmra.mrb[0].mxu0 %v227
      %v942 = vpop.f32.mrb[0].mxu0
      %v943 = vadd.f32 %v838, %v942
      %v944 = vpop.f32.mrb[0].mxu0
      %945 = vmatprep.mubr.f32.mxu0 %v252
      %946 = vmatmul.mubr.f32.gmra.mrb[0].mxu0 %v251
      %v947 = vpop.f32.mrb[0].mxu0
      %v948 = vadd.f32 %v843, %v947
      %v949 = vpop.f32.mrb[0].mxu0
      %950 = vmatprep.mubr.f32.mxu0 %v276
      %951 = vmatmul.mubr.f32.gmra.mrb[0].mxu0 %v275
      %v952 = vpop.f32.mrb[0].mxu0
      %v953 = vadd.f32 %v848, %v952
      %v954 = vpop.f32.mrb[0].mxu0
      %955 = vmatprep.mubr.f32.mxu0 %v300
      %956 = vmatmul.mubr.f32.gmra.mrb[0].mxu0 %v299
      %v957 = vpop.f32.mrb[0].mxu0
      %v958 = vadd.f32 %v853, %v957
      %v959 = vpop.f32.mrb[0].mxu0
      %960 = vmatprep.mubr.f32.mxu0 %v324
      %961 = vmatmul.mubr.f32.gmra.mrb[0].mxu0 %v323
      %v962 = vpop.f32.mrb[0].mxu0
      %v963 = vadd.f32 %v858, %v962
      %v964 = vpop.f32.mrb[0].mxu0
      %965 = vmatprep.mubr.f32.mxu0 %v348
      %966 = vmatmul.mubr.f32.gmra.mrb[0].mxu0 %v347
      %v967 = vpop.f32.mrb[0].mxu0
      %v968 = vadd.f32 %v863, %v967
      %v969 = vpop.f32.mrb[0].mxu0
      %970 = vdwg.mxu0
      %971 = vmatprep.subr.mxu0 0.0
      %972 = vmatpush1.msra.mxu0 %v433
      %973 = vmatprep.subr.mxu0 0.0
      %974 = vmatpush1.msra.mxu0 %v434
      %975 = vmatprep.subr.mxu0 0.0
      %976 = vmatpush1.msra.mxu0 %v435
      %977 = vmatprep.subr.mxu0 0.0
      %978 = vmatpush1.msra.mxu0 %v436
      %979 = vmatprep.subr.mxu0 0.0
      %980 = vmatpush1.msra.mxu0 %v437
      %981 = vmatprep.subr.mxu0 0.0
      %982 = vmatpush1.msra.mxu0 %v438
      %983 = vmatprep.subr.mxu0 0.0
      %984 = vmatpush1.msra.mxu0 %v439
      %985 = vmatprep.subr.mxu0 0.0
      %986 = vmatpush1.msra.mxu0 %v440
      %987 = vmatprep.subr.mxu0 0.0
      %988 = vmatpush1.msra.mxu0 %v441
      %989 = vmatprep.subr.mxu0 0.0
      %990 = vmatpush1.msra.mxu0 %v442
      %991 = vmatprep.subr.mxu0 0.0
      %992 = vmatpush1.msra.mxu0 %v443
      %993 = vmatprep.subr.mxu0 0.0
      %994 = vmatpush1.msra.mxu0 %v444
      %995 = vmatprep.subr.mxu0 0.0
      %996 = vmatpush1.msra.mxu0 %v445
      %997 = vmatprep.subr.mxu0 0.0
      %998 = vmatpush1.msra.mxu0 %v446
      %999 = vmatprep.subr.mxu0 0.0
      %1000 = vmatpush1.msra.mxu0 %v447
      %1001 = vmatprep.subr.mxu0 0.0
      %1002 = vmatpush1.msra.mxu0 %v448
      %1003 = vmatprep.subr.mxu0 0.0
      %1004 = vmatpush1.msra.mxu0 %v449
      %1005 = vmatprep.subr.mxu0 0.0
      %1006 = vmatpush1.msra.mxu0 %v450
      %1007 = vmatprep.subr.mxu0 0.0
      %1008 = vmatpush1.msra.mxu0 %v451
      %1009 = vmatprep.subr.mxu0 0.0
      %1010 = vmatpush1.msra.mxu0 %v452
      %1011 = vmatprep.subr.mxu0 0.0
      %1012 = vmatpush1.msra.mxu0 %v453
      %1013 = vmatprep.subr.mxu0 0.0
      %1014 = vmatpush1.msra.mxu0 %v454
      %1015 = vmatprep.subr.mxu0 0.0
      %1016 = vmatpush1.msra.mxu0 %v455
      %1017 = vmatprep.subr.mxu0 0.0
      %1018 = vmatpush1.msra.mxu0 %v456
      %1019 = vmatprep.subr.mxu0 0.0
      %1020 = vmatpush1.msra.mxu0 %v457
      %1021 = vmatprep.subr.mxu0 0.0
      %1022 = vmatpush1.msra.mxu0 %v458
      %1023 = vmatprep.subr.mxu0 0.0
      %1024 = vmatpush1.msra.mxu0 %v459
      %1025 = vmatprep.subr.mxu0 0.0
      %1026 = vmatpush1.msra.mxu0 %v460
      %1027 = vmatprep.subr.mxu0 0.0
      %1028 = vmatpush1.msra.mxu0 %v461
      %1029 = vmatprep.subr.mxu0 0.0
      %1030 = vmatpush1.msra.mxu0 %v462
      %1031 = vmatprep.subr.mxu0 0.0
      %1032 = vmatpush1.msra.mxu0 %v463
      %1033 = vmatprep.subr.mxu0 0.0
      %1034 = vmatpush1.msra.mxu0 %v464
      %1035 = vmatprep.mubr.f32.mxu0 %v182
      %1036 = vmatmul.mubr.f32.gmra.mrb[0].mxu0 %v181
      %v1037 = vpop.f32.mrb[0].mxu0
      %v1038 = vadd.f32 %v933, %v1037
      %v1039 = vpop.f32.mrb[0].mxu0
      %1040 = vmatprep.mubr.f32.mxu0 %v206
      %1041 = vmatmul.mubr.f32.gmra.mrb[0].mxu0 %v205
      %v1042 = vpop.f32.mrb[0].mxu0
      %v1043 = vadd.f32 %v938, %v1042
      %v1044 = vpop.f32.mrb[0].mxu0
      %1045 = vmatprep.mubr.f32.mxu0 %v230
      %1046 = vmatmul.mubr.f32.gmra.mrb[0].mxu0 %v229
      %v1047 = vpop.f32.mrb[0].mxu0
      %v1048 = vadd.f32 %v943, %v1047
      %v1049 = vpop.f32.mrb[0].mxu0
      %1050 = vmatprep.mubr.f32.mxu0 %v254
      %1051 = vmatmul.mubr.f32.gmra.mrb[0].mxu0 %v253
      %v1052 = vpop.f32.mrb[0].mxu0
      %v1053 = vadd.f32 %v948, %v1052
      %v1054 = vpop.f32.mrb[0].mxu0
      %1055 = vmatprep.mubr.f32.mxu0 %v278
      %1056 = vmatmul.mubr.f32.gmra.mrb[0].mxu0 %v277
      %v1057 = vpop.f32.mrb[0].mxu0
      %v1058 = vadd.f32 %v953, %v1057
      %v1059 = vpop.f32.mrb[0].mxu0
      %1060 = vmatprep.mubr.f32.mxu0 %v302
      %1061 = vmatmul.mubr.f32.gmra.mrb[0].mxu0 %v301
      %v1062 = vpop.f32.mrb[0].mxu0
      %v1063 = vadd.f32 %v958, %v1062
      %v1064 = vpop.f32.mrb[0].mxu0
      %1065 = vmatprep.mubr.f32.mxu0 %v326
      %1066 = vmatmul.mubr.f32.gmra.mrb[0].mxu0 %v325
      %v1067 = vpop.f32.mrb[0].mxu0
      %v1068 = vadd.f32 %v963, %v1067
      %v1069 = vpop.f32.mrb[0].mxu0
      %1070 = vmatprep.mubr.f32.mxu0 %v350
      %1071 = vmatmul.mubr.f32.gmra.mrb[0].mxu0 %v349
      %v1072 = vpop.f32.mrb[0].mxu0
      %v1073 = vadd.f32 %v968, %v1072
      %v1074 = vpop.f32.mrb[0].mxu0
      %1075 = vdwg.mxu0
      %1076 = vmatprep.subr.mxu0 0.0
      %1077 = vmatpush1.msra.mxu0 %v465
      %1078 = vmatprep.subr.mxu0 0.0
      %1079 = vmatpush1.msra.mxu0 %v466
      %1080 = vmatprep.subr.mxu0 0.0
      %1081 = vmatpush1.msra.mxu0 %v467
      %1082 = vmatprep.subr.mxu0 0.0
      %1083 = vmatpush1.msra.mxu0 %v468
      %1084 = vmatprep.subr.mxu0 0.0
      %1085 = vmatpush1.msra.mxu0 %v469
      %1086 = vmatprep.subr.mxu0 0.0
      %1087 = vmatpush1.msra.mxu0 %v470
      %1088 = vmatprep.subr.mxu0 0.0
      %1089 = vmatpush1.msra.mxu0 %v471
      %1090 = vmatprep.subr.mxu0 0.0
      %1091 = vmatpush1.msra.mxu0 %v472
      %1092 = vmatprep.subr.mxu0 0.0
      %1093 = vmatpush1.msra.mxu0 %v473
      %1094 = vmatprep.subr.mxu0 0.0
      %1095 = vmatpush1.msra.mxu0 %v474
      %1096 = vmatprep.subr.mxu0 0.0
      %1097 = vmatpush1.msra.mxu0 %v475
      %1098 = vmatprep.subr.mxu0 0.0
      %1099 = vmatpush1.msra.mxu0 %v476
      %1100 = vmatprep.subr.mxu0 0.0
      %1101 = vmatpush1.msra.mxu0 %v477
      %1102 = vmatprep.subr.mxu0 0.0
      %1103 = vmatpush1.msra.mxu0 %v478
      %1104 = vmatprep.subr.mxu0 0.0
      %1105 = vmatpush1.msra.mxu0 %v479
      %1106 = vmatprep.subr.mxu0 0.0
      %1107 = vmatpush1.msra.mxu0 %v480
      %1108 = vmatprep.subr.mxu0 0.0
      %1109 = vmatpush1.msra.mxu0 %v481
      %1110 = vmatprep.subr.mxu0 0.0
      %1111 = vmatpush1.msra.mxu0 %v482
      %1112 = vmatprep.subr.mxu0 0.0
      %1113 = vmatpush1.msra.mxu0 %v483
      %1114 = vmatprep.subr.mxu0 0.0
      %1115 = vmatpush1.msra.mxu0 %v484
      %1116 = vmatprep.subr.mxu0 0.0
      %1117 = vmatpush1.msra.mxu0 %v485
      %1118 = vmatprep.subr.mxu0 0.0
      %1119 = vmatpush1.msra.mxu0 %v486
      %1120 = vmatprep.subr.mxu0 0.0
      %1121 = vmatpush1.msra.mxu0 %v487
      %1122 = vmatprep.subr.mxu0 0.0
      %1123 = vmatpush1.msra.mxu0 %v488
      %1124 = vmatprep.subr.mxu0 0.0
      %1125 = vmatpush1.msra.mxu0 %v489
      %1126 = vmatprep.subr.mxu0 0.0
      %1127 = vmatpush1.msra.mxu0 %v490
      %1128 = vmatprep.subr.mxu0 0.0
      %1129 = vmatpush1.msra.mxu0 %v491
      %1130 = vmatprep.subr.mxu0 0.0
      %1131 = vmatpush1.msra.mxu0 %v492
      %1132 = vmatprep.subr.mxu0 0.0
      %1133 = vmatpush1.msra.mxu0 %v493
      %1134 = vmatprep.subr.mxu0 0.0
      %1135 = vmatpush1.msra.mxu0 %v494
      %1136 = vmatprep.subr.mxu0 0.0
      %1137 = vmatpush1.msra.mxu0 %v495
      %1138 = vmatprep.subr.mxu0 0.0
      %1139 = vmatpush1.msra.mxu0 %v496
      %1140 = vmatprep.mubr.f32.mxu0 %v184
      %1141 = vmatmul.mubr.f32.gmra.mrb[0].mxu0 %v183
      %v1142 = vpop.f32.mrb[0].mxu0
      %v1143 = vadd.f32 %v1038, %v1142
      %v1144 = vpop.f32.mrb[0].mxu0
      %1145 = vmatprep.mubr.f32.mxu0 %v208
      %1146 = vmatmul.mubr.f32.gmra.mrb[0].mxu0 %v207
      %v1147 = vpop.f32.mrb[0].mxu0
      %v1148 = vadd.f32 %v1043, %v1147
      %v1149 = vpop.f32.mrb[0].mxu0
      %1150 = vmatprep.mubr.f32.mxu0 %v232
      %1151 = vmatmul.mubr.f32.gmra.mrb[0].mxu0 %v231
      %v1152 = vpop.f32.mrb[0].mxu0
      %v1153 = vadd.f32 %v1048, %v1152
      %v1154 = vpop.f32.mrb[0].mxu0
      %1155 = vmatprep.mubr.f32.mxu0 %v256
      %1156 = vmatmul.mubr.f32.gmra.mrb[0].mxu0 %v255
      %v1157 = vpop.f32.mrb[0].mxu0
      %v1158 = vadd.f32 %v1053, %v1157
      %v1159 = vpop.f32.mrb[0].mxu0
      %1160 = vmatprep.mubr.f32.mxu0 %v280
      %1161 = vmatmul.mubr.f32.gmra.mrb[0].mxu0 %v279
      %v1162 = vpop.f32.mrb[0].mxu0
      %v1163 = vadd.f32 %v1058, %v1162
      %v1164 = vpop.f32.mrb[0].mxu0
      %1165 = vmatprep.mubr.f32.mxu0 %v304
      %1166 = vmatmul.mubr.f32.gmra.mrb[0].mxu0 %v303
      %v1167 = vpop.f32.mrb[0].mxu0
      %v1168 = vadd.f32 %v1063, %v1167
      %v1169 = vpop.f32.mrb[0].mxu0
      %1170 = vmatprep.mubr.f32.mxu0 %v328
      %1171 = vmatmul.mubr.f32.gmra.mrb[0].mxu0 %v327
      %v1172 = vpop.f32.mrb[0].mxu0
      %v1173 = vadd.f32 %v1068, %v1172
      %v1174 = vpop.f32.mrb[0].mxu0
      %1175 = vmatprep.mubr.f32.mxu0 %v352
      %1176 = vmatmul.mubr.f32.gmra.mrb[0].mxu0 %v351
      %v1177 = vpop.f32.mrb[0].mxu0
      %v1178 = vadd.f32 %v1073, %v1177
      %v1179 = vpop.f32.mrb[0].mxu0
      %1180 = vdwg.mxu0
      %1181 = vmatprep.subr.mxu0 0.0
      %1182 = vmatpush1.msra.mxu0 %v497
      %1183 = vmatprep.subr.mxu0 0.0
      %1184 = vmatpush1.msra.mxu0 %v498
      %1185 = vmatprep.subr.mxu0 0.0
      %1186 = vmatpush1.msra.mxu0 %v499
      %1187 = vmatprep.subr.mxu0 0.0
      %1188 = vmatpush1.msra.mxu0 %v500
      %1189 = vmatprep.subr.mxu0 0.0
      %1190 = vmatpush1.msra.mxu0 %v501
      %1191 = vmatprep.subr.mxu0 0.0
      %1192 = vmatpush1.msra.mxu0 %v502
      %1193 = vmatprep.subr.mxu0 0.0
      %1194 = vmatpush1.msra.mxu0 %v503
      %1195 = vmatprep.subr.mxu0 0.0
      %1196 = vmatpush1.msra.mxu0 %v504
      %1197 = vmatprep.subr.mxu0 0.0
      %1198 = vmatpush1.msra.mxu0 %v505
      %1199 = vmatprep.subr.mxu0 0.0
      %1200 = vmatpush1.msra.mxu0 %v506
      %1201 = vmatprep.subr.mxu0 0.0
      %1202 = vmatpush1.msra.mxu0 %v507
      %1203 = vmatprep.subr.mxu0 0.0
      %1204 = vmatpush1.msra.mxu0 %v508
      %1205 = vmatprep.subr.mxu0 0.0
      %1206 = vmatpush1.msra.mxu0 %v509
      %1207 = vmatprep.subr.mxu0 0.0
      %1208 = vmatpush1.msra.mxu0 %v510
      %1209 = vmatprep.subr.mxu0 0.0
      %1210 = vmatpush1.msra.mxu0 %v511
      %1211 = vmatprep.subr.mxu0 0.0
      %1212 = vmatpush1.msra.mxu0 %v512
      %1213 = vmatprep.subr.mxu0 0.0
      %1214 = vmatpush1.msra.mxu0 %v513
      %1215 = vmatprep.subr.mxu0 0.0
      %1216 = vmatpush1.msra.mxu0 %v514
      %1217 = vmatprep.subr.mxu0 0.0
      %1218 = vmatpush1.msra.mxu0 %v515
      %1219 = vmatprep.subr.mxu0 0.0
      %1220 = vmatpush1.msra.mxu0 %v516
      %1221 = vmatprep.subr.mxu0 0.0
      %1222 = vmatpush1.msra.mxu0 %v517
      %1223 = vmatprep.subr.mxu0 0.0
      %1224 = vmatpush1.msra.mxu0 %v518
      %1225 = vmatprep.subr.mxu0 0.0
      %1226 = vmatpush1.msra.mxu0 %v519
      %1227 = vmatprep.subr.mxu0 0.0
      %1228 = vmatpush1.msra.mxu0 %v520
      %1229 = vmatprep.subr.mxu0 0.0
      %1230 = vmatpush1.msra.mxu0 %v521
      %1231 = vmatprep.subr.mxu0 0.0
      %1232 = vmatpush1.msra.mxu0 %v522
      %1233 = vmatprep.subr.mxu0 0.0
      %1234 = vmatpush1.msra.mxu0 %v523
      %1235 = vmatprep.subr.mxu0 0.0
      %1236 = vmatpush1.msra.mxu0 %v524
      %1237 = vmatprep.subr.mxu0 0.0
      %1238 = vmatpush1.msra.mxu0 %v525
      %1239 = vmatprep.subr.mxu0 0.0
      %1240 = vmatpush1.msra.mxu0 %v526
      %1241 = vmatprep.subr.mxu0 0.0
      %1242 = vmatpush1.msra.mxu0 %v527
      %1243 = vmatprep.subr.mxu0 0.0
      %1244 = vmatpush1.msra.mxu0 %v528
      %1245 = vmatprep.mubr.f32.mxu0 %v186
      %1246 = vmatmul.mubr.f32.gmra.mrb[0].mxu0 %v185
      %v1247 = vpop.f32.mrb[0].mxu0
      %v1248 = vadd.f32 %v1143, %v1247
      %v1249 = vpop.f32.mrb[0].mxu0
      %1250 = vmatprep.mubr.f32.mxu0 %v210
      %1251 = vmatmul.mubr.f32.gmra.mrb[0].mxu0 %v209
      %v1252 = vpop.f32.mrb[0].mxu0
      %v1253 = vadd.f32 %v1148, %v1252
      %v1254 = vpop.f32.mrb[0].mxu0
      %1255 = vmatprep.mubr.f32.mxu0 %v234
      %1256 = vmatmul.mubr.f32.gmra.mrb[0].mxu0 %v233
      %v1257 = vpop.f32.mrb[0].mxu0
      %v1258 = vadd.f32 %v1153, %v1257
      %v1259 = vpop.f32.mrb[0].mxu0
      %1260 = vmatprep.mubr.f32.mxu0 %v258
      %1261 = vmatmul.mubr.f32.gmra.mrb[0].mxu0 %v257
      %v1262 = vpop.f32.mrb[0].mxu0
      %v1263 = vadd.f32 %v1158, %v1262
      %v1264 = vpop.f32.mrb[0].mxu0
      %1265 = vmatprep.mubr.f32.mxu0 %v282
      %1266 = vmatmul.mubr.f32.gmra.mrb[0].mxu0 %v281
      %v1267 = vpop.f32.mrb[0].mxu0
      %v1268 = vadd.f32 %v1163, %v1267
      %v1269 = vpop.f32.mrb[0].mxu0
      %1270 = vmatprep.mubr.f32.mxu0 %v306
      %1271 = vmatmul.mubr.f32.gmra.mrb[0].mxu0 %v305
      %v1272 = vpop.f32.mrb[0].mxu0
      %v1273 = vadd.f32 %v1168, %v1272
      %v1274 = vpop.f32.mrb[0].mxu0
      %1275 = vmatprep.mubr.f32.mxu0 %v330
      %1276 = vmatmul.mubr.f32.gmra.mrb[0].mxu0 %v329
      %v1277 = vpop.f32.mrb[0].mxu0
      %v1278 = vadd.f32 %v1173, %v1277
      %v1279 = vpop.f32.mrb[0].mxu0
      %1280 = vmatprep.mubr.f32.mxu0 %v354
      %1281 = vmatmul.mubr.f32.gmra.mrb[0].mxu0 %v353
      %v1282 = vpop.f32.mrb[0].mxu0
      %v1283 = vadd.f32 %v1178, %v1282
      %v1284 = vpop.f32.mrb[0].mxu0
      %1285 = vdwg.mxu0
      %1286 = vmatprep.subr.mxu0 0.0
      %1287 = vmatpush1.msra.mxu0 %v529
      %1288 = vmatprep.subr.mxu0 0.0
      %1289 = vmatpush1.msra.mxu0 %v530
      %1290 = vmatprep.subr.mxu0 0.0
      %1291 = vmatpush1.msra.mxu0 %v531
      %1292 = vmatprep.subr.mxu0 0.0
      %1293 = vmatpush1.msra.mxu0 %v532
      %1294 = vmatprep.subr.mxu0 0.0
      %1295 = vmatpush1.msra.mxu0 %v533
      %1296 = vmatprep.subr.mxu0 0.0
      %1297 = vmatpush1.msra.mxu0 %v534
      %1298 = vmatprep.subr.mxu0 0.0
      %1299 = vmatpush1.msra.mxu0 %v535
      %1300 = vmatprep.subr.mxu0 0.0
      %1301 = vmatpush1.msra.mxu0 %v536
      %1302 = vmatprep.subr.mxu0 0.0
      %1303 = vmatpush1.msra.mxu0 %v537
      %1304 = vmatprep.subr.mxu0 0.0
      %1305 = vmatpush1.msra.mxu0 %v538
      %1306 = vmatprep.subr.mxu0 0.0
      %1307 = vmatpush1.msra.mxu0 %v539
      %1308 = vmatprep.subr.mxu0 0.0
      %1309 = vmatpush1.msra.mxu0 %v540
      %1310 = vmatprep.subr.mxu0 0.0
      %1311 = vmatpush1.msra.mxu0 %v541
      %1312 = vmatprep.subr.mxu0 0.0
      %1313 = vmatpush1.msra.mxu0 %v542
      %1314 = vmatprep.subr.mxu0 0.0
      %1315 = vmatpush1.msra.mxu0 %v543
      %1316 = vmatprep.subr.mxu0 0.0
      %1317 = vmatpush1.msra.mxu0 %v544
      %1318 = vmatprep.subr.mxu0 0.0
      %1319 = vmatpush1.msra.mxu0 %v545
      %1320 = vmatprep.subr.mxu0 0.0
      %1321 = vmatpush1.msra.mxu0 %v546
      %1322 = vmatprep.subr.mxu0 0.0
      %1323 = vmatpush1.msra.mxu0 %v547
      %1324 = vmatprep.subr.mxu0 0.0
      %1325 = vmatpush1.msra.mxu0 %v548
      %1326 = vmatprep.subr.mxu0 0.0
      %1327 = vmatpush1.msra.mxu0 %v549
      %1328 = vmatprep.subr.mxu0 0.0
      %1329 = vmatpush1.msra.mxu0 %v550
      %1330 = vmatprep.subr.mxu0 0.0
      %1331 = vmatpush1.msra.mxu0 %v551
      %1332 = vmatprep.subr.mxu0 0.0
      %1333 = vmatpush1.msra.mxu0 %v552
      %1334 = vmatprep.subr.mxu0 0.0
      %1335 = vmatpush1.msra.mxu0 %v553
      %1336 = vmatprep.subr.mxu0 0.0
      %1337 = vmatpush1.msra.mxu0 %v554
      %1338 = vmatprep.subr.mxu0 0.0
      %1339 = vmatpush1.msra.mxu0 %v555
      %1340 = vmatprep.subr.mxu0 0.0
      %1341 = vmatpush1.msra.mxu0 %v556
      %1342 = vmatprep.subr.mxu0 0.0
      %1343 = vmatpush1.msra.mxu0 %v557
      %1344 = vmatprep.subr.mxu0 0.0
      %1345 = vmatpush1.msra.mxu0 %v558
      %1346 = vmatprep.subr.mxu0 0.0
      %1347 = vmatpush1.msra.mxu0 %v559
      %1348 = vmatprep.subr.mxu0 0.0
      %1349 = vmatpush1.msra.mxu0 %v560
      %1350 = vmatprep.mubr.f32.mxu0 %v188
      %1351 = vmatmul.mubr.f32.gmra.mrb[0].mxu0 %v187
      %v1352 = vpop.f32.mrb[0].mxu0
      %v1353 = vadd.f32 %v1248, %v1352
      %v1354 = vpop.f32.mrb[0].mxu0
      %1355 = vmatprep.mubr.f32.mxu0 %v212
      %1356 = vmatmul.mubr.f32.gmra.mrb[0].mxu0 %v211
      %v1357 = vpop.f32.mrb[0].mxu0
      %v1358 = vadd.f32 %v1253, %v1357
      %v1359 = vpop.f32.mrb[0].mxu0
      %1360 = vmatprep.mubr.f32.mxu0 %v236
      %1361 = vmatmul.mubr.f32.gmra.mrb[0].mxu0 %v235
      %v1362 = vpop.f32.mrb[0].mxu0
      %v1363 = vadd.f32 %v1258, %v1362
      %v1364 = vpop.f32.mrb[0].mxu0
      %1365 = vmatprep.mubr.f32.mxu0 %v260
      %1366 = vmatmul.mubr.f32.gmra.mrb[0].mxu0 %v259
      %v1367 = vpop.f32.mrb[0].mxu0
      %v1368 = vadd.f32 %v1263, %v1367
      %v1369 = vpop.f32.mrb[0].mxu0
      %1370 = vmatprep.mubr.f32.mxu0 %v284
      %1371 = vmatmul.mubr.f32.gmra.mrb[0].mxu0 %v283
      %v1372 = vpop.f32.mrb[0].mxu0
      %v1373 = vadd.f32 %v1268, %v1372
      %v1374 = vpop.f32.mrb[0].mxu0
      %1375 = vmatprep.mubr.f32.mxu0 %v308
      %1376 = vmatmul.mubr.f32.gmra.mrb[0].mxu0 %v307
      %v1377 = vpop.f32.mrb[0].mxu0
      %v1378 = vadd.f32 %v1273, %v1377
      %v1379 = vpop.f32.mrb[0].mxu0
      %1380 = vmatprep.mubr.f32.mxu0 %v332
      %1381 = vmatmul.mubr.f32.gmra.mrb[0].mxu0 %v331
      %v1382 = vpop.f32.mrb[0].mxu0
      %v1383 = vadd.f32 %v1278, %v1382
      %v1384 = vpop.f32.mrb[0].mxu0
      %1385 = vmatprep.mubr.f32.mxu0 %v356
      %1386 = vmatmul.mubr.f32.gmra.mrb[0].mxu0 %v355
      %v1387 = vpop.f32.mrb[0].mxu0
      %v1388 = vadd.f32 %v1283, %v1387
      %v1389 = vpop.f32.mrb[0].mxu0
      %1390 = vdwg.mxu0
      %1391 = vmatprep.subr.mxu0 0.0
      %1392 = vmatpush1.msra.mxu0 %v561
      %1393 = vmatprep.subr.mxu0 0.0
      %1394 = vmatpush1.msra.mxu0 %v562
      %1395 = vmatprep.subr.mxu0 0.0
      %1396 = vmatpush1.msra.mxu0 %v563
      %1397 = vmatprep.subr.mxu0 0.0
      %1398 = vmatpush1.msra.mxu0 %v564
      %1399 = vmatprep.subr.mxu0 0.0
      %1400 = vmatpush1.msra.mxu0 %v565
      %1401 = vmatprep.subr.mxu0 0.0
      %1402 = vmatpush1.msra.mxu0 %v566
      %1403 = vmatprep.subr.mxu0 0.0
      %1404 = vmatpush1.msra.mxu0 %v567
      %1405 = vmatprep.subr.mxu0 0.0
      %1406 = vmatpush1.msra.mxu0 %v568
      %1407 = vmatprep.subr.mxu0 0.0
      %1408 = vmatpush1.msra.mxu0 %v569
      %1409 = vmatprep.subr.mxu0 0.0
      %1410 = vmatpush1.msra.mxu0 %v570
      %1411 = vmatprep.subr.mxu0 0.0
      %1412 = vmatpush1.msra.mxu0 %v571
      %1413 = vmatprep.subr.mxu0 0.0
      %1414 = vmatpush1.msra.mxu0 %v572
      %1415 = vmatprep.subr.mxu0 0.0
      %1416 = vmatpush1.msra.mxu0 %v573
      %1417 = vmatprep.subr.mxu0 0.0
      %1418 = vmatpush1.msra.mxu0 %v574
      %1419 = vmatprep.subr.mxu0 0.0
      %1420 = vmatpush1.msra.mxu0 %v575
      %1421 = vmatprep.subr.mxu0 0.0
      %1422 = vmatpush1.msra.mxu0 %v576
      %1423 = vmatprep.subr.mxu0 0.0
      %1424 = vmatpush1.msra.mxu0 %v577
      %1425 = vmatprep.subr.mxu0 0.0
      %1426 = vmatpush1.msra.mxu0 %v578
      %1427 = vmatprep.subr.mxu0 0.0
      %1428 = vmatpush1.msra.mxu0 %v579
      %1429 = vmatprep.subr.mxu0 0.0
      %1430 = vmatpush1.msra.mxu0 %v580
      %1431 = vmatprep.subr.mxu0 0.0
      %1432 = vmatpush1.msra.mxu0 %v581
      %1433 = vmatprep.subr.mxu0 0.0
      %1434 = vmatpush1.msra.mxu0 %v582
      %1435 = vmatprep.subr.mxu0 0.0
      %1436 = vmatpush1.msra.mxu0 %v583
      %1437 = vmatprep.subr.mxu0 0.0
      %1438 = vmatpush1.msra.mxu0 %v584
      %1439 = vmatprep.subr.mxu0 0.0
      %1440 = vmatpush1.msra.mxu0 %v585
      %1441 = vmatprep.subr.mxu0 0.0
      %1442 = vmatpush1.msra.mxu0 %v586
      %1443 = vmatprep.subr.mxu0 0.0
      %1444 = vmatpush1.msra.mxu0 %v587
      %1445 = vmatprep.subr.mxu0 0.0
      %1446 = vmatpush1.msra.mxu0 %v588
      %1447 = vmatprep.subr.mxu0 0.0
      %1448 = vmatpush1.msra.mxu0 %v589
      %1449 = vmatprep.subr.mxu0 0.0
      %1450 = vmatpush1.msra.mxu0 %v590
      %1451 = vmatprep.subr.mxu0 0.0
      %1452 = vmatpush1.msra.mxu0 %v591
      %1453 = vmatprep.subr.mxu0 0.0
      %1454 = vmatpush1.msra.mxu0 %v592
      %1455 = vmatprep.mubr.f32.mxu0 %v190
      %1456 = vmatmul.mubr.f32.gmra.mrb[0].mxu0 %v189
      %v1457 = vpop.f32.mrb[0].mxu0
      %v1458 = vadd.f32 %v1353, %v1457
      %v1459 = vpop.f32.mrb[0].mxu0
      %1460 = vmatprep.mubr.f32.mxu0 %v214
      %1461 = vmatmul.mubr.f32.gmra.mrb[0].mxu0 %v213
      %v1462 = vpop.f32.mrb[0].mxu0
      %v1463 = vadd.f32 %v1358, %v1462
      %v1464 = vpop.f32.mrb[0].mxu0
      %1465 = vmatprep.mubr.f32.mxu0 %v238
      %1466 = vmatmul.mubr.f32.gmra.mrb[0].mxu0 %v237
      %v1467 = vpop.f32.mrb[0].mxu0
      %v1468 = vadd.f32 %v1363, %v1467
      %v1469 = vpop.f32.mrb[0].mxu0
      %1470 = vmatprep.mubr.f32.mxu0 %v262
      %1471 = vmatmul.mubr.f32.gmra.mrb[0].mxu0 %v261
      %v1472 = vpop.f32.mrb[0].mxu0
      %v1473 = vadd.f32 %v1368, %v1472
      %v1474 = vpop.f32.mrb[0].mxu0
      %1475 = vmatprep.mubr.f32.mxu0 %v286
      %1476 = vmatmul.mubr.f32.gmra.mrb[0].mxu0 %v285
      %v1477 = vpop.f32.mrb[0].mxu0
      %v1478 = vadd.f32 %v1373, %v1477
      %v1479 = vpop.f32.mrb[0].mxu0
      %1480 = vmatprep.mubr.f32.mxu0 %v310
      %1481 = vmatmul.mubr.f32.gmra.mrb[0].mxu0 %v309
      %v1482 = vpop.f32.mrb[0].mxu0
      %v1483 = vadd.f32 %v1378, %v1482
      %v1484 = vpop.f32.mrb[0].mxu0
      %1485 = vmatprep.mubr.f32.mxu0 %v334
      %1486 = vmatmul.mubr.f32.gmra.mrb[0].mxu0 %v333
      %v1487 = vpop.f32.mrb[0].mxu0
      %v1488 = vadd.f32 %v1383, %v1487
      %v1489 = vpop.f32.mrb[0].mxu0
      %1490 = vmatprep.mubr.f32.mxu0 %v358
      %1491 = vmatmul.mubr.f32.gmra.mrb[0].mxu0 %v357
      %v1492 = vpop.f32.mrb[0].mxu0
      %v1493 = vadd.f32 %v1388, %v1492
      %v1494 = vpop.f32.mrb[0].mxu0
      %1495 = vdwg.mxu0
      %1496 = vmatprep.subr.mxu0 0.0
      %1497 = vmatpush1.msra.mxu0 %v593
      %1498 = vmatprep.subr.mxu0 0.0
      %1499 = vmatpush1.msra.mxu0 %v594
      %1500 = vmatprep.subr.mxu0 0.0
      %1501 = vmatpush1.msra.mxu0 %v595
      %1502 = vmatprep.subr.mxu0 0.0
      %1503 = vmatpush1.msra.mxu0 %v596
      %1504 = vmatprep.subr.mxu0 0.0
      %1505 = vmatpush1.msra.mxu0 %v597
      %1506 = vmatprep.subr.mxu0 0.0
      %1507 = vmatpush1.msra.mxu0 %v598
      %1508 = vmatprep.subr.mxu0 0.0
      %1509 = vmatpush1.msra.mxu0 %v599
      %1510 = vmatprep.subr.mxu0 0.0
      %1511 = vmatpush1.msra.mxu0 %v600
      %1512 = vmatprep.subr.mxu0 0.0
      %1513 = vmatpush1.msra.mxu0 %v601
      %1514 = vmatprep.subr.mxu0 0.0
      %1515 = vmatpush1.msra.mxu0 %v602
      %1516 = vmatprep.subr.mxu0 0.0
      %1517 = vmatpush1.msra.mxu0 %v603
      %1518 = vmatprep.subr.mxu0 0.0
      %1519 = vmatpush1.msra.mxu0 %v604
      %1520 = vmatprep.subr.mxu0 0.0
      %1521 = vmatpush1.msra.mxu0 %v605
      %1522 = vmatprep.subr.mxu0 0.0
      %1523 = vmatpush1.msra.mxu0 %v606
      %1524 = vmatprep.subr.mxu0 0.0
      %1525 = vmatpush1.msra.mxu0 %v607
      %1526 = vmatprep.subr.mxu0 0.0
      %1527 = vmatpush1.msra.mxu0 %v608
      %1528 = vmatprep.subr.mxu0 0.0
      %1529 = vmatpush1.msra.mxu0 %v609
      %1530 = vmatprep.subr.mxu0 0.0
      %1531 = vmatpush1.msra.mxu0 %v610
      %1532 = vmatprep.subr.mxu0 0.0
      %1533 = vmatpush1.msra.mxu0 %v611
      %1534 = vmatprep.subr.mxu0 0.0
      %1535 = vmatpush1.msra.mxu0 %v612
      %1536 = vmatprep.subr.mxu0 0.0
      %1537 = vmatpush1.msra.mxu0 %v613
      %1538 = vmatprep.subr.mxu0 0.0
      %1539 = vmatpush1.msra.mxu0 %v614
      %1540 = vmatprep.subr.mxu0 0.0
      %1541 = vmatpush1.msra.mxu0 %v615
      %1542 = vmatprep.subr.mxu0 0.0
      %1543 = vmatpush1.msra.mxu0 %v616
      %1544 = vmatprep.subr.mxu0 0.0
      %1545 = vmatpush1.msra.mxu0 %v617
      %1546 = vmatprep.subr.mxu0 0.0
      %1547 = vmatpush1.msra.mxu0 %v618
      %1548 = vmatprep.subr.mxu0 0.0
      %1549 = vmatpush1.msra.mxu0 %v619
      %1550 = vmatprep.subr.mxu0 0.0
      %1551 = vmatpush1.msra.mxu0 %v620
      %1552 = vmatprep.subr.mxu0 0.0
      %1553 = vmatpush1.msra.mxu0 %v621
      %1554 = vmatprep.subr.mxu0 0.0
      %1555 = vmatpush1.msra.mxu0 %v622
      %1556 = vmatprep.subr.mxu0 0.0
      %1557 = vmatpush1.msra.mxu0 %v623
      %1558 = vmatprep.subr.mxu0 0.0
      %1559 = vmatpush1.msra.mxu0 %v624
      %1560 = vmatprep.mubr.f32.mxu0 %v192
      %1561 = vmatmul.mubr.f32.gmra.mrb[0].mxu0 %v191
      %v1562 = vpop.f32.mrb[0].mxu0
      %v1563 = vadd.f32 %v1458, %v1562
      %v1564 = vpop.f32.mrb[0].mxu0
      %1565 = vmatprep.mubr.f32.mxu0 %v216
      %1566 = vmatmul.mubr.f32.gmra.mrb[0].mxu0 %v215
      %v1567 = vpop.f32.mrb[0].mxu0
      %v1568 = vadd.f32 %v1463, %v1567
      %v1569 = vpop.f32.mrb[0].mxu0
      %1570 = vmatprep.mubr.f32.mxu0 %v240
      %1571 = vmatmul.mubr.f32.gmra.mrb[0].mxu0 %v239
      %v1572 = vpop.f32.mrb[0].mxu0
      %v1573 = vadd.f32 %v1468, %v1572
      %v1574 = vpop.f32.mrb[0].mxu0
      %1575 = vmatprep.mubr.f32.mxu0 %v264
      %1576 = vmatmul.mubr.f32.gmra.mrb[0].mxu0 %v263
      %v1577 = vpop.f32.mrb[0].mxu0
      %v1578 = vadd.f32 %v1473, %v1577
      %v1579 = vpop.f32.mrb[0].mxu0
      %1580 = vmatprep.mubr.f32.mxu0 %v288
      %1581 = vmatmul.mubr.f32.gmra.mrb[0].mxu0 %v287
      %v1582 = vpop.f32.mrb[0].mxu0
      %v1583 = vadd.f32 %v1478, %v1582
      %v1584 = vpop.f32.mrb[0].mxu0
      %1585 = vmatprep.mubr.f32.mxu0 %v312
      %1586 = vmatmul.mubr.f32.gmra.mrb[0].mxu0 %v311
      %v1587 = vpop.f32.mrb[0].mxu0
      %v1588 = vadd.f32 %v1483, %v1587
      %v1589 = vpop.f32.mrb[0].mxu0
      %1590 = vmatprep.mubr.f32.mxu0 %v336
      %1591 = vmatmul.mubr.f32.gmra.mrb[0].mxu0 %v335
      %v1592 = vpop.f32.mrb[0].mxu0
      %v1593 = vadd.f32 %v1488, %v1592
      %v1594 = vpop.f32.mrb[0].mxu0
      %1595 = vmatprep.mubr.f32.mxu0 %v360
      %1596 = vmatmul.mubr.f32.gmra.mrb[0].mxu0 %v359
      %v1597 = vpop.f32.mrb[0].mxu0
      %v1598 = vadd.f32 %v1493, %v1597
      %v1599 = vpop.f32.mrb[0].mxu0
      %1600 = vdwg.mxu0
      %1601 = vmatprep.subr.mxu0 0.0
      %1602 = vmatpush1.msra.mxu0 %v625
      %1603 = vmatprep.subr.mxu0 0.0
      %1604 = vmatpush1.msra.mxu0 %v626
      %1605 = vmatprep.subr.mxu0 0.0
      %1606 = vmatpush1.msra.mxu0 %v627
      %1607 = vmatprep.subr.mxu0 0.0
      %1608 = vmatpush1.msra.mxu0 %v628
      %1609 = vmatprep.subr.mxu0 0.0
      %1610 = vmatpush1.msra.mxu0 %v629
      %1611 = vmatprep.subr.mxu0 0.0
      %1612 = vmatpush1.msra.mxu0 %v630
      %1613 = vmatprep.subr.mxu0 0.0
      %1614 = vmatpush1.msra.mxu0 %v631
      %1615 = vmatprep.subr.mxu0 0.0
      %1616 = vmatpush1.msra.mxu0 %v632
      %1617 = vmatprep.subr.mxu0 0.0
      %1618 = vmatpush1.msra.mxu0 %v633
      %1619 = vmatprep.subr.mxu0 0.0
      %1620 = vmatpush1.msra.mxu0 %v634
      %1621 = vmatprep.subr.mxu0 0.0
      %1622 = vmatpush1.msra.mxu0 %v635
      %1623 = vmatprep.subr.mxu0 0.0
      %1624 = vmatpush1.msra.mxu0 %v636
      %1625 = vmatprep.subr.mxu0 0.0
      %1626 = vmatpush1.msra.mxu0 %v637
      %1627 = vmatprep.subr.mxu0 0.0
      %1628 = vmatpush1.msra.mxu0 %v638
      %1629 = vmatprep.subr.mxu0 0.0
      %1630 = vmatpush1.msra.mxu0 %v639
      %1631 = vmatprep.subr.mxu0 0.0
      %1632 = vmatpush1.msra.mxu0 %v640
      %1633 = vmatprep.subr.mxu0 0.0
      %1634 = vmatpush1.msra.mxu0 %v641
      %1635 = vmatprep.subr.mxu0 0.0
      %1636 = vmatpush1.msra.mxu0 %v642
      %1637 = vmatprep.subr.mxu0 0.0
      %1638 = vmatpush1.msra.mxu0 %v643
      %1639 = vmatprep.subr.mxu0 0.0
      %1640 = vmatpush1.msra.mxu0 %v644
      %1641 = vmatprep.subr.mxu0 0.0
      %1642 = vmatpush1.msra.mxu0 %v645
      %1643 = vmatprep.subr.mxu0 0.0
      %1644 = vmatpush1.msra.mxu0 %v646
      %1645 = vmatprep.subr.mxu0 0.0
      %1646 = vmatpush1.msra.mxu0 %v647
      %1647 = vmatprep.subr.mxu0 0.0
      %1648 = vmatpush1.msra.mxu0 %v648
      %1649 = vmatprep.subr.mxu0 0.0
      %1650 = vmatpush1.msra.mxu0 %v649
      %1651 = vmatprep.subr.mxu0 0.0
      %1652 = vmatpush1.msra.mxu0 %v650
      %1653 = vmatprep.subr.mxu0 0.0
      %1654 = vmatpush1.msra.mxu0 %v651
      %1655 = vmatprep.subr.mxu0 0.0
      %1656 = vmatpush1.msra.mxu0 %v652
      %1657 = vmatprep.subr.mxu0 0.0
      %1658 = vmatpush1.msra.mxu0 %v653
      %1659 = vmatprep.subr.mxu0 0.0
      %1660 = vmatpush1.msra.mxu0 %v654
      %1661 = vmatprep.subr.mxu0 0.0
      %1662 = vmatpush1.msra.mxu0 %v655
      %1663 = vmatprep.subr.mxu0 0.0
      %1664 = vmatpush1.msra.mxu0 %v656
      %1665 = vmatprep.mubr.f32.mxu0 %v194
      %1666 = vmatmul.mubr.f32.gmra.mrb[0].mxu0 %v193
      %v1667 = vpop.f32.mrb[0].mxu0
      %v1668 = vadd.f32 %v1563, %v1667
      %v1669 = vpop.f32.mrb[0].mxu0
      %1670 = vmatprep.mubr.f32.mxu0 %v218
      %1671 = vmatmul.mubr.f32.gmra.mrb[0].mxu0 %v217
      %v1672 = vpop.f32.mrb[0].mxu0
      %v1673 = vadd.f32 %v1568, %v1672
      %v1674 = vpop.f32.mrb[0].mxu0
      %1675 = vmatprep.mubr.f32.mxu0 %v242
      %1676 = vmatmul.mubr.f32.gmra.mrb[0].mxu0 %v241
      %v1677 = vpop.f32.mrb[0].mxu0
      %v1678 = vadd.f32 %v1573, %v1677
      %v1679 = vpop.f32.mrb[0].mxu0
      %1680 = vmatprep.mubr.f32.mxu0 %v266
      %1681 = vmatmul.mubr.f32.gmra.mrb[0].mxu0 %v265
      %v1682 = vpop.f32.mrb[0].mxu0
      %v1683 = vadd.f32 %v1578, %v1682
      %v1684 = vpop.f32.mrb[0].mxu0
      %1685 = vmatprep.mubr.f32.mxu0 %v290
      %1686 = vmatmul.mubr.f32.gmra.mrb[0].mxu0 %v289
      %v1687 = vpop.f32.mrb[0].mxu0
      %v1688 = vadd.f32 %v1583, %v1687
      %v1689 = vpop.f32.mrb[0].mxu0
      %1690 = vmatprep.mubr.f32.mxu0 %v314
      %1691 = vmatmul.mubr.f32.gmra.mrb[0].mxu0 %v313
      %v1692 = vpop.f32.mrb[0].mxu0
      %v1693 = vadd.f32 %v1588, %v1692
      %v1694 = vpop.f32.mrb[0].mxu0
      %1695 = vmatprep.mubr.f32.mxu0 %v338
      %1696 = vmatmul.mubr.f32.gmra.mrb[0].mxu0 %v337
      %v1697 = vpop.f32.mrb[0].mxu0
      %v1698 = vadd.f32 %v1593, %v1697
      %v1699 = vpop.f32.mrb[0].mxu0
      %1700 = vmatprep.mubr.f32.mxu0 %v362
      %1701 = vmatmul.mubr.f32.gmra.mrb[0].mxu0 %v361
      %v1702 = vpop.f32.mrb[0].mxu0
      %v1703 = vadd.f32 %v1598, %v1702
      %v1704 = vpop.f32.mrb[0].mxu0
      %1705 = vdwg.mxu0
      %1706 = vmatprep.subr.mxu0 0.0
      %1707 = vmatpush1.msra.mxu0 %v657
      %1708 = vmatprep.subr.mxu0 0.0
      %1709 = vmatpush1.msra.mxu0 %v658
      %1710 = vmatprep.subr.mxu0 0.0
      %1711 = vmatpush1.msra.mxu0 %v659
      %1712 = vmatprep.subr.mxu0 0.0
      %1713 = vmatpush1.msra.mxu0 %v660
      %1714 = vmatprep.subr.mxu0 0.0
      %1715 = vmatpush1.msra.mxu0 %v661
      %1716 = vmatprep.subr.mxu0 0.0
      %1717 = vmatpush1.msra.mxu0 %v662
      %1718 = vmatprep.subr.mxu0 0.0
      %1719 = vmatpush1.msra.mxu0 %v663
      %1720 = vmatprep.subr.mxu0 0.0
      %1721 = vmatpush1.msra.mxu0 %v664
      %1722 = vmatprep.subr.mxu0 0.0
      %1723 = vmatpush1.msra.mxu0 %v665
      %1724 = vmatprep.subr.mxu0 0.0
      %1725 = vmatpush1.msra.mxu0 %v666
      %1726 = vmatprep.subr.mxu0 0.0
      %1727 = vmatpush1.msra.mxu0 %v667
      %1728 = vmatprep.subr.mxu0 0.0
      %1729 = vmatpush1.msra.mxu0 %v668
      %1730 = vmatprep.subr.mxu0 0.0
      %1731 = vmatpush1.msra.mxu0 %v669
      %1732 = vmatprep.subr.mxu0 0.0
      %1733 = vmatpush1.msra.mxu0 %v670
      %1734 = vmatprep.subr.mxu0 0.0
      %1735 = vmatpush1.msra.mxu0 %v671
      %1736 = vmatprep.subr.mxu0 0.0
      %1737 = vmatpush1.msra.mxu0 %v672
      %1738 = vmatprep.subr.mxu0 0.0
      %1739 = vmatpush1.msra.mxu0 %v673
      %1740 = vmatprep.subr.mxu0 0.0
      %1741 = vmatpush1.msra.mxu0 %v674
      %1742 = vmatprep.subr.mxu0 0.0
      %1743 = vmatpush1.msra.mxu0 %v675
      %1744 = vmatprep.subr.mxu0 0.0
      %1745 = vmatpush1.msra.mxu0 %v676
      %1746 = vmatprep.subr.mxu0 0.0
      %1747 = vmatpush1.msra.mxu0 %v677
      %1748 = vmatprep.subr.mxu0 0.0
      %1749 = vmatpush1.msra.mxu0 %v678
      %1750 = vmatprep.subr.mxu0 0.0
      %1751 = vmatpush1.msra.mxu0 %v679
      %1752 = vmatprep.subr.mxu0 0.0
      %1753 = vmatpush1.msra.mxu0 %v680
      %1754 = vmatprep.subr.mxu0 0.0
      %1755 = vmatpush1.msra.mxu0 %v681
      %1756 = vmatprep.subr.mxu0 0.0
      %1757 = vmatpush1.msra.mxu0 %v682
      %1758 = vmatprep.subr.mxu0 0.0
      %1759 = vmatpush1.msra.mxu0 %v683
      %1760 = vmatprep.subr.mxu0 0.0
      %1761 = vmatpush1.msra.mxu0 %v684
      %1762 = vmatprep.subr.mxu0 0.0
      %1763 = vmatpush1.msra.mxu0 %v685
      %1764 = vmatprep.subr.mxu0 0.0
      %1765 = vmatpush1.msra.mxu0 %v686
      %1766 = vmatprep.subr.mxu0 0.0
      %1767 = vmatpush1.msra.mxu0 %v687
      %1768 = vmatprep.subr.mxu0 0.0
      %1769 = vmatpush1.msra.mxu0 %v688
      %1770 = vmatprep.mubr.f32.mxu0 %v196
      %1771 = vmatmul.mubr.f32.gmra.mrb[0].mxu0 %v195
      %v1772 = vpop.f32.mrb[0].mxu0
      %v1773 = vadd.f32 %v1668, %v1772
      %v1774 = vpop.f32.mrb[0].mxu0
      %1775 = vmatprep.mubr.f32.mxu0 %v220
      %1776 = vmatmul.mubr.f32.gmra.mrb[0].mxu0 %v219
      %v1777 = vpop.f32.mrb[0].mxu0
      %v1778 = vadd.f32 %v1673, %v1777
      %v1779 = vpop.f32.mrb[0].mxu0
      %1780 = vmatprep.mubr.f32.mxu0 %v244
      %1781 = vmatmul.mubr.f32.gmra.mrb[0].mxu0 %v243
      %v1782 = vpop.f32.mrb[0].mxu0
      %v1783 = vadd.f32 %v1678, %v1782
      %v1784 = vpop.f32.mrb[0].mxu0
      %1785 = vmatprep.mubr.f32.mxu0 %v268
      %1786 = vmatmul.mubr.f32.gmra.mrb[0].mxu0 %v267
      %v1787 = vpop.f32.mrb[0].mxu0
      %v1788 = vadd.f32 %v1683, %v1787
      %v1789 = vpop.f32.mrb[0].mxu0
      %1790 = vmatprep.mubr.f32.mxu0 %v292
      %1791 = vmatmul.mubr.f32.gmra.mrb[0].mxu0 %v291
      %v1792 = vpop.f32.mrb[0].mxu0
      %v1793 = vadd.f32 %v1688, %v1792
      %v1794 = vpop.f32.mrb[0].mxu0
      %1795 = vmatprep.mubr.f32.mxu0 %v316
      %1796 = vmatmul.mubr.f32.gmra.mrb[0].mxu0 %v315
      %v1797 = vpop.f32.mrb[0].mxu0
      %v1798 = vadd.f32 %v1693, %v1797
      %v1799 = vpop.f32.mrb[0].mxu0
      %1800 = vmatprep.mubr.f32.mxu0 %v340
      %1801 = vmatmul.mubr.f32.gmra.mrb[0].mxu0 %v339
      %v1802 = vpop.f32.mrb[0].mxu0
      %v1803 = vadd.f32 %v1698, %v1802
      %v1804 = vpop.f32.mrb[0].mxu0
      %1805 = vmatprep.mubr.f32.mxu0 %v364
      %1806 = vmatmul.mubr.f32.gmra.mrb[0].mxu0 %v363
      %v1807 = vpop.f32.mrb[0].mxu0
      %v1808 = vadd.f32 %v1703, %v1807
      %v1809 = vpop.f32.mrb[0].mxu0
      %1810 = vdwg.mxu0
      %1811 = vmatprep.subr.mxu0 0.0
      %1812 = vmatpush1.msra.mxu0 %v689
      %1813 = vmatprep.subr.mxu0 0.0
      %1814 = vmatpush1.msra.mxu0 %v690
      %1815 = vmatprep.subr.mxu0 0.0
      %1816 = vmatpush1.msra.mxu0 %v691
      %1817 = vmatprep.subr.mxu0 0.0
      %1818 = vmatpush1.msra.mxu0 %v692
      %1819 = vmatprep.subr.mxu0 0.0
      %1820 = vmatpush1.msra.mxu0 %v693
      %1821 = vmatprep.subr.mxu0 0.0
      %1822 = vmatpush1.msra.mxu0 %v694
      %1823 = vmatprep.subr.mxu0 0.0
      %1824 = vmatpush1.msra.mxu0 %v695
      %1825 = vmatprep.subr.mxu0 0.0
      %1826 = vmatpush1.msra.mxu0 %v696
      %1827 = vmatprep.subr.mxu0 0.0
      %1828 = vmatpush1.msra.mxu0 %v697
      %1829 = vmatprep.subr.mxu0 0.0
      %1830 = vmatpush1.msra.mxu0 %v698
      %1831 = vmatprep.subr.mxu0 0.0
      %1832 = vmatpush1.msra.mxu0 %v699
      %1833 = vmatprep.subr.mxu0 0.0
      %1834 = vmatpush1.msra.mxu0 %v700
      %1835 = vmatprep.subr.mxu0 0.0
      %1836 = vmatpush1.msra.mxu0 %v701
      %1837 = vmatprep.subr.mxu0 0.0
      %1838 = vmatpush1.msra.mxu0 %v702
      %1839 = vmatprep.subr.mxu0 0.0
      %1840 = vmatpush1.msra.mxu0 %v703
      %1841 = vmatprep.subr.mxu0 0.0
      %1842 = vmatpush1.msra.mxu0 %v704
      %1843 = vmatprep.subr.mxu0 0.0
      %1844 = vmatpush1.msra.mxu0 %v705
      %1845 = vmatprep.subr.mxu0 0.0
      %1846 = vmatpush1.msra.mxu0 %v706
      %1847 = vmatprep.subr.mxu0 0.0
      %1848 = vmatpush1.msra.mxu0 %v707
      %1849 = vmatprep.subr.mxu0 0.0
      %1850 = vmatpush1.msra.mxu0 %v708
      %1851 = vmatprep.subr.mxu0 0.0
      %1852 = vmatpush1.msra.mxu0 %v709
      %1853 = vmatprep.subr.mxu0 0.0
      %1854 = vmatpush1.msra.mxu0 %v710
      %1855 = vmatprep.subr.mxu0 0.0
      %1856 = vmatpush1.msra.mxu0 %v711
      %1857 = vmatprep.subr.mxu0 0.0
      %1858 = vmatpush1.msra.mxu0 %v712
      %1859 = vmatprep.subr.mxu0 0.0
      %1860 = vmatpush1.msra.mxu0 %v713
      %1861 = vmatprep.subr.mxu0 0.0
      %1862 = vmatpush1.msra.mxu0 %v714
      %1863 = vmatprep.subr.mxu0 0.0
      %1864 = vmatpush1.msra.mxu0 %v715
      %1865 = vmatprep.subr.mxu0 0.0
      %1866 = vmatpush1.msra.mxu0 %v716
      %1867 = vmatprep.subr.mxu0 0.0
      %1868 = vmatpush1.msra.mxu0 %v717
      %1869 = vmatprep.subr.mxu0 0.0
      %1870 = vmatpush1.msra.mxu0 %v718
      %1871 = vmatprep.subr.mxu0 0.0
      %1872 = vmatpush1.msra.mxu0 %v719
      %1873 = vmatprep.subr.mxu0 0.0
      %1874 = vmatpush1.msra.mxu0 %v720
      %1875 = vmatprep.mubr.f32.mxu0 %v198
      %1876 = vmatmul.mubr.f32.gmra.mrb[0].mxu0 %v197
      %v1877 = vpop.f32.mrb[0].mxu0
      %v1878 = vadd.f32 %v1773, %v1877
      %v1879 = vpop.f32.mrb[0].mxu0
      %1880 = vmatprep.mubr.f32.mxu0 %v222
      %1881 = vmatmul.mubr.f32.gmra.mrb[0].mxu0 %v221
      %v1882 = vpop.f32.mrb[0].mxu0
      %v1883 = vadd.f32 %v1778, %v1882
      %v1884 = vpop.f32.mrb[0].mxu0
      %1885 = vmatprep.mubr.f32.mxu0 %v246
      %1886 = vmatmul.mubr.f32.gmra.mrb[0].mxu0 %v245
      %v1887 = vpop.f32.mrb[0].mxu0
      %v1888 = vadd.f32 %v1783, %v1887
      %v1889 = vpop.f32.mrb[0].mxu0
      %1890 = vmatprep.mubr.f32.mxu0 %v270
      %1891 = vmatmul.mubr.f32.gmra.mrb[0].mxu0 %v269
      %v1892 = vpop.f32.mrb[0].mxu0
      %v1893 = vadd.f32 %v1788, %v1892
      %v1894 = vpop.f32.mrb[0].mxu0
      %1895 = vmatprep.mubr.f32.mxu0 %v294
      %1896 = vmatmul.mubr.f32.gmra.mrb[0].mxu0 %v293
      %v1897 = vpop.f32.mrb[0].mxu0
      %v1898 = vadd.f32 %v1793, %v1897
      %v1899 = vpop.f32.mrb[0].mxu0
      %1900 = vmatprep.mubr.f32.mxu0 %v318
      %1901 = vmatmul.mubr.f32.gmra.mrb[0].mxu0 %v317
      %v1902 = vpop.f32.mrb[0].mxu0
      %v1903 = vadd.f32 %v1798, %v1902
      %v1904 = vpop.f32.mrb[0].mxu0
      %1905 = vmatprep.mubr.f32.mxu0 %v342
      %1906 = vmatmul.mubr.f32.gmra.mrb[0].mxu0 %v341
      %v1907 = vpop.f32.mrb[0].mxu0
      %v1908 = vadd.f32 %v1803, %v1907
      %v1909 = vpop.f32.mrb[0].mxu0
      %1910 = vmatprep.mubr.f32.mxu0 %v366
      %1911 = vmatmul.mubr.f32.gmra.mrb[0].mxu0 %v365
      %v1912 = vpop.f32.mrb[0].mxu0
      %v1913 = vadd.f32 %v1808, %v1912
      %v1914 = vpop.f32.mrb[0].mxu0
      %1915 = vdwg.mxu0
      %1916 = vmatprep.subr.mxu0 0.0
      %1917 = vmatpush1.msra.mxu0 %v721
      %1918 = vmatprep.subr.mxu0 0.0
      %1919 = vmatpush1.msra.mxu0 %v722
      %1920 = vmatprep.subr.mxu0 0.0
      %1921 = vmatpush1.msra.mxu0 %v723
      %1922 = vmatprep.subr.mxu0 0.0
      %1923 = vmatpush1.msra.mxu0 %v724
      %1924 = vmatprep.subr.mxu0 0.0
      %1925 = vmatpush1.msra.mxu0 %v725
      %1926 = vmatprep.subr.mxu0 0.0
      %1927 = vmatpush1.msra.mxu0 %v726
      %1928 = vmatprep.subr.mxu0 0.0
      %1929 = vmatpush1.msra.mxu0 %v727
      %1930 = vmatprep.subr.mxu0 0.0
      %1931 = vmatpush1.msra.mxu0 %v728
      %1932 = vmatprep.subr.mxu0 0.0
      %1933 = vmatpush1.msra.mxu0 %v729
      %1934 = vmatprep.subr.mxu0 0.0
      %1935 = vmatpush1.msra.mxu0 %v730
      %1936 = vmatprep.subr.mxu0 0.0
      %1937 = vmatpush1.msra.mxu0 %v731
      %1938 = vmatprep.subr.mxu0 0.0
      %1939 = vmatpush1.msra.mxu0 %v732
      %1940 = vmatprep.subr.mxu0 0.0
      %1941 = vmatpush1.msra.mxu0 %v733
      %1942 = vmatprep.subr.mxu0 0.0
      %1943 = vmatpush1.msra.mxu0 %v734
      %1944 = vmatprep.subr.mxu0 0.0
      %1945 = vmatpush1.msra.mxu0 %v735
      %1946 = vmatprep.subr.mxu0 0.0
      %1947 = vmatpush1.msra.mxu0 %v736
      %1948 = vmatprep.subr.mxu0 0.0
      %1949 = vmatpush1.msra.mxu0 %v737
      %1950 = vmatprep.subr.mxu0 0.0
      %1951 = vmatpush1.msra.mxu0 %v738
      %1952 = vmatprep.subr.mxu0 0.0
      %1953 = vmatpush1.msra.mxu0 %v739
      %1954 = vmatprep.subr.mxu0 0.0
      %1955 = vmatpush1.msra.mxu0 %v740
      %1956 = vmatprep.subr.mxu0 0.0
      %1957 = vmatpush1.msra.mxu0 %v741
      %1958 = vmatprep.subr.mxu0 0.0
      %1959 = vmatpush1.msra.mxu0 %v742
      %1960 = vmatprep.subr.mxu0 0.0
      %1961 = vmatpush1.msra.mxu0 %v743
      %1962 = vmatprep.subr.mxu0 0.0
      %1963 = vmatpush1.msra.mxu0 %v744
      %1964 = vmatprep.subr.mxu0 0.0
      %1965 = vmatpush1.msra.mxu0 %v745
      %1966 = vmatprep.subr.mxu0 0.0
      %1967 = vmatpush1.msra.mxu0 %v746
      %1968 = vmatprep.subr.mxu0 0.0
      %1969 = vmatpush1.msra.mxu0 %v747
      %1970 = vmatprep.subr.mxu0 0.0
      %1971 = vmatpush1.msra.mxu0 %v748
      %1972 = vmatprep.subr.mxu0 0.0
      %1973 = vmatpush1.msra.mxu0 %v749
      %1974 = vmatprep.subr.mxu0 0.0
      %1975 = vmatpush1.msra.mxu0 %v750
      %1976 = vmatprep.subr.mxu0 0.0
      %1977 = vmatpush1.msra.mxu0 %v751
      %1978 = vmatprep.subr.mxu0 0.0
      %1979 = vmatpush1.msra.mxu0 %v752
      %1980 = vmatprep.mubr.f32.mxu0 %v200
      %1981 = vmatmul.mubr.f32.gmra.mrb[0].mxu0 %v199
      %v1982 = vpop.f32.mrb[0].mxu0
      %v1983 = vadd.f32 %v1878, %v1982
      %v1984 = vpop.f32.mrb[0].mxu0
      %1985 = vmatprep.mubr.f32.mxu0 %v224
      %1986 = vmatmul.mubr.f32.gmra.mrb[0].mxu0 %v223
      %v1987 = vpop.f32.mrb[0].mxu0
      %v1988 = vadd.f32 %v1883, %v1987
      %v1989 = vpop.f32.mrb[0].mxu0
      %1990 = vmatprep.mubr.f32.mxu0 %v248
      %1991 = vmatmul.mubr.f32.gmra.mrb[0].mxu0 %v247
      %v1992 = vpop.f32.mrb[0].mxu0
      %v1993 = vadd.f32 %v1888, %v1992
      %v1994 = vpop.f32.mrb[0].mxu0
      %1995 = vmatprep.mubr.f32.mxu0 %v272
      %1996 = vmatmul.mubr.f32.gmra.mrb[0].mxu0 %v271
      %v1997 = vpop.f32.mrb[0].mxu0
      %v1998 = vadd.f32 %v1893, %v1997
      %v1999 = vpop.f32.mrb[0].mxu0
      %2000 = vmatprep.mubr.f32.mxu0 %v296
      %2001 = vmatmul.mubr.f32.gmra.mrb[0].mxu0 %v295
      %v2002 = vpop.f32.mrb[0].mxu0
      %v2003 = vadd.f32 %v1898, %v2002
      %v2004 = vpop.f32.mrb[0].mxu0
      %2005 = vmatprep.mubr.f32.mxu0 %v320
      %2006 = vmatmul.mubr.f32.gmra.mrb[0].mxu0 %v319
      %v2007 = vpop.f32.mrb[0].mxu0
      %v2008 = vadd.f32 %v1903, %v2007
      %v2009 = vpop.f32.mrb[0].mxu0
      %2010 = vmatprep.mubr.f32.mxu0 %v344
      %2011 = vmatmul.mubr.f32.gmra.mrb[0].mxu0 %v343
      %v2012 = vpop.f32.mrb[0].mxu0
      %v2013 = vadd.f32 %v1908, %v2012
      %v2014 = vpop.f32.mrb[0].mxu0
      %2015 = vmatprep.mubr.f32.mxu0 %v368
      %2016 = vmatmul.mubr.f32.gmra.mrb[0].mxu0 %v367
      %v2017 = vpop.f32.mrb[0].mxu0
      %v2018 = vadd.f32 %v1913, %v2017
      %v2019 = vpop.f32.mrb[0].mxu0
      %2020 = vdwg.mxu0
      %vm2021 = vcmask 64512
      %2022 = vst.msk [vmem:[%s175] sm:$0xff] %vm2021, %v1983
      %2023 = vst.msk [vmem:[%s175 + $0x8] sm:$0xff] %vm2021, %v1988
      %2024 = vst.msk [vmem:[%s175 + $0x10] sm:$0xff] %vm2021, %v1993
      %2025 = vst.msk [vmem:[%s175 + $0x18] sm:$0xff] %vm2021, %v1998
      %2026 = vst.msk [vmem:[%s175 + $0x20] sm:$0xff] %vm2021, %v2003
      %2027 = vst.msk [vmem:[%s175 + $0x28] sm:$0xff] %vm2021, %v2008
      %2028 = vst.msk [vmem:[%s175 + $0x30] sm:$0xff] %vm2021, %v2013
      %2029 = vst.msk [vmem:[%s175 + $0x38] sm:$0xff] %vm2021, %v2018
      %s2030 = smul.u32 8, %s14
      %p2031 = scmp.lt.s32.totalorder %s2030, 15
      %s2032 = scalar_select %p2031, %s2030, 15
      %s2033 = smul.addr %s2032, 8
      %s2034 = scalar_lea.vmem %s3, %s2033
      // Predicated region
      $region33: #{model_forward.3} parent=31 // pred_check
        %p2035 = pneg %p100
      $region34: #{model_forward.3} parent=31 // pred_check_branch
        %2037 = sbr.rel (%p2035) target = $region36
      $region35: #{model_forward.3} parent=31 // pred_region
        %s2038 = smul.u32 8, %s14
      $region36: #{model_forward.3} parent=31 // pred_fallthru
        _
    $region32: #{model_forward.3} parent=5 // pred_fallthru
      _
    %p2039 = scmp.le.s32.totalorder 2, %s9
    // Predicated region
    $region37: #{model_forward.3} parent=5 // pred_check
      %p2040 = pneg %p2039
    $region38: #{model_forward.3} parent=5 // pred_check_branch
      %2042 = sbr.rel (%p2040) target = $region40
    $region39: #{model_forward.3} parent=5 // pred_region
      %s2043 = ssub.s32 %s9, 2
      // Predicated region
      $region41: #{model_forward.3} parent=39 // pred_check
        %p2044 = pneg %p106
      $region42: #{model_forward.3} parent=39 // pred_check_branch
        %2046 = sbr.rel (%p2044) target = $region44
      $region43: #{model_forward.3} parent=39 // pred_region
        %s2047 = smul.u32 8, %s15
        %p2048 = scmp.lt.s32.totalorder %s2047, 15
        %s2049 = scalar_select %p2048, %s2047, 15
        %s2050 = smul.addr %s2049, 8
        %s2051 = scalar_lea.vmem %s3, %s2050
      $region44: #{model_forward.3} parent=39 // pred_fallthru
        _
    $region40: #{model_forward.3} parent=5 // pred_fallthru
      _
  $region6: #{model_forward.3} parent=0 // loop_footer
    %s13 = sadd.s32 1, %s9
  $region7: #{model_forward.3} parent=0 // loop_footer_branch
    %8 = sbr.rel target = $region3
  $region8: #{model_forward.3} parent=0 // loop_exit
    _

// kernel: model_forward.5
$region0: #{model_forward.5}
  #allocation0 [shape = 'u32[]', space=smem, size = 0x4, offset = 0x4, fixed_abs, tag = 'smem constant byte address 0x4 - core index']
  #allocation1 [shape = 'u32[144,128]{1,0:T(1,128)}', space=vmem, size = 0x12000, scoped, tag = 'internal scratch']
  %s0 = inlined_call_operand.vmem [shape: f32[2,512], index: 0, kind: input, shape index: {}]
  %s1 = inlined_call_operand.vmem [shape: bf16[512,1024], index: 1, kind: input, shape index: {}]
  %s2 = inlined_call_operand.vmem [shape: f32[1,1024], index: 2, kind: input, shape index: {}]
  %s3 = inlined_call_operand.hbm [shape: f32[2,1024], index: 3, kind: output, shape index: {}]
  %s4 = sld [smem:[#allocation0]]
  $region68: #{model_forward.5} parent=0
    _
  %s6 = ssub.s32 1, %s4
  %s7 = scalar_select 0, %s6, %s4
  $region1: #{model_forward.5} parent=0
    #allocation2 [shape = 'u8[1048576]{0}', space=vmem, size = 0x100000, scoped, tag = 'input window, operand 1']
    #allocation3 [shape = 'u8[8192]{0}', space=vmem, size = 0x2000, scoped, tag = 'output window, operand 0']
    #allocation4 [shape = 's32[2]{0}', space=sflag, size = 0x8, scoped, tag = 'scoped memory for model_forward.5']
    %8 = vsyncpa [#allocation4], 0
    %s9 = scalar_lea.sflag [#allocation4], 1
    %10 = vsyncpa %s9, 0
    loop: start=0, step=1, limit=4
    $region2: #{model_forward.5} parent=1 // loop_pre_header
      _
    $region3: #{model_forward.5} parent=1 // loop_header
      %s12 = sphi 0, %s16
      %p13 = scmp.ge.s32.totalorder %s12, 4
      %s20 = sphi 0, %s20
      %s22 = sphi 0, %s20
      %s23 = sphi 0, %s22
      %s37 = sphi 0, %s23
      %s43 = sphi 0, %s45
      %s46 = sphi 0, %s43
      %s47 = sphi 0, %s46
      %s63 = sphi 0, %s47
      %s69 = sphi 0, %s71
      %s72 = sphi 0, %s69
      %s73 = sphi 0, %s72
      %s89 = sphi 0, %s73
      %s95 = sphi 0, %s97
      %s98 = sphi 0, %s95
      %s99 = sphi 0, %s98
      %s115 = sphi 0, %s99
    $region4: #{model_forward.5} parent=1 // loop_header_branch
      %15 = sbr.rel (%p13) target = $region8
    $region5: #{model_forward.5} parent=1 // loop_body
      %s17 = ssub.s32 %s12, 1
      %s18 = ssub.s32 %s12, 2
      %s19 = sadd.s32 %s12, 1
      %s21 = sadd.s32 %s20, 1
      %p24 = scmp.eq.s32.totalorder %s12, 1
      %p25 = scmp.ne.s32.totalorder %s20, %s22
      %p26 = scmp.eq.s32.totalorder %s12, 0
      %p27 = por %p25, %p26
      %p28 = scmp.ne.s32.totalorder %s20, %s22
      %p29 = scmp.eq.s32.totalorder %s17, 1
      %p30 = por %p28, %p29
      %p31 = scmp.ne.s32.totalorder %s22, %s23
      %p32 = scmp.eq.s32.totalorder %s17, 0
      %p33 = por %p31, %p32
      %p34 = scmp.ne.s32.totalorder %s22, %s23
      %p35 = scmp.eq.s32.totalorder %s18, 1
      %p36 = por %p34, %p35
      %p38 = scmp.ne.s32.totalorder %s23, %s37
      %p39 = scmp.eq.s32.totalorder %s18, 0
      %p40 = por %p38, %p39
      %s41 = ssub.s32 %s12, %s19
      %p42 = scmp.eq.s32.totalorder %s41, 0
      %s44 = sadd.s32 %s43, 1
      %s45 = scalar_select %p42, %s43, %s44
      %p48 = pneg %p42
      %p49 = scmp.eq.s32.totalorder %s12, 1
      %p50 = por %p48, %p49
      %p51 = scmp.ne.s32.totalorder %s43, %s46
      %p52 = scmp.eq.s32.totalorder %s12, 0
      %p53 = por %p51, %p52
      %p54 = scmp.ne.s32.totalorder %s43, %s46
      %p55 = scmp.eq.s32.totalorder %s17, 1
      %p56 = por %p54, %p55
      %p57 = scmp.ne.s32.totalorder %s46, %s47
      %p58 = scmp.eq.s32.totalorder %s17, 0
      %p59 = por %p57, %p58
      %p60 = scmp.ne.s32.totalorder %s46, %s47
      %p61 = scmp.eq.s32.totalorder %s18, 1
      %p62 = por %p60, %p61
      %p64 = scmp.ne.s32.totalorder %s47, %s63
      %p65 = scmp.eq.s32.totalorder %s18, 0
      %p66 = por %p64, %p65
      %s67 = ssub.s32 %s12, %s19
      %p68 = scmp.eq.s32.totalorder %s67, 0
      %s70 = sadd.s32 %s69, 1
      %s71 = scalar_select %p68, %s69, %s70
      %p74 = pneg %p68
      %p75 = scmp.eq.s32.totalorder %s12, 1
      %p76 = por %p74, %p75
      %p77 = scmp.ne.s32.totalorder %s69, %s72
      %p78 = scmp.eq.s32.totalorder %s12, 0
      %p79 = por %p77, %p78
      %p80 = scmp.ne.s32.totalorder %s69, %s72
      %p81 = scmp.eq.s32.totalorder %s17, 1
      %p82 = por %p80, %p81
      %p83 = scmp.ne.s32.totalorder %s72, %s73
      %p84 = scmp.eq.s32.totalorder %s17, 0
      %p85 = por %p83, %p84
      %p86 = scmp.ne.s32.totalorder %s72, %s73
      %p87 = scmp.eq.s32.totalorder %s18, 1
      %p88 = por %p86, %p87
      %p90 = scmp.ne.s32.totalorder %s73, %s89
      %p91 = scmp.eq.s32.totalorder %s18, 0
      %p92 = por %p90, %p91
      %s93 = ssub.s32 %s12, %s19
      %p94 = scmp.eq.s32.totalorder %s93, 0
      %s96 = sadd.s32 %s95, 1
      %s97 = scalar_select %p94, %s95, %s96
      %p100 = pneg %p94
      %p101 = scmp.eq.s32.totalorder %s12, 1
      %p102 = por %p100, %p101
      %p103 = scmp.ne.s32.totalorder %s95, %s98
      %p104 = scmp.eq.s32.totalorder %s12, 0
      %p105 = por %p103, %p104
      %p106 = scmp.ne.s32.totalorder %s95, %s98
      %p107 = scmp.eq.s32.totalorder %s17, 1
      %p108 = por %p106, %p107
      %p109 = scmp.ne.s32.totalorder %s98, %s99
      %p110 = scmp.eq.s32.totalorder %s17, 0
      %p111 = por %p109, %p110
      %p112 = scmp.ne.s32.totalorder %s98, %s99
      %p113 = scmp.eq.s32.totalorder %s18, 1
      %p114 = por %p112, %p113
      %p116 = scmp.ne.s32.totalorder %s99, %s115
      %p117 = scmp.eq.s32.totalorder %s18, 0
      %p118 = por %p116, %p117
      %p119 = scmp.le.s32.totalorder 1, %s12
      %p120 = scmp.lt.s32.totalorder %s12, 3
      %p121 = pnand %p119, %p120
      %p122 = pneg %p121
      // Predicated region
      $region9: #{model_forward.5} parent=5 // pred_check
        _
      $region10: #{model_forward.5} parent=5 // pred_check_branch
        %124 = sbr.rel (%p121) target = $region12
      $region11: #{model_forward.5} parent=5 // pred_region
        %s125 = ssub.s32 %s12, 1
        // Predicated region
        $region13: #{model_forward.5} parent=11 // pred_check
          %p126 = pneg %p33
        $region14: #{model_forward.5} parent=11 // pred_check_branch
          %128 = sbr.rel (%p126) target = $region16
        $region15: #{model_forward.5} parent=11 // pred_region
          _
        $region16: #{model_forward.5} parent=11 // pred_fallthru
          _
      $region12: #{model_forward.5} parent=5 // pred_fallthru
        _
      %p129 = scmp.lt.s32.totalorder %s12, 2
      // Predicated region
      $region17: #{model_forward.5} parent=5 // pred_check
        %p130 = pneg %p129
      $region18: #{model_forward.5} parent=5 // pred_check_branch
        %132 = sbr.rel (%p130) target = $region20
      $region19: #{model_forward.5} parent=5 // pred_region
        // Predicated region
        $region21: #{model_forward.5} parent=19 // pred_check
          %p133 = pneg %p53
        $region22: #{model_forward.5} parent=19 // pred_check_branch
          %135 = sbr.rel (%p133) target = $region24
        $region23: #{model_forward.5} parent=19 // pred_region
          %s136 = sand.u32 %s43, 1
          %s137 = sand.u32 %s43, 1
          %s138 = smul.addr %s137, 1024
          %s139 = scalar_lea.vmem [#allocation2], %s138
          %s140 = smul.u32 4, %s12
          %s141 = smul.addr %s140, 4
          %s142 = scalar_lea.vmem %s1, %s141
          // Predicated region
          $region25: #{model_forward.5} parent=23 // pred_check
            _
          $region26: #{model_forward.5} parent=23 // pred_check_branch
            %144 = sbr.rel (0) target = $region28
          $region27: #{model_forward.5} parent=23 // pred_region
            // Predicated region
            $region29: #{model_forward.5} parent=27 // pred_check
              _
            $region30: #{model_forward.5} parent=27 // pred_check_branch
              %146 = sbr.rel (0) target = $region32
            $region31: #{model_forward.5} parent=27 // pred_region
              loop: start=0, step=1, limit=1
              $region33: #{model_forward.5} parent=31 // loop_pre_header
                _
              $region34: #{model_forward.5} parent=31 // loop_header
                %s148 = sphi 0, %s152
                %p149 = scmp.ge.s32.totalorder %s148, 1
                %s153 = sphi %s142, %s142
                %s154 = sphi %s139, %s139
              $region35: #{model_forward.5} parent=31 // loop_header_branch
                %151 = sbr.rel (%p149) target = $region39
              $region36: #{model_forward.5} parent=31 // loop_body
                %v155 = vld [vmem:[%s153] sm:$0xff]
                %156 = vst [vmem:[%s154] sm:$0xff] %v155
                %v157 = vld [vmem:[%s153 + $0x8] sm:$0xff]
                %158 = vst [vmem:[%s154 + $0x8] sm:$0xff] %v157
                %v159 = vld [vmem:[%s153 + $0x20] sm:$0xff]
                %160 = vst [vmem:[%s154 + $0x10] sm:$0xff] %v159
                %v161 = vld [vmem:[%s153 + $0x28] sm:$0xff]
                %162 = vst [vmem:[%s154 + $0x18] sm:$0xff] %v161
                %v163 = vld [vmem:[%s153 + $0x40] sm:$0xff]
                %164 = vst [vmem:[%s154 + $0x20] sm:$0xff] %v163
                %v165 = vld [vmem:[%s153 + $0x48] sm:$0xff]
                %166 = vst [vmem:[%s154 + $0x28] sm:$0xff] %v165
                %v167 = vld [vmem:[%s153 + $0x60] sm:$0xff]
                %168 = vst [vmem:[%s154 + $0x30] sm:$0xff] %v167
                %v169 = vld [vmem:[%s153 + $0x68] sm:$0xff]
                %170 = vst [vmem:[%s154 + $0x38] sm:$0xff] %v169
                %v171 = vld [vmem:[%s153 + $0x80] sm:$0xff]
                %172 = vst [vmem:[%s154 + $0x40] sm:$0xff] %v171
                %v173 = vld [vmem:[%s153 + $0x88] sm:$0xff]
                %174 = vst [vmem:[%s154 + $0x48] sm:$0xff] %v173
                %v175 = vld [vmem:[%s153 + $0xa0] sm:$0xff]
                %176 = vst [vmem:[%s154 + $0x50] sm:$0xff] %v175
                %v177 = vld [vmem:[%s153 + $0xa8] sm:$0xff]
                %178 = vst [vmem:[%s154 + $0x58] sm:$0xff] %v177
                %v179 = vld [vmem:[%s153 + $0xc0] sm:$0xff]
                %180 = vst [vmem:[%s154 + $0x60] sm:$0xff] %v179
                %v181 = vld [vmem:[%s153 + $0xc8] sm:$0xff]
                %182 = vst [vmem:[%s154 + $0x68] sm:$0xff] %v181
                %v183 = vld [vmem:[%s153 + $0xe0] sm:$0xff]
                %184 = vst [vmem:[%s154 + $0x70] sm:$0xff] %v183
                %v185 = vld [vmem:[%s153 + $0xe8] sm:$0xff]
                %186 = vst [vmem:[%s154 + $0x78] sm:$0xff] %v185
                %v187 = vld [vmem:[%s153 + $0x100] sm:$0xff]
                %188 = vst [vmem:[%s154 + $0x80] sm:$0xff] %v187
                %v189 = vld [vmem:[%s153 + $0x108] sm:$0xff]
                %190 = vst [vmem:[%s154 + $0x88] sm:$0xff] %v189
                %v191 = vld [vmem:[%s153 + $0x120] sm:$0xff]
                %192 = vst [vmem:[%s154 + $0x90] sm:$0xff] %v191
                %v193 = vld [vmem:[%s153 + $0x128] sm:$0xff]
                %194 = vst [vmem:[%s154 + $0x98] sm:$0xff] %v193
                %v195 = vld [vmem:[%s153 + $0x140] sm:$0xff]
                %196 = vst [vmem:[%s154 + $0xa0] sm:$0xff] %v195
                %v197 = vld [vmem:[%s153 + $0x148] sm:$0xff]
                %198 = vst [vmem:[%s154 + $0xa8] sm:$0xff] %v197
                %v199 = vld [vmem:[%s153 + $0x160] sm:$0xff]
                %200 = vst [vmem:[%s154 + $0xb0] sm:$0xff] %v199
                %v201 = vld [vmem:[%s153 + $0x168] sm:$0xff]
                %202 = vst [vmem:[%s154 + $0xb8] sm:$0xff] %v201
                %v203 = vld [vmem:[%s153 + $0x180] sm:$0xff]
                %204 = vst [vmem:[%s154 + $0xc0] sm:$0xff] %v203
                %v205 = vld [vmem:[%s153 + $0x188] sm:$0xff]
                %206 = vst [vmem:[%s154 + $0xc8] sm:$0xff] %v205
                %v207 = vld [vmem:[%s153 + $0x1a0] sm:$0xff]
                %208 = vst [vmem:[%s154 + $0xd0] sm:$0xff] %v207
                %v209 = vld [vmem:[%s153 + $0x1a8] sm:$0xff]
                %210 = vst [vmem:[%s154 + $0xd8] sm:$0xff] %v209
                %v211 = vld [vmem:[%s153 + $0x1c0] sm:$0xff]
                %212 = vst [vmem:[%s154 + $0xe0] sm:$0xff] %v211
                %v213 = vld [vmem:[%s153 + $0x1c8] sm:$0xff]
                %214 = vst [vmem:[%s154 + $0xe8] sm:$0xff] %v213
                %v215 = vld [vmem:[%s153 + $0x1e0] sm:$0xff]
                %216 = vst [vmem:[%s154 + $0xf0] sm:$0xff] %v215
                %v217 = vld [vmem:[%s153 + $0x1e8] sm:$0xff]
                %218 = vst [vmem:[%s154 + $0xf8] sm:$0xff] %v217
                %v219 = vld [vmem:[%s153 + $0x200] sm:$0xff]
                %220 = vst [vmem:[%s154 + $0x100] sm:$0xff] %v219
                %v221 = vld [vmem:[%s153 + $0x208] sm:$0xff]
                %222 = vst [vmem:[%s154 + $0x108] sm:$0xff] %v221
                %v223 = vld [vmem:[%s153 + $0x220] sm:$0xff]
                %224 = vst [vmem:[%s154 + $0x110] sm:$0xff] %v223
                %v225 = vld [vmem:[%s153 + $0x228] sm:$0xff]
                %226 = vst [vmem:[%s154 + $0x118] sm:$0xff] %v225
                %v227 = vld [vmem:[%s153 + $0x240] sm:$0xff]
                %228 = vst [vmem:[%s154 + $0x120] sm:$0xff] %v227
                %v229 = vld [vmem:[%s153 + $0x248] sm:$0xff]
                %230 = vst [vmem:[%s154 + $0x128] sm:$0xff] %v229
                %v231 = vld [vmem:[%s153 + $0x260] sm:$0xff]
                %232 = vst [vmem:[%s154 + $0x130] sm:$0xff] %v231
                %v233 = vld [vmem:[%s153 + $0x268] sm:$0xff]
                %234 = vst [vmem:[%s154 + $0x138] sm:$0xff] %v233
                %v235 = vld [vmem:[%s153 + $0x280] sm:$0xff]
                %236 = vst [vmem:[%s154 + $0x140] sm:$0xff] %v235
                %v237 = vld [vmem:[%s153 + $0x288] sm:$0xff]
                %238 = vst [vmem:[%s154 + $0x148] sm:$0xff] %v237
                %v239 = vld [vmem:[%s153 + $0x2a0] sm:$0xff]
                %240 = vst [vmem:[%s154 + $0x150] sm:$0xff] %v239
                %v241 = vld [vmem:[%s153 + $0x2a8] sm:$0xff]
                %242 = vst [vmem:[%s154 + $0x158] sm:$0xff] %v241
                %v243 = vld [vmem:[%s153 + $0x2c0] sm:$0xff]
                %244 = vst [vmem:[%s154 + $0x160] sm:$0xff] %v243
                %v245 = vld [vmem:[%s153 + $0x2c8] sm:$0xff]
                %246 = vst [vmem:[%s154 + $0x168] sm:$0xff] %v245
                %v247 = vld [vmem:[%s153 + $0x2e0] sm:$0xff]
                %248 = vst [vmem:[%s154 + $0x170] sm:$0xff] %v247
                %v249 = vld [vmem:[%s153 + $0x2e8] sm:$0xff]
                %250 = vst [vmem:[%s154 + $0x178] sm:$0xff] %v249
                %v251 = vld [vmem:[%s153 + $0x300] sm:$0xff]
                %252 = vst [vmem:[%s154 + $0x180] sm:$0xff] %v251
                %v253 = vld [vmem:[%s153 + $0x308] sm:$0xff]
                %254 = vst [vmem:[%s154 + $0x188] sm:$0xff] %v253
                %v255 = vld [vmem:[%s153 + $0x320] sm:$0xff]
                %256 = vst [vmem:[%s154 + $0x190] sm:$0xff] %v255
                %v257 = vld [vmem:[%s153 + $0x328] sm:$0xff]
                %258 = vst [vmem:[%s154 + $0x198] sm:$0xff] %v257
                %v259 = vld [vmem:[%s153 + $0x340] sm:$0xff]
                %260 = vst [vmem:[%s154 + $0x1a0] sm:$0xff] %v259
                %v261 = vld [vmem:[%s153 + $0x348] sm:$0xff]
                %262 = vst [vmem:[%s154 + $0x1a8] sm:$0xff] %v261
                %v263 = vld [vmem:[%s153 + $0x360] sm:$0xff]
                %264 = vst [vmem:[%s154 + $0x1b0] sm:$0xff] %v263
                %v265 = vld [vmem:[%s153 + $0x368] sm:$0xff]
                %266 = vst [vmem:[%s154 + $0x1b8] sm:$0xff] %v265
                %v267 = vld [vmem:[%s153 + $0x380] sm:$0xff]
                %268 = vst [vmem:[%s154 + $0x1c0] sm:$0xff] %v267
                %v269 = vld [vmem:[%s153 + $0x388] sm:$0xff]
                %270 = vst [vmem:[%s154 + $0x1c8] sm:$0xff] %v269
                %v271 = vld [vmem:[%s153 + $0x3a0] sm:$0xff]
                %272 = vst [vmem:[%s154 + $0x1d0] sm:$0xff] %v271
                %v273 = vld [vmem:[%s153 + $0x3a8] sm:$0xff]
                %274 = vst [vmem:[%s154 + $0x1d8] sm:$0xff] %v273
                %v275 = vld [vmem:[%s153 + $0x3c0] sm:$0xff]
                %276 = vst [vmem:[%s154 + $0x1e0] sm:$0xff] %v275
                %v277 = vld [vmem:[%s153 + $0x3c8] sm:$0xff]
                %278 = vst [vmem:[%s154 + $0x1e8] sm:$0xff] %v277
                %v279 = vld [vmem:[%s153 + $0x3e0] sm:$0xff]
                %280 = vst [vmem:[%s154 + $0x1f0] sm:$0xff] %v279
                %v281 = vld [vmem:[%s153 + $0x3e8] sm:$0xff]
                %282 = vst [vmem:[%s154 + $0x1f8] sm:$0xff] %v281
                %v283 = vld [vmem:[%s153 + $0x400] sm:$0xff]
                %284 = vst [vmem:[%s154 + $0x200] sm:$0xff] %v283
                %v285 = vld [vmem:[%s153 + $0x408] sm:$0xff]
                %286 = vst [vmem:[%s154 + $0x208] sm:$0xff] %v285
                %v287 = vld [vmem:[%s153 + $0x420] sm:$0xff]
                %288 = vst [vmem:[%s154 + $0x210] sm:$0xff] %v287
                %v289 = vld [vmem:[%s153 + $0x428] sm:$0xff]
                %290 = vst [vmem:[%s154 + $0x218] sm:$0xff] %v289
                %v291 = vld [vmem:[%s153 + $0x440] sm:$0xff]
                %292 = vst [vmem:[%s154 + $0x220] sm:$0xff] %v291
                %v293 = vld [vmem:[%s153 + $0x448] sm:$0xff]
                %294 = vst [vmem:[%s154 + $0x228] sm:$0xff] %v293
                %v295 = vld [vmem:[%s153 + $0x460] sm:$0xff]
                %296 = vst [vmem:[%s154 + $0x230] sm:$0xff] %v295
                %v297 = vld [vmem:[%s153 + $0x468] sm:$0xff]
                %298 = vst [vmem:[%s154 + $0x238] sm:$0xff] %v297
                %v299 = vld [vmem:[%s153 + $0x480] sm:$0xff]
                %300 = vst [vmem:[%s154 + $0x240] sm:$0xff] %v299
                %v301 = vld [vmem:[%s153 + $0x488] sm:$0xff]
                %302 = vst [vmem:[%s154 + $0x248] sm:$0xff] %v301
                %v303 = vld [vmem:[%s153 + $0x4a0] sm:$0xff]
                %304 = vst [vmem:[%s154 + $0x250] sm:$0xff] %v303
                %v305 = vld [vmem:[%s153 + $0x4a8] sm:$0xff]
                %306 = vst [vmem:[%s154 + $0x258] sm:$0xff] %v305
                %v307 = vld [vmem:[%s153 + $0x4c0] sm:$0xff]
                %308 = vst [vmem:[%s154 + $0x260] sm:$0xff] %v307
                %v309 = vld [vmem:[%s153 + $0x4c8] sm:$0xff]
                %310 = vst [vmem:[%s154 + $0x268] sm:$0xff] %v309
                %v311 = vld [vmem:[%s153 + $0x4e0] sm:$0xff]
                %312 = vst [vmem:[%s154 + $0x270] sm:$0xff] %v311
                %v313 = vld [vmem:[%s153 + $0x4e8] sm:$0xff]
                %314 = vst [vmem:[%s154 + $0x278] sm:$0xff] %v313
                %v315 = vld [vmem:[%s153 + $0x500] sm:$0xff]
                %316 = vst [vmem:[%s154 + $0x280] sm:$0xff] %v315
                %v317 = vld [vmem:[%s153 + $0x508] sm:$0xff]
                %318 = vst [vmem:[%s154 + $0x288] sm:$0xff] %v317
                %v319 = vld [vmem:[%s153 + $0x520] sm:$0xff]
                %320 = vst [vmem:[%s154 + $0x290] sm:$0xff] %v319
                %v321 = vld [vmem:[%s153 + $0x528] sm:$0xff]
                %322 = vst [vmem:[%s154 + $0x298] sm:$0xff] %v321
                %v323 = vld [vmem:[%s153 + $0x540] sm:$0xff]
                %324 = vst [vmem:[%s154 + $0x2a0] sm:$0xff] %v323
                %v325 = vld [vmem:[%s153 + $0x548] sm:$0xff]
                %326 = vst [vmem:[%s154 + $0x2a8] sm:$0xff] %v325
                %v327 = vld [vmem:[%s153 + $0x560] sm:$0xff]
                %328 = vst [vmem:[%s154 + $0x2b0] sm:$0xff] %v327
                %v329 = vld [vmem:[%s153 + $0x568] sm:$0xff]
                %330 = vst [vmem:[%s154 + $0x2b8] sm:$0xff] %v329
                %v331 = vld [vmem:[%s153 + $0x580] sm:$0xff]
                %332 = vst [vmem:[%s154 + $0x2c0] sm:$0xff] %v331
                %v333 = vld [vmem:[%s153 + $0x588] sm:$0xff]
                %334 = vst [vmem:[%s154 + $0x2c8] sm:$0xff] %v333
                %v335 = vld [vmem:[%s153 + $0x5a0] sm:$0xff]
                %336 = vst [vmem:[%s154 + $0x2d0] sm:$0xff] %v335
                %v337 = vld [vmem:[%s153 + $0x5a8] sm:$0xff]
                %338 = vst [vmem:[%s154 + $0x2d8] sm:$0xff] %v337
                %v339 = vld [vmem:[%s153 + $0x5c0] sm:$0xff]
                %340 = vst [vmem:[%s154 + $0x2e0] sm:$0xff] %v339
                %v341 = vld [vmem:[%s153 + $0x5c8] sm:$0xff]
                %342 = vst [vmem:[%s154 + $0x2e8] sm:$0xff] %v341
                %v343 = vld [vmem:[%s153 + $0x5e0] sm:$0xff]
                %344 = vst [vmem:[%s154 + $0x2f0] sm:$0xff] %v343
                %v345 = vld [vmem:[%s153 + $0x5e8] sm:$0xff]
                %346 = vst [vmem:[%s154 + $0x2f8] sm:$0xff] %v345
                %v347 = vld [vmem:[%s153 + $0x600] sm:$0xff]
                %348 = vst [vmem:[%s154 + $0x300] sm:$0xff] %v347
                %v349 = vld [vmem:[%s153 + $0x608] sm:$0xff]
                %350 = vst [vmem:[%s154 + $0x308] sm:$0xff] %v349
                %v351 = vld [vmem:[%s153 + $0x620] sm:$0xff]
                %352 = vst [vmem:[%s154 + $0x310] sm:$0xff] %v351
                %v353 = vld [vmem:[%s153 + $0x628] sm:$0xff]
                %354 = vst [vmem:[%s154 + $0x318] sm:$0xff] %v353
                %v355 = vld [vmem:[%s153 + $0x640] sm:$0xff]
                %356 = vst [vmem:[%s154 + $0x320] sm:$0xff] %v355
                %v357 = vld [vmem:[%s153 + $0x648] sm:$0xff]
                %358 = vst [vmem:[%s154 + $0x328] sm:$0xff] %v357
                %v359 = vld [vmem:[%s153 + $0x660] sm:$0xff]
                %360 = vst [vmem:[%s154 + $0x330] sm:$0xff] %v359
                %v361 = vld [vmem:[%s153 + $0x668] sm:$0xff]
                %362 = vst [vmem:[%s154 + $0x338] sm:$0xff] %v361
                %v363 = vld [vmem:[%s153 + $0x680] sm:$0xff]
                %364 = vst [vmem:[%s154 + $0x340] sm:$0xff] %v363
                %v365 = vld [vmem:[%s153 + $0x688] sm:$0xff]
                %366 = vst [vmem:[%s154 + $0x348] sm:$0xff] %v365
                %v367 = vld [vmem:[%s153 + $0x6a0] sm:$0xff]
                %368 = vst [vmem:[%s154 + $0x350] sm:$0xff] %v367
                %v369 = vld [vmem:[%s153 + $0x6a8] sm:$0xff]
                %370 = vst [vmem:[%s154 + $0x358] sm:$0xff] %v369
                %v371 = vld [vmem:[%s153 + $0x6c0] sm:$0xff]
                %372 = vst [vmem:[%s154 + $0x360] sm:$0xff] %v371
                %v373 = vld [vmem:[%s153 + $0x6c8] sm:$0xff]
                %374 = vst [vmem:[%s154 + $0x368] sm:$0xff] %v373
                %v375 = vld [vmem:[%s153 + $0x6e0] sm:$0xff]
                %376 = vst [vmem:[%s154 + $0x370] sm:$0xff] %v375
                %v377 = vld [vmem:[%s153 + $0x6e8] sm:$0xff]
                %378 = vst [vmem:[%s154 + $0x378] sm:$0xff] %v377
                %v379 = vld [vmem:[%s153 + $0x700] sm:$0xff]
                %380 = vst [vmem:[%s154 + $0x380] sm:$0xff] %v379
                %v381 = vld [vmem:[%s153 + $0x708] sm:$0xff]
                %382 = vst [vmem:[%s154 + $0x388] sm:$0xff] %v381
                %v383 = vld [vmem:[%s153 + $0x720] sm:$0xff]
                %384 = vst [vmem:[%s154 + $0x390] sm:$0xff] %v383
                %v385 = vld [vmem:[%s153 + $0x728] sm:$0xff]
                %386 = vst [vmem:[%s154 + $0x398] sm:$0xff] %v385
                %v387 = vld [vmem:[%s153 + $0x740] sm:$0xff]
                %388 = vst [vmem:[%s154 + $0x3a0] sm:$0xff] %v387
                %v389 = vld [vmem:[%s153 + $0x748] sm:$0xff]
                %390 = vst [vmem:[%s154 + $0x3a8] sm:$0xff] %v389
                %v391 = vld [vmem:[%s153 + $0x760] sm:$0xff]
                %392 = vst [vmem:[%s154 + $0x3b0] sm:$0xff] %v391
                %v393 = vld [vmem:[%s153 + $0x768] sm:$0xff]
                %394 = vst [vmem:[%s154 + $0x3b8] sm:$0xff] %v393
                %v395 = vld [vmem:[%s153 + $0x780] sm:$0xff]
                %396 = vst [vmem:[%s154 + $0x3c0] sm:$0xff] %v395
                %v397 = vld [vmem:[%s153 + $0x788] sm:$0xff]
                %398 = vst [vmem:[%s154 + $0x3c8] sm:$0xff] %v397
                %v399 = vld [vmem:[%s153 + $0x7a0] sm:$0xff]
                %400 = vst [vmem:[%s154 + $0x3d0] sm:$0xff] %v399
                %v401 = vld [vmem:[%s153 + $0x7a8] sm:$0xff]
                %402 = vst [vmem:[%s154 + $0x3d8] sm:$0xff] %v401
                %v403 = vld [vmem:[%s153 + $0x7c0] sm:$0xff]
                %404 = vst [vmem:[%s154 + $0x3e0] sm:$0xff] %v403
                %v405 = vld [vmem:[%s153 + $0x7c8] sm:$0xff]
                %406 = vst [vmem:[%s154 + $0x3e8] sm:$0xff] %v405
                %v407 = vld [vmem:[%s153 + $0x7e0] sm:$0xff]
                %408 = vst [vmem:[%s154 + $0x3f0] sm:$0xff] %v407
                %v409 = vld [vmem:[%s153 + $0x7e8] sm:$0xff]
                %410 = vst [vmem:[%s154 + $0x3f8] sm:$0xff] %v409
              $region37: #{model_forward.5} parent=31 // loop_footer
                %s152 = sadd.s32 1, %s148
              $region38: #{model_forward.5} parent=31 // loop_footer_branch
                %147 = sbr.rel target = $region34
              $region39: #{model_forward.5} parent=31 // loop_exit
                _
            $region32: #{model_forward.5} parent=27 // pred_fallthru
              _
            // Predicated region
            $region40: #{model_forward.5} parent=27 // pred_check
              _
            $region41: #{model_forward.5} parent=27 // pred_check_branch
              %412 = sbr.rel target = $region43
            $region42: #{model_forward.5} parent=27 // pred_region
              _
            $region43: #{model_forward.5} parent=27 // pred_fallthru
              _
          $region28: #{model_forward.5} parent=23 // pred_fallthru
            _
          %413 = vnop
        $region24: #{model_forward.5} parent=19 // pred_fallthru
          _
        // Predicated region
        $region44: #{model_forward.5} parent=19 // pred_check
          %p414 = pneg %p79
        $region45: #{model_forward.5} parent=19 // pred_check_branch
          %416 = sbr.rel (%p414) target = $region47
        $region46: #{model_forward.5} parent=19 // pred_region
          %s417 = smul.u32 4, %s12
          %p418 = scmp.lt.s32.totalorder %s417, 7
          %s419 = scalar_select %p418, %s417, 7
          %s420 = scalar_lea.vmem %s2, %s419
          %s421 = smul.u32 4, %s12
        $region47: #{model_forward.5} parent=19 // pred_fallthru
          _
      $region20: #{model_forward.5} parent=5 // pred_fallthru
        _
      %p422 = scmp.le.s32.totalorder 1, %s12
      %p423 = scmp.lt.s32.totalorder %s12, 3
      %p424 = pnand %p422, %p423
      %p425 = pneg %p424
      // Predicated region
      $region48: #{model_forward.5} parent=5 // pred_check
        _
      $region49: #{model_forward.5} parent=5 // pred_check_branch
        %427 = sbr.rel (%p424) target = $region51
      $region50: #{model_forward.5} parent=5 // pred_region
        %s428 = ssub.s32 %s12, 1
        %s429 = sand.u32 %s46, 1
        %s430 = sand.u32 %s46, 1
        %s431 = smul.addr %s430, 1024
        %s432 = scalar_lea.vmem [#allocation2], %s431
        // Predicated region
        $region52: #{model_forward.5} parent=50 // pred_check
          %p433 = pneg %p59
        $region53: #{model_forward.5} parent=50 // pred_check_branch
          %435 = sbr.rel (%p433) target = $region55
        $region54: #{model_forward.5} parent=50 // pred_region
          _
        $region55: #{model_forward.5} parent=50 // pred_fallthru
          _
        %p436 = pneg %p33
        %p437 = pneg %p30
        %s438 = sand.u32 %s46, 1
        %s439 = sand.u32 %s46, 1
        %s440 = smul.addr %s439, 1024
        %s441 = scalar_lea.vmem [#allocation2], %s440
        %p442 = pneg %p59
        %p443 = pneg %p56
        %s444 = smul.u32 4, %s17
        %p445 = scmp.lt.s32.totalorder %s444, 7
        %s446 = scalar_select %p445, %s444, 7
        %s447 = scalar_lea.vmem %s2, %s446
        %p448 = pneg %p85
        %p449 = pneg %p82
        %p450 = pneg %p111
        %p451 = pneg %p108
        %s452 = sand.u32 %s98, 1
        %s453 = scalar_lea.sflag [#allocation4], %s452
        %s454 = sand.u32 %s98, 1
        %s455 = smul.addr %s454, 8
        %s456 = scalar_lea.vmem [#allocation3], %s455
        %s457 = smul.u32 4, %s17
        %s458 = smul.u32 4, %s17
        %p459 = scmp.lt.s32.totalorder %s458, 7
        %s460 = scalar_select %p459, %s458, 7
        %s461 = scalar_lea.vmem %s2, %s460
        %s462 = smul.u32 4, %s17
        %s463 = smul.u32 4, %s17
        %v464 = vld [vmem:[%s0] sm:$0xff]
        %v466 = vcombine.high %v464, %v464
        %v468 = vunpack.c.l.s4 1983009808
        %v469 = vunpack.c.0.s8 %v468
        %v470 = vlaneseq
        %v471 = vshrl.u32 %v470, 7
        %v472 = vsub.s32 %v469, %v471
        %v473 = vrot.slane %v464, %v472
        %v475 = vunpack.c.l.s4 1983009808
        %v476 = vunpack.c.0.s8 %v475
        %v477 = vlaneseq
        %v478 = vshrl.u32 %v477, 7
        %v479 = vsub.s32 %v476, %v478
        %v480 = vrot.slane %v466, %v479
        %v481 = vcombine.high %v473, %v473
        %v482 = vcombine.high %v480, %v480
        %v487 = vpack.c.bf16 %v473, %v473
        %v488 = vpack.c.bf16 %v481, %v481
        %v489 = vpack.c.bf16 %v480, %v480
        %v490 = vpack.c.bf16 %v482, %v482
        %v491 = vld [vmem:[%s432] sm:$0xff]
        %v492 = vld [vmem:[%s432 + $0x8] sm:$0xff]
        %v493 = vld [vmem:[%s432 + $0x10] sm:$0xff]
        %v494 = vld [vmem:[%s432 + $0x18] sm:$0xff]
        %v495 = vld [vmem:[%s432 + $0x20] sm:$0xff]
        %v496 = vld [vmem:[%s432 + $0x28] sm:$0xff]
        %v497 = vld [vmem:[%s432 + $0x30] sm:$0xff]
        %v498 = vld [vmem:[%s432 + $0x38] sm:$0xff]
        %v499 = vld [vmem:[%s432 + $0x40] sm:$0xff]
        %v500 = vld [vmem:[%s432 + $0x48] sm:$0xff]
        %v501 = vld [vmem:[%s432 + $0x50] sm:$0xff]
        %v502 = vld [vmem:[%s432 + $0x58] sm:$0xff]
        %v503 = vld [vmem:[%s432 + $0x60] sm:$0xff]
        %v504 = vld [vmem:[%s432 + $0x68] sm:$0xff]
        %v505 = vld [vmem:[%s432 + $0x70] sm:$0xff]
        %v506 = vld [vmem:[%s432 + $0x78] sm:$0xff]
        %v507 = vld [vmem:[%s432 + $0x80] sm:$0xff]
        %v508 = vld [vmem:[%s432 + $0x88] sm:$0xff]
        %v509 = vld [vmem:[%s432 + $0x90] sm:$0xff]
        %v510 = vld [vmem:[%s432 + $0x98] sm:$0xff]
        %v511 = vld [vmem:[%s432 + $0xa0] sm:$0xff]
        %v512 = vld [vmem:[%s432 + $0xa8] sm:$0xff]
        %v513 = vld [vmem:[%s432 + $0xb0] sm:$0xff]
        %v514 = vld [vmem:[%s432 + $0xb8] sm:$0xff]
        %v515 = vld [vmem:[%s432 + $0xc0] sm:$0xff]
        %v516 = vld [vmem:[%s432 + $0xc8] sm:$0xff]
        %v517 = vld [vmem:[%s432 + $0xd0] sm:$0xff]
        %v518 = vld [vmem:[%s432 + $0xd8] sm:$0xff]
        %v519 = vld [vmem:[%s432 + $0xe0] sm:$0xff]
        %v520 = vld [vmem:[%s432 + $0xe8] sm:$0xff]
        %v521 = vld [vmem:[%s432 + $0xf0] sm:$0xff]
        %v522 = vld [vmem:[%s432 + $0xf8] sm:$0xff]
        %v523 = vld [vmem:[%s432 + $0x100] sm:$0xff]
        %v524 = vld [vmem:[%s432 + $0x108] sm:$0xff]
        %v525 = vld [vmem:[%s432 + $0x110] sm:$0xff]
        %v526 = vld [vmem:[%s432 + $0x118] sm:$0xff]
        %v527 = vld [vmem:[%s432 + $0x120] sm:$0xff]
        %v528 = vld [vmem:[%s432 + $0x128] sm:$0xff]
        %v529 = vld [vmem:[%s432 + $0x130] sm:$0xff]
        %v530 = vld [vmem:[%s432 + $0x138] sm:$0xff]
        %v531 = vld [vmem:[%s432 + $0x140] sm:$0xff]
        %v532 = vld [vmem:[%s432 + $0x148] sm:$0xff]
        %v533 = vld [vmem:[%s432 + $0x150] sm:$0xff]
        %v534 = vld [vmem:[%s432 + $0x158] sm:$0xff]
        %v535 = vld [vmem:[%s432 + $0x160] sm:$0xff]
        %v536 = vld [vmem:[%s432 + $0x168] sm:$0xff]
        %v537 = vld [vmem:[%s432 + $0x170] sm:$0xff]
        %v538 = vld [vmem:[%s432 + $0x178] sm:$0xff]
        %v539 = vld [vmem:[%s432 + $0x180] sm:$0xff]
        %v540 = vld [vmem:[%s432 + $0x188] sm:$0xff]
        %v541 = vld [vmem:[%s432 + $0x190] sm:$0xff]
        %v542 = vld [vmem:[%s432 + $0x198] sm:$0xff]
        %v543 = vld [vmem:[%s432 + $0x1a0] sm:$0xff]
        %v544 = vld [vmem:[%s432 + $0x1a8] sm:$0xff]
        %v545 = vld [vmem:[%s432 + $0x1b0] sm:$0xff]
        %v546 = vld [vmem:[%s432 + $0x1b8] sm:$0xff]
        %v547 = vld [vmem:[%s432 + $0x1c0] sm:$0xff]
        %v548 = vld [vmem:[%s432 + $0x1c8] sm:$0xff]
        %v549 = vld [vmem:[%s432 + $0x1d0] sm:$0xff]
        %v550 = vld [vmem:[%s432 + $0x1d8] sm:$0xff]
        %v551 = vld [vmem:[%s432 + $0x1e0] sm:$0xff]
        %v552 = vld [vmem:[%s432 + $0x1e8] sm:$0xff]
        %v553 = vld [vmem:[%s432 + $0x1f0] sm:$0xff]
        %v554 = vld [vmem:[%s432 + $0x1f8] sm:$0xff]
        %v555 = vld [vmem:[%s432 + $0x200] sm:$0xff]
        %v556 = vld [vmem:[%s432 + $0x208] sm:$0xff]
        %v557 = vld [vmem:[%s432 + $0x210] sm:$0xff]
        %v558 = vld [vmem:[%s432 + $0x218] sm:$0xff]
        %v559 = vld [vmem:[%s432 + $0x220] sm:$0xff]
        %v560 = vld [vmem:[%s432 + $0x228] sm:$0xff]
        %v561 = vld [vmem:[%s432 + $0x230] sm:$0xff]
        %v562 = vld [vmem:[%s432 + $0x238] sm:$0xff]
        %v563 = vld [vmem:[%s432 + $0x240] sm:$0xff]
        %v564 = vld [vmem:[%s432 + $0x248] sm:$0xff]
        %v565 = vld [vmem:[%s432 + $0x250] sm:$0xff]
        %v566 = vld [vmem:[%s432 + $0x258] sm:$0xff]
        %v567 = vld [vmem:[%s432 + $0x260] sm:$0xff]
        %v568 = vld [vmem:[%s432 + $0x268] sm:$0xff]
        %v569 = vld [vmem:[%s432 + $0x270] sm:$0xff]
        %v570 = vld [vmem:[%s432 + $0x278] sm:$0xff]
        %v571 = vld [vmem:[%s432 + $0x280] sm:$0xff]
        %v572 = vld [vmem:[%s432 + $0x288] sm:$0xff]
        %v573 = vld [vmem:[%s432 + $0x290] sm:$0xff]
        %v574 = vld [vmem:[%s432 + $0x298] sm:$0xff]
        %v575 = vld [vmem:[%s432 + $0x2a0] sm:$0xff]
        %v576 = vld [vmem:[%s432 + $0x2a8] sm:$0xff]
        %v577 = vld [vmem:[%s432 + $0x2b0] sm:$0xff]
        %v578 = vld [vmem:[%s432 + $0x2b8] sm:$0xff]
        %v579 = vld [vmem:[%s432 + $0x2c0] sm:$0xff]
        %v580 = vld [vmem:[%s432 + $0x2c8] sm:$0xff]
        %v581 = vld [vmem:[%s432 + $0x2d0] sm:$0xff]
        %v582 = vld [vmem:[%s432 + $0x2d8] sm:$0xff]
        %v583 = vld [vmem:[%s432 + $0x2e0] sm:$0xff]
        %v584 = vld [vmem:[%s432 + $0x2e8] sm:$0xff]
        %v585 = vld [vmem:[%s432 + $0x2f0] sm:$0xff]
        %v586 = vld [vmem:[%s432 + $0x2f8] sm:$0xff]
        %v587 = vld [vmem:[%s432 + $0x300] sm:$0xff]
        %v588 = vld [vmem:[%s432 + $0x308] sm:$0xff]
        %v589 = vld [vmem:[%s432 + $0x310] sm:$0xff]
        %v590 = vld [vmem:[%s432 + $0x318] sm:$0xff]
        %v591 = vld [vmem:[%s432 + $0x320] sm:$0xff]
        %v592 = vld [vmem:[%s432 + $0x328] sm:$0xff]
        %v593 = vld [vmem:[%s432 + $0x330] sm:$0xff]
        %v594 = vld [vmem:[%s432 + $0x338] sm:$0xff]
        %v595 = vld [vmem:[%s432 + $0x340] sm:$0xff]
        %v596 = vld [vmem:[%s432 + $0x348] sm:$0xff]
        %v597 = vld [vmem:[%s432 + $0x350] sm:$0xff]
        %v598 = vld [vmem:[%s432 + $0x358] sm:$0xff]
        %v599 = vld [vmem:[%s432 + $0x360] sm:$0xff]
        %v600 = vld [vmem:[%s432 + $0x368] sm:$0xff]
        %v601 = vld [vmem:[%s432 + $0x370] sm:$0xff]
        %v602 = vld [vmem:[%s432 + $0x378] sm:$0xff]
        %v603 = vld [vmem:[%s432 + $0x380] sm:$0xff]
        %v604 = vld [vmem:[%s432 + $0x388] sm:$0xff]
        %v605 = vld [vmem:[%s432 + $0x390] sm:$0xff]
        %v606 = vld [vmem:[%s432 + $0x398] sm:$0xff]
        %v607 = vld [vmem:[%s432 + $0x3a0] sm:$0xff]
        %v608 = vld [vmem:[%s432 + $0x3a8] sm:$0xff]
        %v609 = vld [vmem:[%s432 + $0x3b0] sm:$0xff]
        %v610 = vld [vmem:[%s432 + $0x3b8] sm:$0xff]
        %v611 = vld [vmem:[%s432 + $0x3c0] sm:$0xff]
        %v612 = vld [vmem:[%s432 + $0x3c8] sm:$0xff]
        %v613 = vld [vmem:[%s432 + $0x3d0] sm:$0xff]
        %v614 = vld [vmem:[%s432 + $0x3d8] sm:$0xff]
        %v615 = vld [vmem:[%s432 + $0x3e0] sm:$0xff]
        %v616 = vld [vmem:[%s432 + $0x3e8] sm:$0xff]
        %v617 = vld [vmem:[%s432 + $0x3f0] sm:$0xff]
        %v618 = vld [vmem:[%s432 + $0x3f8] sm:$0xff]
        %v619 = vld [vmem:[%s461] sm:$0xf]
        %v621 = vlaneseq
        %v622 = vshrl.u32 %v621, 7
        %v623 = vsub.s32 0, %v622
        %v624 = vrot.slane %v619, %v623
        %v625 = vlaneseq
        %v626 = vshrl.u32 %v625, 7
        %v627 = vsub.s32 1, %v626
        %v628 = vrot.slane %v619, %v627
        %v629 = vlaneseq
        %v630 = vshrl.u32 %v629, 7
        %v631 = vsub.s32 2, %v630
        %v632 = vrot.slane %v619, %v631
        %v633 = vlaneseq
        %v634 = vshrl.u32 %v633, 7
        %v635 = vsub.s32 3, %v634
        %v636 = vrot.slane %v619, %v635
        %v769 = vunpack.c.l.b16 %v491
        %v770 = vunpack.c.h.b16 %v491
        %v771 = vunpack.c.l.b16 %v492
        %v772 = vunpack.c.h.b16 %v492
        %v773 = vunpack.c.l.b16 %v493
        %v774 = vunpack.c.h.b16 %v493
        %v775 = vunpack.c.l.b16 %v494
        %v776 = vunpack.c.h.b16 %v494
        %v777 = vunpack.c.l.b16 %v495
        %v778 = vunpack.c.h.b16 %v495
        %v779 = vunpack.c.l.b16 %v496
        %v780 = vunpack.c.h.b16 %v496
        %v781 = vunpack.c.l.b16 %v497
        %v782 = vunpack.c.h.b16 %v497
        %v783 = vunpack.c.l.b16 %v498
        %v784 = vunpack.c.h.b16 %v498
        %v785 = vunpack.c.l.b16 %v499
        %v786 = vunpack.c.h.b16 %v499
        %v787 = vunpack.c.l.b16 %v500
        %v788 = vunpack.c.h.b16 %v500
        %v789 = vunpack.c.l.b16 %v501
        %v790 = vunpack.c.h.b16 %v501
        %v791 = vunpack.c.l.b16 %v502
        %v792 = vunpack.c.h.b16 %v502
        %v793 = vunpack.c.l.b16 %v503
        %v794 = vunpack.c.h.b16 %v503
        %v795 = vunpack.c.l.b16 %v504
        %v796 = vunpack.c.h.b16 %v504
        %v797 = vunpack.c.l.b16 %v505
        %v798 = vunpack.c.h.b16 %v505
        %v799 = vunpack.c.l.b16 %v506
        %v800 = vunpack.c.h.b16 %v506
        %v801 = vunpack.c.l.b16 %v507
        %v802 = vunpack.c.h.b16 %v507
        %v803 = vunpack.c.l.b16 %v508
        %v804 = vunpack.c.h.b16 %v508
        %v805 = vunpack.c.l.b16 %v509
        %v806 = vunpack.c.h.b16 %v509
        %v807 = vunpack.c.l.b16 %v510
        %v808 = vunpack.c.h.b16 %v510
        %v809 = vunpack.c.l.b16 %v511
        %v810 = vunpack.c.h.b16 %v511
        %v811 = vunpack.c.l.b16 %v512
        %v812 = vunpack.c.h.b16 %v512
        %v813 = vunpack.c.l.b16 %v513
        %v814 = vunpack.c.h.b16 %v513
        %v815 = vunpack.c.l.b16 %v514
        %v816 = vunpack.c.h.b16 %v514
        %v817 = vunpack.c.l.b16 %v515
        %v818 = vunpack.c.h.b16 %v515
        %v819 = vunpack.c.l.b16 %v516
        %v820 = vunpack.c.h.b16 %v516
        %v821 = vunpack.c.l.b16 %v517
        %v822 = vunpack.c.h.b16 %v517
        %v823 = vunpack.c.l.b16 %v518
        %v824 = vunpack.c.h.b16 %v518
        %v825 = vunpack.c.l.b16 %v519
        %v826 = vunpack.c.h.b16 %v519
        %v827 = vunpack.c.l.b16 %v520
        %v828 = vunpack.c.h.b16 %v520
        %v829 = vunpack.c.l.b16 %v521
        %v830 = vunpack.c.h.b16 %v521
        %v831 = vunpack.c.l.b16 %v522
        %v832 = vunpack.c.h.b16 %v522
        %v833 = vunpack.c.l.b16 %v523
        %v834 = vunpack.c.h.b16 %v523
        %v835 = vunpack.c.l.b16 %v524
        %v836 = vunpack.c.h.b16 %v524
        %v837 = vunpack.c.l.b16 %v525
        %v838 = vunpack.c.h.b16 %v525
        %v839 = vunpack.c.l.b16 %v526
        %v840 = vunpack.c.h.b16 %v526
        %v841 = vunpack.c.l.b16 %v527
        %v842 = vunpack.c.h.b16 %v527
        %v843 = vunpack.c.l.b16 %v528
        %v844 = vunpack.c.h.b16 %v528
        %v845 = vunpack.c.l.b16 %v529
        %v846 = vunpack.c.h.b16 %v529
        %v847 = vunpack.c.l.b16 %v530
        %v848 = vunpack.c.h.b16 %v530
        %v849 = vunpack.c.l.b16 %v531
        %v850 = vunpack.c.h.b16 %v531
        %v851 = vunpack.c.l.b16 %v532
        %v852 = vunpack.c.h.b16 %v532
        %v853 = vunpack.c.l.b16 %v533
        %v854 = vunpack.c.h.b16 %v533
        %v855 = vunpack.c.l.b16 %v534
        %v856 = vunpack.c.h.b16 %v534
        %v857 = vunpack.c.l.b16 %v535
        %v858 = vunpack.c.h.b16 %v535
        %v859 = vunpack.c.l.b16 %v536
        %v860 = vunpack.c.h.b16 %v536
        %v861 = vunpack.c.l.b16 %v537
        %v862 = vunpack.c.h.b16 %v537
        %v863 = vunpack.c.l.b16 %v538
        %v864 = vunpack.c.h.b16 %v538
        %v865 = vunpack.c.l.b16 %v539
        %v866 = vunpack.c.h.b16 %v539
        %v867 = vunpack.c.l.b16 %v540
        %v868 = vunpack.c.h.b16 %v540
        %v869 = vunpack.c.l.b16 %v541
        %v870 = vunpack.c.h.b16 %v541
        %v871 = vunpack.c.l.b16 %v542
        %v872 = vunpack.c.h.b16 %v542
        %v873 = vunpack.c.l.b16 %v543
        %v874 = vunpack.c.h.b16 %v543
        %v875 = vunpack.c.l.b16 %v544
        %v876 = vunpack.c.h.b16 %v544
        %v877 = vunpack.c.l.b16 %v545
        %v878 = vunpack.c.h.b16 %v545
        %v879 = vunpack.c.l.b16 %v546
        %v880 = vunpack.c.h.b16 %v546
        %v881 = vunpack.c.l.b16 %v547
        %v882 = vunpack.c.h.b16 %v547
        %v883 = vunpack.c.l.b16 %v548
        %v884 = vunpack.c.h.b16 %v548
        %v885 = vunpack.c.l.b16 %v549
        %v886 = vunpack.c.h.b16 %v549
        %v887 = vunpack.c.l.b16 %v550
        %v888 = vunpack.c.h.b16 %v550
        %v889 = vunpack.c.l.b16 %v551
        %v890 = vunpack.c.h.b16 %v551
        %v891 = vunpack.c.l.b16 %v552
        %v892 = vunpack.c.h.b16 %v552
        %v893 = vunpack.c.l.b16 %v553
        %v894 = vunpack.c.h.b16 %v553
        %v895 = vunpack.c.l.b16 %v554
        %v896 = vunpack.c.h.b16 %v554
        %v897 = vunpack.c.l.b16 %v555
        %v898 = vunpack.c.h.b16 %v555
        %v899 = vunpack.c.l.b16 %v556
        %v900 = vunpack.c.h.b16 %v556
        %v901 = vunpack.c.l.b16 %v557
        %v902 = vunpack.c.h.b16 %v557
        %v903 = vunpack.c.l.b16 %v558
        %v904 = vunpack.c.h.b16 %v558
        %v905 = vunpack.c.l.b16 %v559
        %v906 = vunpack.c.h.b16 %v559
        %v907 = vunpack.c.l.b16 %v560
        %v908 = vunpack.c.h.b16 %v560
        %v909 = vunpack.c.l.b16 %v561
        %v910 = vunpack.c.h.b16 %v561
        %v911 = vunpack.c.l.b16 %v562
        %v912 = vunpack.c.h.b16 %v562
        %v913 = vunpack.c.l.b16 %v563
        %v914 = vunpack.c.h.b16 %v563
        %v915 = vunpack.c.l.b16 %v564
        %v916 = vunpack.c.h.b16 %v564
        %v917 = vunpack.c.l.b16 %v565
        %v918 = vunpack.c.h.b16 %v565
        %v919 = vunpack.c.l.b16 %v566
        %v920 = vunpack.c.h.b16 %v566
        %v921 = vunpack.c.l.b16 %v567
        %v922 = vunpack.c.h.b16 %v567
        %v923 = vunpack.c.l.b16 %v568
        %v924 = vunpack.c.h.b16 %v568
        %v925 = vunpack.c.l.b16 %v569
        %v926 = vunpack.c.h.b16 %v569
        %v927 = vunpack.c.l.b16 %v570
        %v928 = vunpack.c.h.b16 %v570
        %v929 = vunpack.c.l.b16 %v571
        %v930 = vunpack.c.h.b16 %v571
        %v931 = vunpack.c.l.b16 %v572
        %v932 = vunpack.c.h.b16 %v572
        %v933 = vunpack.c.l.b16 %v573
        %v934 = vunpack.c.h.b16 %v573
        %v935 = vunpack.c.l.b16 %v574
        %v936 = vunpack.c.h.b16 %v574
        %v937 = vunpack.c.l.b16 %v575
        %v938 = vunpack.c.h.b16 %v575
        %v939 = vunpack.c.l.b16 %v576
        %v940 = vunpack.c.h.b16 %v576
        %v941 = vunpack.c.l.b16 %v577
        %v942 = vunpack.c.h.b16 %v577
        %v943 = vunpack.c.l.b16 %v578
        %v944 = vunpack.c.h.b16 %v578
        %v945 = vunpack.c.l.b16 %v579
        %v946 = vunpack.c.h.b16 %v579
        %v947 = vunpack.c.l.b16 %v580
        %v948 = vunpack.c.h.b16 %v580
        %v949 = vunpack.c.l.b16 %v581
        %v950 = vunpack.c.h.b16 %v581
        %v951 = vunpack.c.l.b16 %v582
        %v952 = vunpack.c.h.b16 %v582
        %v953 = vunpack.c.l.b16 %v583
        %v954 = vunpack.c.h.b16 %v583
        %v955 = vunpack.c.l.b16 %v584
        %v956 = vunpack.c.h.b16 %v584
        %v957 = vunpack.c.l.b16 %v585
        %v958 = vunpack.c.h.b16 %v585
        %v959 = vunpack.c.l.b16 %v586
        %v960 = vunpack.c.h.b16 %v586
        %v961 = vunpack.c.l.b16 %v587
        %v962 = vunpack.c.h.b16 %v587
        %v963 = vunpack.c.l.b16 %v588
        %v964 = vunpack.c.h.b16 %v588
        %v965 = vunpack.c.l.b16 %v589
        %v966 = vunpack.c.h.b16 %v589
        %v967 = vunpack.c.l.b16 %v590
        %v968 = vunpack.c.h.b16 %v590
        %v969 = vunpack.c.l.b16 %v591
        %v970 = vunpack.c.h.b16 %v591
        %v971 = vunpack.c.l.b16 %v592
        %v972 = vunpack.c.h.b16 %v592
        %v973 = vunpack.c.l.b16 %v593
        %v974 = vunpack.c.h.b16 %v593
        %v975 = vunpack.c.l.b16 %v594
        %v976 = vunpack.c.h.b16 %v594
        %v977 = vunpack.c.l.b16 %v595
        %v978 = vunpack.c.h.b16 %v595
        %v979 = vunpack.c.l.b16 %v596
        %v980 = vunpack.c.h.b16 %v596
        %v981 = vunpack.c.l.b16 %v597
        %v982 = vunpack.c.h.b16 %v597
        %v983 = vunpack.c.l.b16 %v598
        %v984 = vunpack.c.h.b16 %v598
        %v985 = vunpack.c.l.b16 %v599
        %v986 = vunpack.c.h.b16 %v599
        %v987 = vunpack.c.l.b16 %v600
        %v988 = vunpack.c.h.b16 %v600
        %v989 = vunpack.c.l.b16 %v601
        %v990 = vunpack.c.h.b16 %v601
        %v991 = vunpack.c.l.b16 %v602
        %v992 = vunpack.c.h.b16 %v602
        %v993 = vunpack.c.l.b16 %v603
        %v994 = vunpack.c.h.b16 %v603
        %v995 = vunpack.c.l.b16 %v604
        %v996 = vunpack.c.h.b16 %v604
        %v997 = vunpack.c.l.b16 %v605
        %v998 = vunpack.c.h.b16 %v605
        %v999 = vunpack.c.l.b16 %v606
        %v1000 = vunpack.c.h.b16 %v606
        %v1001 = vunpack.c.l.b16 %v607
        %v1002 = vunpack.c.h.b16 %v607
        %v1003 = vunpack.c.l.b16 %v608
        %v1004 = vunpack.c.h.b16 %v608
        %v1005 = vunpack.c.l.b16 %v609
        %v1006 = vunpack.c.h.b16 %v609
        %v1007 = vunpack.c.l.b16 %v610
        %v1008 = vunpack.c.h.b16 %v610
        %v1009 = vunpack.c.l.b16 %v611
        %v1010 = vunpack.c.h.b16 %v611
        %v1011 = vunpack.c.l.b16 %v612
        %v1012 = vunpack.c.h.b16 %v612
        %v1013 = vunpack.c.l.b16 %v613
        %v1014 = vunpack.c.h.b16 %v613
        %v1015 = vunpack.c.l.b16 %v614
        %v1016 = vunpack.c.h.b16 %v614
        %v1017 = vunpack.c.l.b16 %v615
        %v1018 = vunpack.c.h.b16 %v615
        %v1019 = vunpack.c.l.b16 %v616
        %v1020 = vunpack.c.h.b16 %v616
        %v1021 = vunpack.c.l.b16 %v617
        %v1022 = vunpack.c.h.b16 %v617
        %v1023 = vunpack.c.l.b16 %v618
        %v1024 = vunpack.c.h.b16 %v618
        %v1025 = vpack.c.b16 %v773, %v769
        %v1026 = vpack.c.b16 %v774, %v770
        %v1027 = vpack.c.b16 %v775, %v771
        %v1028 = vpack.c.b16 %v776, %v772
        %v1029 = vpack.c.b16 %v781, %v777
        %v1030 = vpack.c.b16 %v782, %v778
        %v1031 = vpack.c.b16 %v783, %v779
        %v1032 = vpack.c.b16 %v784, %v780
        %v1033 = vpack.c.b16 %v789, %v785
        %v1034 = vpack.c.b16 %v790, %v786
        %v1035 = vpack.c.b16 %v791, %v787
        %v1036 = vpack.c.b16 %v792, %v788
        %v1037 = vpack.c.b16 %v797, %v793
        %v1038 = vpack.c.b16 %v798, %v794
        %v1039 = vpack.c.b16 %v799, %v795
        %v1040 = vpack.c.b16 %v800, %v796
        %v1041 = vpack.c.b16 %v805, %v801
        %v1042 = vpack.c.b16 %v806, %v802
        %v1043 = vpack.c.b16 %v807, %v803
        %v1044 = vpack.c.b16 %v808, %v804
        %v1045 = vpack.c.b16 %v813, %v809
        %v1046 = vpack.c.b16 %v814, %v810
        %v1047 = vpack.c.b16 %v815, %v811
        %v1048 = vpack.c.b16 %v816, %v812
        %v1049 = vpack.c.b16 %v821, %v817
        %v1050 = vpack.c.b16 %v822, %v818
        %v1051 = vpack.c.b16 %v823, %v819
        %v1052 = vpack.c.b16 %v824, %v820
        %v1053 = vpack.c.b16 %v829, %v825
        %v1054 = vpack.c.b16 %v830, %v826
        %v1055 = vpack.c.b16 %v831, %v827
        %v1056 = vpack.c.b16 %v832, %v828
        %v1057 = vpack.c.b16 %v837, %v833
        %v1058 = vpack.c.b16 %v838, %v834
        %v1059 = vpack.c.b16 %v839, %v835
        %v1060 = vpack.c.b16 %v840, %v836
        %v1061 = vpack.c.b16 %v845, %v841
        %v1062 = vpack.c.b16 %v846, %v842
        %v1063 = vpack.c.b16 %v847, %v843
        %v1064 = vpack.c.b16 %v848, %v844
        %v1065 = vpack.c.b16 %v853, %v849
        %v1066 = vpack.c.b16 %v854, %v850
        %v1067 = vpack.c.b16 %v855, %v851
        %v1068 = vpack.c.b16 %v856, %v852
        %v1069 = vpack.c.b16 %v861, %v857
        %v1070 = vpack.c.b16 %v862, %v858
        %v1071 = vpack.c.b16 %v863, %v859
        %v1072 = vpack.c.b16 %v864, %v860
        %v1073 = vpack.c.b16 %v869, %v865
        %v1074 = vpack.c.b16 %v870, %v866
        %v1075 = vpack.c.b16 %v871, %v867
        %v1076 = vpack.c.b16 %v872, %v868
        %v1077 = vpack.c.b16 %v877, %v873
        %v1078 = vpack.c.b16 %v878, %v874
        %v1079 = vpack.c.b16 %v879, %v875
        %v1080 = vpack.c.b16 %v880, %v876
        %v1081 = vpack.c.b16 %v885, %v881
        %v1082 = vpack.c.b16 %v886, %v882
        %v1083 = vpack.c.b16 %v887, %v883
        %v1084 = vpack.c.b16 %v888, %v884
        %v1085 = vpack.c.b16 %v893, %v889
        %v1086 = vpack.c.b16 %v894, %v890
        %v1087 = vpack.c.b16 %v895, %v891
        %v1088 = vpack.c.b16 %v896, %v892
        %v1089 = vpack.c.b16 %v901, %v897
        %v1090 = vpack.c.b16 %v902, %v898
        %v1091 = vpack.c.b16 %v903, %v899
        %v1092 = vpack.c.b16 %v904, %v900
        %v1093 = vpack.c.b16 %v909, %v905
        %v1094 = vpack.c.b16 %v910, %v906
        %v1095 = vpack.c.b16 %v911, %v907
        %v1096 = vpack.c.b16 %v912, %v908
        %v1097 = vpack.c.b16 %v917, %v913
        %v1098 = vpack.c.b16 %v918, %v914
        %v1099 = vpack.c.b16 %v919, %v915
        %v1100 = vpack.c.b16 %v920, %v916
        %v1101 = vpack.c.b16 %v925, %v921
        %v1102 = vpack.c.b16 %v926, %v922
        %v1103 = vpack.c.b16 %v927, %v923
        %v1104 = vpack.c.b16 %v928, %v924
        %v1105 = vpack.c.b16 %v933, %v929
        %v1106 = vpack.c.b16 %v934, %v930
        %v1107 = vpack.c.b16 %v935, %v931
        %v1108 = vpack.c.b16 %v936, %v932
        %v1109 = vpack.c.b16 %v941, %v937
        %v1110 = vpack.c.b16 %v942, %v938
        %v1111 = vpack.c.b16 %v943, %v939
        %v1112 = vpack.c.b16 %v944, %v940
        %v1113 = vpack.c.b16 %v949, %v945
        %v1114 = vpack.c.b16 %v950, %v946
        %v1115 = vpack.c.b16 %v951, %v947
        %v1116 = vpack.c.b16 %v952, %v948
        %v1117 = vpack.c.b16 %v957, %v953
        %v1118 = vpack.c.b16 %v958, %v954
        %v1119 = vpack.c.b16 %v959, %v955
        %v1120 = vpack.c.b16 %v960, %v956
        %v1121 = vpack.c.b16 %v965, %v961
        %v1122 = vpack.c.b16 %v966, %v962
        %v1123 = vpack.c.b16 %v967, %v963
        %v1124 = vpack.c.b16 %v968, %v964
        %v1125 = vpack.c.b16 %v973, %v969
        %v1126 = vpack.c.b16 %v974, %v970
        %v1127 = vpack.c.b16 %v975, %v971
        %v1128 = vpack.c.b16 %v976, %v972
        %v1129 = vpack.c.b16 %v981, %v977
        %v1130 = vpack.c.b16 %v982, %v978
        %v1131 = vpack.c.b16 %v983, %v979
        %v1132 = vpack.c.b16 %v984, %v980
        %v1133 = vpack.c.b16 %v989, %v985
        %v1134 = vpack.c.b16 %v990, %v986
        %v1135 = vpack.c.b16 %v991, %v987
        %v1136 = vpack.c.b16 %v992, %v988
        %v1137 = vpack.c.b16 %v997, %v993
        %v1138 = vpack.c.b16 %v998, %v994
        %v1139 = vpack.c.b16 %v999, %v995
        %v1140 = vpack.c.b16 %v1000, %v996
        %v1141 = vpack.c.b16 %v1005, %v1001
        %v1142 = vpack.c.b16 %v1006, %v1002
        %v1143 = vpack.c.b16 %v1007, %v1003
        %v1144 = vpack.c.b16 %v1008, %v1004
        %v1145 = vpack.c.b16 %v1013, %v1009
        %v1146 = vpack.c.b16 %v1014, %v1010
        %v1147 = vpack.c.b16 %v1015, %v1011
        %v1148 = vpack.c.b16 %v1016, %v1012
        %v1149 = vpack.c.b16 %v1021, %v1017
        %v1150 = vpack.c.b16 %v1022, %v1018
        %v1151 = vpack.c.b16 %v1023, %v1019
        %v1152 = vpack.c.b16 %v1024, %v1020
        %1281 = vmatprep.subr.bf16.mxu0 %v1026
        %1282 = vmatpush1.bf16.msra.mxu0 %v1025
        %1283 = vmatprep.subr.bf16.mxu0 %v1030
        %1284 = vmatpush1.bf16.msra.mxu0 %v1029
        %1285 = vmatprep.subr.bf16.mxu0 %v1034
        %1286 = vmatpush1.bf16.msra.mxu0 %v1033
        %1287 = vmatprep.subr.bf16.mxu0 %v1038
        %1288 = vmatpush1.bf16.msra.mxu0 %v1037
        %1289 = vmatprep.subr.bf16.mxu0 %v1042
        %1290 = vmatpush1.bf16.msra.mxu0 %v1041
        %1291 = vmatprep.subr.bf16.mxu0 %v1046
        %1292 = vmatpush1.bf16.msra.mxu0 %v1045
        %1293 = vmatprep.subr.bf16.mxu0 %v1050
        %1294 = vmatpush1.bf16.msra.mxu0 %v1049
        %1295 = vmatprep.subr.bf16.mxu0 %v1054
        %1296 = vmatpush1.bf16.msra.mxu0 %v1053
        %1297 = vmatprep.subr.bf16.mxu0 %v1058
        %1298 = vmatpush1.bf16.msra.mxu0 %v1057
        %1299 = vmatprep.subr.bf16.mxu0 %v1062
        %1300 = vmatpush1.bf16.msra.mxu0 %v1061
        %1301 = vmatprep.subr.bf16.mxu0 %v1066
        %1302 = vmatpush1.bf16.msra.mxu0 %v1065
        %1303 = vmatprep.subr.bf16.mxu0 %v1070
        %1304 = vmatpush1.bf16.msra.mxu0 %v1069
        %1305 = vmatprep.subr.bf16.mxu0 %v1074
        %1306 = vmatpush1.bf16.msra.mxu0 %v1073
        %1307 = vmatprep.subr.bf16.mxu0 %v1078
        %1308 = vmatpush1.bf16.msra.mxu0 %v1077
        %1309 = vmatprep.subr.bf16.mxu0 %v1082
        %1310 = vmatpush1.bf16.msra.mxu0 %v1081
        %1311 = vmatprep.subr.bf16.mxu0 %v1086
        %1312 = vmatpush1.bf16.msra.mxu0 %v1085
        %1313 = vmatprep.mubr.bf16.mxu0 %v488
        %1314 = vmatmul.mubr.bf16.gmra.mrb[0].mxu0 %v487
        %v1315 = vpop.f32.mrb[0].mxu0
        %v1316 = vadd.f32 %v624, %v1315
        %v1317 = vpop.f32.mrb[0].mxu0
        %v1318 = vadd.f32 %v628, %v1317
        %v1319 = vpop.f32.mrb[0].mxu0
        %v1320 = vpop.f32.mrb[0].mxu0
        %1321 = vdwg.mxu0
        %1322 = vmatprep.subr.bf16.mxu0 %v1090
        %1323 = vmatpush1.bf16.msra.mxu0 %v1089
        %1324 = vmatprep.subr.bf16.mxu0 %v1094
        %1325 = vmatpush1.bf16.msra.mxu0 %v1093
        %1326 = vmatprep.subr.bf16.mxu0 %v1098
        %1327 = vmatpush1.bf16.msra.mxu0 %v1097
        %1328 = vmatprep.subr.bf16.mxu0 %v1102
        %1329 = vmatpush1.bf16.msra.mxu0 %v1101
        %1330 = vmatprep.subr.bf16.mxu0 %v1106
        %1331 = vmatpush1.bf16.msra.mxu0 %v1105
        %1332 = vmatprep.subr.bf16.mxu0 %v1110
        %1333 = vmatpush1.bf16.msra.mxu0 %v1109
        %1334 = vmatprep.subr.bf16.mxu0 %v1114
        %1335 = vmatpush1.bf16.msra.mxu0 %v1113
        %1336 = vmatprep.subr.bf16.mxu0 %v1118
        %1337 = vmatpush1.bf16.msra.mxu0 %v1117
        %1338 = vmatprep.subr.bf16.mxu0 %v1122
        %1339 = vmatpush1.bf16.msra.mxu0 %v1121
        %1340 = vmatprep.subr.bf16.mxu0 %v1126
        %1341 = vmatpush1.bf16.msra.mxu0 %v1125
        %1342 = vmatprep.subr.bf16.mxu0 %v1130
        %1343 = vmatpush1.bf16.msra.mxu0 %v1129
        %1344 = vmatprep.subr.bf16.mxu0 %v1134
        %1345 = vmatpush1.bf16.msra.mxu0 %v1133
        %1346 = vmatprep.subr.bf16.mxu0 %v1138
        %1347 = vmatpush1.bf16.msra.mxu0 %v1137
        %1348 = vmatprep.subr.bf16.mxu0 %v1142
        %1349 = vmatpush1.bf16.msra.mxu0 %v1141
        %1350 = vmatprep.subr.bf16.mxu0 %v1146
        %1351 = vmatpush1.bf16.msra.mxu0 %v1145
        %1352 = vmatprep.subr.bf16.mxu0 %v1150
        %1353 = vmatpush1.bf16.msra.mxu0 %v1149
        %1354 = vmatprep.mubr.bf16.mxu0 %v490
        %1355 = vmatmul.mubr.bf16.gmra.mrb[0].mxu0 %v489
        %v1356 = vpop.f32.mrb[0].mxu0
        %v1357 = vadd.f32 %v1316, %v1356
        %v1358 = vpop.f32.mrb[0].mxu0
        %v1359 = vadd.f32 %v1318, %v1358
        %v1360 = vpop.f32.mrb[0].mxu0
        %v1361 = vpop.f32.mrb[0].mxu0
        %1362 = vdwg.mxu0
        %1363 = vmatprep.subr.bf16.mxu0 %v1028
        %1364 = vmatpush1.bf16.msra.mxu0 %v1027
        %1365 = vmatprep.subr.bf16.mxu0 %v1032
        %1366 = vmatpush1.bf16.msra.mxu0 %v1031
        %1367 = vmatprep.subr.bf16.mxu0 %v1036
        %1368 = vmatpush1.bf16.msra.mxu0 %v1035
        %1369 = vmatprep.subr.bf16.mxu0 %v1040
        %1370 = vmatpush1.bf16.msra.mxu0 %v1039
        %1371 = vmatprep.subr.bf16.mxu0 %v1044
        %1372 = vmatpush1.bf16.msra.mxu0 %v1043
        %1373 = vmatprep.subr.bf16.mxu0 %v1048
        %1374 = vmatpush1.bf16.msra.mxu0 %v1047
        %1375 = vmatprep.subr.bf16.mxu0 %v1052
        %1376 = vmatpush1.bf16.msra.mxu0 %v1051
        %1377 = vmatprep.subr.bf16.mxu0 %v1056
        %1378 = vmatpush1.bf16.msra.mxu0 %v1055
        %1379 = vmatprep.subr.bf16.mxu0 %v1060
        %1380 = vmatpush1.bf16.msra.mxu0 %v1059
        %1381 = vmatprep.subr.bf16.mxu0 %v1064
        %1382 = vmatpush1.bf16.msra.mxu0 %v1063
        %1383 = vmatprep.subr.bf16.mxu0 %v1068
        %1384 = vmatpush1.bf16.msra.mxu0 %v1067
        %1385 = vmatprep.subr.bf16.mxu0 %v1072
        %1386 = vmatpush1.bf16.msra.mxu0 %v1071
        %1387 = vmatprep.subr.bf16.mxu0 %v1076
        %1388 = vmatpush1.bf16.msra.mxu0 %v1075
        %1389 = vmatprep.subr.bf16.mxu0 %v1080
        %1390 = vmatpush1.bf16.msra.mxu0 %v1079
        %1391 = vmatprep.subr.bf16.mxu0 %v1084
        %1392 = vmatpush1.bf16.msra.mxu0 %v1083
        %1393 = vmatprep.subr.bf16.mxu0 %v1088
        %1394 = vmatpush1.bf16.msra.mxu0 %v1087
        %1395 = vmatprep.mubr.bf16.mxu0 %v488
        %1396 = vmatmul.mubr.bf16.gmra.mrb[0].mxu0 %v487
        %v1397 = vpop.f32.mrb[0].mxu0
        %v1398 = vadd.f32 %v632, %v1397
        %v1399 = vpop.f32.mrb[0].mxu0
        %v1400 = vadd.f32 %v636, %v1399
        %v1401 = vpop.f32.mrb[0].mxu0
        %v1402 = vpop.f32.mrb[0].mxu0
        %1403 = vdwg.mxu0
        %1404 = vmatprep.subr.bf16.mxu0 %v1092
        %1405 = vmatpush1.bf16.msra.mxu0 %v1091
        %1406 = vmatprep.subr.bf16.mxu0 %v1096
        %1407 = vmatpush1.bf16.msra.mxu0 %v1095
        %1408 = vmatprep.subr.bf16.mxu0 %v1100
        %1409 = vmatpush1.bf16.msra.mxu0 %v1099
        %1410 = vmatprep.subr.bf16.mxu0 %v1104
        %1411 = vmatpush1.bf16.msra.mxu0 %v1103
        %1412 = vmatprep.subr.bf16.mxu0 %v1108
        %1413 = vmatpush1.bf16.msra.mxu0 %v1107
        %1414 = vmatprep.subr.bf16.mxu0 %v1112
        %1415 = vmatpush1.bf16.msra.mxu0 %v1111
        %1416 = vmatprep.subr.bf16.mxu0 %v1116
        %1417 = vmatpush1.bf16.msra.mxu0 %v1115
        %1418 = vmatprep.subr.bf16.mxu0 %v1120
        %1419 = vmatpush1.bf16.msra.mxu0 %v1119
        %1420 = vmatprep.subr.bf16.mxu0 %v1124
        %1421 = vmatpush1.bf16.msra.mxu0 %v1123
        %1422 = vmatprep.subr.bf16.mxu0 %v1128
        %1423 = vmatpush1.bf16.msra.mxu0 %v1127
        %1424 = vmatprep.subr.bf16.mxu0 %v1132
        %1425 = vmatpush1.bf16.msra.mxu0 %v1131
        %1426 = vmatprep.subr.bf16.mxu0 %v1136
        %1427 = vmatpush1.bf16.msra.mxu0 %v1135
        %1428 = vmatprep.subr.bf16.mxu0 %v1140
        %1429 = vmatpush1.bf16.msra.mxu0 %v1139
        %1430 = vmatprep.subr.bf16.mxu0 %v1144
        %1431 = vmatpush1.bf16.msra.mxu0 %v1143
        %1432 = vmatprep.subr.bf16.mxu0 %v1148
        %1433 = vmatpush1.bf16.msra.mxu0 %v1147
        %1434 = vmatprep.subr.bf16.mxu0 %v1152
        %1435 = vmatpush1.bf16.msra.mxu0 %v1151
        %1436 = vmatprep.mubr.bf16.mxu0 %v490
        %1437 = vmatmul.mubr.bf16.gmra.mrb[0].mxu0 %v489
        %v1438 = vpop.f32.mrb[0].mxu0
        %v1439 = vadd.f32 %v1398, %v1438
        %v1440 = vpop.f32.mrb[0].mxu0
        %v1441 = vadd.f32 %v1400, %v1440
        %v1442 = vpop.f32.mrb[0].mxu0
        %v1443 = vpop.f32.mrb[0].mxu0
        %1444 = vdwg.mxu0
        %v1449 = vcombine.low %v1357, %v1359
        %v1450 = vcombine.low %v1439, %v1441
        %v1452 = vunpack.c.l.s4 1983009808
        %v1453 = vunpack.c.0.s8 %v1452
        %v1454 = vlaneseq
        %v1455 = vshrl.u32 %v1454, 7
        %v1456 = vsub.s32 %v1453, %v1455
        %v1457 = vrot.slane %v1449, %v1456
        %v1459 = vunpack.c.l.s4 1983009808
        %v1460 = vunpack.c.0.s8 %v1459
        %v1461 = vlaneseq
        %v1462 = vshrl.u32 %v1461, 7
        %v1463 = vsub.s32 %v1460, %v1462
        %v1464 = vrot.slane %v1450, %v1463
        %v1465 = vcombine.low %v1457, %v1464
        %1467 = vst [vmem:[%s456] sm:$0xff] %v1465
        %s1468 = sand.u32 %s98, 1
        %s1469 = scalar_lea.sflag [#allocation4], %s1468
        %s1470 = sand.u32 %s98, 1
        %s1471 = smul.addr %s1470, 8
        %s1472 = scalar_lea.vmem [#allocation3], %s1471
        // Predicated region
        $region56: #{model_forward.5} parent=50 // pred_check
          %p1473 = pneg %p108
        $region57: #{model_forward.5} parent=50 // pred_check_branch
          %1475 = sbr.rel (%p1473) target = $region59
        $region58: #{model_forward.5} parent=50 // pred_region
          %s1476 = smul.u32 4, %s17
          %s1478 = ssub.s32 128, 128
          %1479 = vsyncadd %s1469, %s1478
          %s1480 = smul.addr %s1476, 32
          %s1481 = scalar_lea.hbm %s3, %s1480
          %s1483 = sshll.u32 %s1472, 4
          %s1484 = int_to_ptr.vmem [resolvable:$true] %s1483
          %1486 = dma.vmem_to_hbm [thread:$0]  %s1484, 128, %s1481, %s1469
        $region59: #{model_forward.5} parent=50 // pred_fallthru
          _
      $region51: #{model_forward.5} parent=5 // pred_fallthru
        _
      %p1487 = scmp.le.s32.totalorder 2, %s12
      // Predicated region
      $region60: #{model_forward.5} parent=5 // pred_check
        %p1488 = pneg %p1487
      $region61: #{model_forward.5} parent=5 // pred_check_branch
        %1490 = sbr.rel (%p1488) target = $region63
      $region62: #{model_forward.5} parent=5 // pred_region
        %s1491 = ssub.s32 %s12, 2
        // Predicated region
        $region64: #{model_forward.5} parent=62 // pred_check
          %p1492 = pneg %p114
        $region65: #{model_forward.5} parent=62 // pred_check_branch
          %1494 = sbr.rel (%p1492) target = $region67
        $region66: #{model_forward.5} parent=62 // pred_region
          %s1495 = sand.u32 %s99, 1
          %s1496 = scalar_lea.sflag [#allocation4], %s1495
          %s1497 = sand.u32 %s99, 1
          %s1498 = smul.addr %s1497, 8
          %s1499 = scalar_lea.vmem [#allocation3], %s1498
          %1500 = dma.done %s1496, 128
        $region67: #{model_forward.5} parent=62 // pred_fallthru
          _
      $region63: #{model_forward.5} parent=5 // pred_fallthru
        _
    $region6: #{model_forward.5} parent=1 // loop_footer
      %s16 = sadd.s32 1, %s12
    $region7: #{model_forward.5} parent=1 // loop_footer_branch
      %11 = sbr.rel target = $region3
    $region8: #{model_forward.5} parent=1 // loop_exit
      _
    %1501 = vsyncpa [#allocation4], 1
    %s1502 = scalar_lea.sflag [#allocation4], 1
    %1503 = vsyncpa %s1502, 1

// kernel: model_forward.4
$region0: #{model_forward.4}
  #allocation0 [shape = 'u32[]', space=smem, size = 0x4, offset = 0x4, fixed_abs, tag = 'smem constant byte address 0x4 - core index']
  #allocation1 [shape = 'u32[144,128]{1,0:T(1,128)}', space=vmem, size = 0x12000, scoped, tag = 'internal scratch']
  %s0 = inlined_call_operand.vmem [shape: f32[2,512], index: 0, kind: input, shape index: {}]
  %s1 = inlined_call_operand.vmem [shape: bf16[1,512,512], index: 1, kind: input, shape index: {}]
  %s2 = inlined_call_operand.vmem [shape: f32[1,1,512], index: 2, kind: input, shape index: {}]
  %s3 = inlined_call_operand.vmem [shape: f32[1,512], index: 3, kind: input, shape index: {}]
  %s4 = inlined_call_operand.vmem [shape: f32[1,512], index: 4, kind: input, shape index: {}]
  %s5 = inlined_call_operand.vmem [shape: f32[1,512], index: 5, kind: input, shape index: {}]
  %s6 = inlined_call_operand.vmem [shape: f32[1,512], index: 6, kind: input, shape index: {}]
  %s7 = inlined_call_operand.vmem [shape: f32[2,512], index: 7, kind: output, shape index: {}]
  %s8 = sld [smem:[#allocation0]]
  $region38: #{model_forward.4} parent=0
    _
  %s10 = ssub.s32 1, %s8
  %s11 = scalar_select 0, %s10, %s8
  // Predicated region
  $region2: #{model_forward.4} parent=0 // pred_check
    _
  $region3: #{model_forward.4} parent=0 // pred_check_branch
    %13 = sbr.rel (0) target = $region5
  $region4: #{model_forward.4} parent=0 // pred_region
    _
  $region5: #{model_forward.4} parent=0 // pred_fallthru
    _
  // Predicated region
  $region6: #{model_forward.4} parent=0 // pred_check
    _
  $region7: #{model_forward.4} parent=0 // pred_check_branch
    %15 = sbr.rel (0) target = $region9
  $region8: #{model_forward.4} parent=0 // pred_region
    _
  $region9: #{model_forward.4} parent=0 // pred_fallthru
    _
  // Predicated region
  $region10: #{model_forward.4} parent=0 // pred_check
    _
  $region11: #{model_forward.4} parent=0 // pred_check_branch
    %17 = sbr.rel (0) target = $region13
  $region12: #{model_forward.4} parent=0 // pred_region
    _
  $region13: #{model_forward.4} parent=0 // pred_fallthru
    _
  // Predicated region
  $region14: #{model_forward.4} parent=0 // pred_check
    _
  $region15: #{model_forward.4} parent=0 // pred_check_branch
    %19 = sbr.rel (0) target = $region17
  $region16: #{model_forward.4} parent=0 // pred_region
    _
  $region17: #{model_forward.4} parent=0 // pred_fallthru
    _
  // Predicated region
  $region18: #{model_forward.4} parent=0 // pred_check
    _
  $region19: #{model_forward.4} parent=0 // pred_check_branch
    %21 = sbr.rel (0) target = $region21
  $region20: #{model_forward.4} parent=0 // pred_region
    _
  $region21: #{model_forward.4} parent=0 // pred_fallthru
    _
  // Predicated region
  $region22: #{model_forward.4} parent=0 // pred_check
    _
  $region23: #{model_forward.4} parent=0 // pred_check_branch
    %23 = sbr.rel (0) target = $region25
  $region24: #{model_forward.4} parent=0 // pred_region
    _
  $region25: #{model_forward.4} parent=0 // pred_fallthru
    _
  // Predicated region
  $region26: #{model_forward.4} parent=0 // pred_check
    _
  $region27: #{model_forward.4} parent=0 // pred_check_branch
    %25 = sbr.rel (0) target = $region29
  $region28: #{model_forward.4} parent=0 // pred_region
    _
  $region29: #{model_forward.4} parent=0 // pred_fallthru
    _
  %v26 = vld [vmem:[%s0] sm:$0xff]
  %v27 = vld [vmem:[%s3] sm:$0xf]
  %v28 = vld [vmem:[%s4] sm:$0xf]
  %v29 = vld [vmem:[%s1] sm:$0xff]
  %v30 = vld [vmem:[%s1 + $0x8] sm:$0xff]
  %v31 = vld [vmem:[%s1 + $0x10] sm:$0xff]
  %v32 = vld [vmem:[%s1 + $0x18] sm:$0xff]
  %v33 = vld [vmem:[%s1 + $0x20] sm:$0xff]
  %v34 = vld [vmem:[%s1 + $0x28] sm:$0xff]
  %v35 = vld [vmem:[%s1 + $0x30] sm:$0xff]
  %v36 = vld [vmem:[%s1 + $0x38] sm:$0xff]
  %v37 = vld [vmem:[%s1 + $0x40] sm:$0xff]
  %v38 = vld [vmem:[%s1 + $0x48] sm:$0xff]
  %v39 = vld [vmem:[%s1 + $0x50] sm:$0xff]
  %v40 = vld [vmem:[%s1 + $0x58] sm:$0xff]
  %v41 = vld [vmem:[%s1 + $0x60] sm:$0xff]
  %v42 = vld [vmem:[%s1 + $0x68] sm:$0xff]
  %v43 = vld [vmem:[%s1 + $0x70] sm:$0xff]
  %v44 = vld [vmem:[%s1 + $0x78] sm:$0xff]
  %v45 = vld [vmem:[%s1 + $0x80] sm:$0xff]
  %v46 = vld [vmem:[%s1 + $0x88] sm:$0xff]
  %v47 = vld [vmem:[%s1 + $0x90] sm:$0xff]
  %v48 = vld [vmem:[%s1 + $0x98] sm:$0xff]
  %v49 = vld [vmem:[%s1 + $0xa0] sm:$0xff]
  %v50 = vld [vmem:[%s1 + $0xa8] sm:$0xff]
  %v51 = vld [vmem:[%s1 + $0xb0] sm:$0xff]
  %v52 = vld [vmem:[%s1 + $0xb8] sm:$0xff]
  %v53 = vld [vmem:[%s1 + $0xc0] sm:$0xff]
  %v54 = vld [vmem:[%s1 + $0xc8] sm:$0xff]
  %v55 = vld [vmem:[%s1 + $0xd0] sm:$0xff]
  %v56 = vld [vmem:[%s1 + $0xd8] sm:$0xff]
  %v57 = vld [vmem:[%s1 + $0xe0] sm:$0xff]
  %v58 = vld [vmem:[%s1 + $0xe8] sm:$0xff]
  %v59 = vld [vmem:[%s1 + $0xf0] sm:$0xff]
  %v60 = vld [vmem:[%s1 + $0xf8] sm:$0xff]
  %v61 = vld [vmem:[%s1 + $0x100] sm:$0xff]
  %v62 = vld [vmem:[%s1 + $0x108] sm:$0xff]
  %v63 = vld [vmem:[%s1 + $0x110] sm:$0xff]
  %v64 = vld [vmem:[%s1 + $0x118] sm:$0xff]
  %v65 = vld [vmem:[%s1 + $0x120] sm:$0xff]
  %v66 = vld [vmem:[%s1 + $0x128] sm:$0xff]
  %v67 = vld [vmem:[%s1 + $0x130] sm:$0xff]
  %v68 = vld [vmem:[%s1 + $0x138] sm:$0xff]
  %v69 = vld [vmem:[%s1 + $0x140] sm:$0xff]
  %v70 = vld [vmem:[%s1 + $0x148] sm:$0xff]
  %v71 = vld [vmem:[%s1 + $0x150] sm:$0xff]
  %v72 = vld [vmem:[%s1 + $0x158] sm:$0xff]
  %v73 = vld [vmem:[%s1 + $0x160] sm:$0xff]
  %v74 = vld [vmem:[%s1 + $0x168] sm:$0xff]
  %v75 = vld [vmem:[%s1 + $0x170] sm:$0xff]
  %v76 = vld [vmem:[%s1 + $0x178] sm:$0xff]
  %v77 = vld [vmem:[%s1 + $0x180] sm:$0xff]
  %v78 = vld [vmem:[%s1 + $0x188] sm:$0xff]
  %v79 = vld [vmem:[%s1 + $0x190] sm:$0xff]
  %v80 = vld [vmem:[%s1 + $0x198] sm:$0xff]
  %v81 = vld [vmem:[%s1 + $0x1a0] sm:$0xff]
  %v82 = vld [vmem:[%s1 + $0x1a8] sm:$0xff]
  %v83 = vld [vmem:[%s1 + $0x1b0] sm:$0xff]
  %v84 = vld [vmem:[%s1 + $0x1b8] sm:$0xff]
  %v85 = vld [vmem:[%s1 + $0x1c0] sm:$0xff]
  %v86 = vld [vmem:[%s1 + $0x1c8] sm:$0xff]
  %v87 = vld [vmem:[%s1 + $0x1d0] sm:$0xff]
  %v88 = vld [vmem:[%s1 + $0x1d8] sm:$0xff]
  %v89 = vld [vmem:[%s1 + $0x1e0] sm:$0xff]
  %v90 = vld [vmem:[%s1 + $0x1e8] sm:$0xff]
  %v91 = vld [vmem:[%s1 + $0x1f0] sm:$0xff]
  %v92 = vld [vmem:[%s1 + $0x1f8] sm:$0xff]
  %v93 = vld [vmem:[%s1 + $0x200] sm:$0xff]
  %v94 = vld [vmem:[%s1 + $0x208] sm:$0xff]
  %v95 = vld [vmem:[%s1 + $0x210] sm:$0xff]
  %v96 = vld [vmem:[%s1 + $0x218] sm:$0xff]
  %v97 = vld [vmem:[%s1 + $0x220] sm:$0xff]
  %v98 = vld [vmem:[%s1 + $0x228] sm:$0xff]
  %v99 = vld [vmem:[%s1 + $0x230] sm:$0xff]
  %v100 = vld [vmem:[%s1 + $0x238] sm:$0xff]
  %v101 = vld [vmem:[%s1 + $0x240] sm:$0xff]
  %v102 = vld [vmem:[%s1 + $0x248] sm:$0xff]
  %v103 = vld [vmem:[%s1 + $0x250] sm:$0xff]
  %v104 = vld [vmem:[%s1 + $0x258] sm:$0xff]
  %v105 = vld [vmem:[%s1 + $0x260] sm:$0xff]
  %v106 = vld [vmem:[%s1 + $0x268] sm:$0xff]
  %v107 = vld [vmem:[%s1 + $0x270] sm:$0xff]
  %v108 = vld [vmem:[%s1 + $0x278] sm:$0xff]
  %v109 = vld [vmem:[%s1 + $0x280] sm:$0xff]
  %v110 = vld [vmem:[%s1 + $0x288] sm:$0xff]
  %v111 = vld [vmem:[%s1 + $0x290] sm:$0xff]
  %v112 = vld [vmem:[%s1 + $0x298] sm:$0xff]
  %v113 = vld [vmem:[%s1 + $0x2a0] sm:$0xff]
  %v114 = vld [vmem:[%s1 + $0x2a8] sm:$0xff]
  %v115 = vld [vmem:[%s1 + $0x2b0] sm:$0xff]
  %v116 = vld [vmem:[%s1 + $0x2b8] sm:$0xff]
  %v117 = vld [vmem:[%s1 + $0x2c0] sm:$0xff]
  %v118 = vld [vmem:[%s1 + $0x2c8] sm:$0xff]
  %v119 = vld [vmem:[%s1 + $0x2d0] sm:$0xff]
  %v120 = vld [vmem:[%s1 + $0x2d8] sm:$0xff]
  %v121 = vld [vmem:[%s1 + $0x2e0] sm:$0xff]
  %v122 = vld [vmem:[%s1 + $0x2e8] sm:$0xff]
  %v123 = vld [vmem:[%s1 + $0x2f0] sm:$0xff]
  %v124 = vld [vmem:[%s1 + $0x2f8] sm:$0xff]
  %v125 = vld [vmem:[%s1 + $0x300] sm:$0xff]
  %v126 = vld [vmem:[%s1 + $0x308] sm:$0xff]
  %v127 = vld [vmem:[%s1 + $0x310] sm:$0xff]
  %v128 = vld [vmem:[%s1 + $0x318] sm:$0xff]
  %v129 = vld [vmem:[%s1 + $0x320] sm:$0xff]
  %v130 = vld [vmem:[%s1 + $0x328] sm:$0xff]
  %v131 = vld [vmem:[%s1 + $0x330] sm:$0xff]
  %v132 = vld [vmem:[%s1 + $0x338] sm:$0xff]
  %v133 = vld [vmem:[%s1 + $0x340] sm:$0xff]
  %v134 = vld [vmem:[%s1 + $0x348] sm:$0xff]
  %v135 = vld [vmem:[%s1 + $0x350] sm:$0xff]
  %v136 = vld [vmem:[%s1 + $0x358] sm:$0xff]
  %v137 = vld [vmem:[%s1 + $0x360] sm:$0xff]
  %v138 = vld [vmem:[%s1 + $0x368] sm:$0xff]
  %v139 = vld [vmem:[%s1 + $0x370] sm:$0xff]
  %v140 = vld [vmem:[%s1 + $0x378] sm:$0xff]
  %v141 = vld [vmem:[%s1 + $0x380] sm:$0xff]
  %v142 = vld [vmem:[%s1 + $0x388] sm:$0xff]
  %v143 = vld [vmem:[%s1 + $0x390] sm:$0xff]
  %v144 = vld [vmem:[%s1 + $0x398] sm:$0xff]
  %v145 = vld [vmem:[%s1 + $0x3a0] sm:$0xff]
  %v146 = vld [vmem:[%s1 + $0x3a8] sm:$0xff]
  %v147 = vld [vmem:[%s1 + $0x3b0] sm:$0xff]
  %v148 = vld [vmem:[%s1 + $0x3b8] sm:$0xff]
  %v149 = vld [vmem:[%s1 + $0x3c0] sm:$0xff]
  %v150 = vld [vmem:[%s1 + $0x3c8] sm:$0xff]
  %v151 = vld [vmem:[%s1 + $0x3d0] sm:$0xff]
  %v152 = vld [vmem:[%s1 + $0x3d8] sm:$0xff]
  %v153 = vld [vmem:[%s1 + $0x3e0] sm:$0xff]
  %v154 = vld [vmem:[%s1 + $0x3e8] sm:$0xff]
  %v155 = vld [vmem:[%s1 + $0x3f0] sm:$0xff]
  %v156 = vld [vmem:[%s1 + $0x3f8] sm:$0xff]
  %v157 = vld [vmem:[%s2] sm:$0xf]
  %v159 = vcombine.high %v26, %v26
  %v161 = vunpack.c.l.s4 1983009808
  %v162 = vunpack.c.0.s8 %v161
  %v163 = vlaneseq
  %v164 = vshrl.u32 %v163, 7
  %v165 = vsub.s32 %v162, %v164
  %v166 = vrot.slane %v26, %v165
  %v168 = vunpack.c.l.s4 1983009808
  %v169 = vunpack.c.0.s8 %v168
  %v170 = vlaneseq
  %v171 = vshrl.u32 %v170, 7
  %v172 = vsub.s32 %v169, %v171
  %v173 = vrot.slane %v159, %v172
  %v174 = vcombine.high %v166, %v166
  %v175 = vcombine.high %v173, %v173
  %vm180 = vcmask 1041408
  %v181 = vsel %vm180, %v166, 0.0
  %v182 = vsel %vm180, %v174, 0.0
  %v183 = vadd.f32 %v181, %v182
  %v184 = vsel %vm180, %v173, 0.0
  %v185 = vadd.f32 %v183, %v184
  %v186 = vsel %vm180, %v175, 0.0
  %v187 = vadd.f32 %v185, %v186
  %188 = vadd.xlane.f32.xlu0 %v187
  %v189 = vpop.xlane.xlu0 %188
  %v190 = vrcp.pop 512.0
  %v191 = vmul.f32 %v189, %v190
  %v194 = vunpack.c.l.s4 269488144
  %v195 = vunpack.c.0.s8 %v194
  %v196 = vlaneseq
  %v197 = vshrl.u32 %v196, 7
  %v198 = vsub.s32 %v195, %v197
  %v199 = vrot.slane %v191, %v198
  %v201 = vsub.f32 %v26, %v199
  %v202 = vmul.f32 %v201, %v201
  %v204 = vcombine.high %v202, %v202
  %v206 = vunpack.c.l.s4 1983009808
  %v207 = vunpack.c.0.s8 %v206
  %v208 = vlaneseq
  %v209 = vshrl.u32 %v208, 7
  %v210 = vsub.s32 %v207, %v209
  %v211 = vrot.slane %v202, %v210
  %v213 = vunpack.c.l.s4 1983009808
  %v214 = vunpack.c.0.s8 %v213
  %v215 = vlaneseq
  %v216 = vshrl.u32 %v215, 7
  %v217 = vsub.s32 %v214, %v216
  %v218 = vrot.slane %v204, %v217
  %v219 = vcombine.high %v211, %v211
  %v220 = vcombine.high %v218, %v218
  %v225 = vsel %vm180, %v211, 0.0
  %v226 = vsel %vm180, %v219, 0.0
  %v227 = vadd.f32 %v225, %v226
  %v228 = vsel %vm180, %v218, 0.0
  %v229 = vadd.f32 %v227, %v228
  %v230 = vsel %vm180, %v220, 0.0
  %v231 = vadd.f32 %v229, %v230
  %232 = vadd.xlane.f32.xlu0 %v231
  %v233 = vpop.xlane.xlu0 %232
  %v234 = vmul.f32 %v233, %v190
  %v235 = vadd.f32 %v234, 1e-05
  %v236 = vrsqrt.pop %v235
  %v239 = vunpack.c.l.s4 269488144
  %v240 = vunpack.c.0.s8 %v239
  %v241 = vlaneseq
  %v242 = vshrl.u32 %v241, 7
  %v243 = vsub.s32 %v240, %v242
  %v244 = vrot.slane %v236, %v243
  %v246 = vmul.f32 %v201, %v244
  %v248 = vlaneseq
  %v249 = vshrl.u32 %v248, 7
  %v250 = vsub.s32 0, %v249
  %v251 = vrot.slane %v27, %v250
  %v252 = vlaneseq
  %v253 = vshrl.u32 %v252, 7
  %v254 = vsub.s32 1, %v253
  %v255 = vrot.slane %v27, %v254
  %v256 = vlaneseq
  %v257 = vshrl.u32 %v256, 7
  %v258 = vsub.s32 2, %v257
  %v259 = vrot.slane %v27, %v258
  %v260 = vlaneseq
  %v261 = vshrl.u32 %v260, 7
  %v262 = vsub.s32 3, %v261
  %v263 = vrot.slane %v27, %v262
  %v264 = vcombine.low %v251, %v255
  %v265 = vcombine.low %v259, %v263
  %v267 = vunpack.c.l.s4 1983009808
  %v268 = vunpack.c.0.s8 %v267
  %v269 = vlaneseq
  %v270 = vshrl.u32 %v269, 7
  %v271 = vsub.s32 %v268, %v270
  %v272 = vrot.slane %v264, %v271
  %v274 = vunpack.c.l.s4 1983009808
  %v275 = vunpack.c.0.s8 %v274
  %v276 = vlaneseq
  %v277 = vshrl.u32 %v276, 7
  %v278 = vsub.s32 %v275, %v277
  %v279 = vrot.slane %v265, %v278
  %v280 = vcombine.low %v272, %v279
  %v282 = vmul.f32 %v246, %v280
  %v284 = vlaneseq
  %v285 = vshrl.u32 %v284, 7
  %v286 = vsub.s32 0, %v285
  %v287 = vrot.slane %v28, %v286
  %v288 = vlaneseq
  %v289 = vshrl.u32 %v288, 7
  %v290 = vsub.s32 1, %v289
  %v291 = vrot.slane %v28, %v290
  %v292 = vlaneseq
  %v293 = vshrl.u32 %v292, 7
  %v294 = vsub.s32 2, %v293
  %v295 = vrot.slane %v28, %v294
  %v296 = vlaneseq
  %v297 = vshrl.u32 %v296, 7
  %v298 = vsub.s32 3, %v297
  %v299 = vrot.slane %v28, %v298
  %v300 = vcombine.low %v287, %v291
  %v301 = vcombine.low %v295, %v299
  %v303 = vunpack.c.l.s4 1983009808
  %v304 = vunpack.c.0.s8 %v303
  %v305 = vlaneseq
  %v306 = vshrl.u32 %v305, 7
  %v307 = vsub.s32 %v304, %v306
  %v308 = vrot.slane %v300, %v307
  %v310 = vunpack.c.l.s4 1983009808
  %v311 = vunpack.c.0.s8 %v310
  %v312 = vlaneseq
  %v313 = vshrl.u32 %v312, 7
  %v314 = vsub.s32 %v311, %v313
  %v315 = vrot.slane %v301, %v314
  %v316 = vcombine.low %v308, %v315
  %v318 = vadd.f32 %v282, %v316
  %v320 = vcombine.high %v318, %v318
  %v322 = vunpack.c.l.s4 1983009808
  %v323 = vunpack.c.0.s8 %v322
  %v324 = vlaneseq
  %v325 = vshrl.u32 %v324, 7
  %v326 = vsub.s32 %v323, %v325
  %v327 = vrot.slane %v318, %v326
  %v329 = vunpack.c.l.s4 1983009808
  %v330 = vunpack.c.0.s8 %v329
  %v331 = vlaneseq
  %v332 = vshrl.u32 %v331, 7
  %v333 = vsub.s32 %v330, %v332
  %v334 = vrot.slane %v320, %v333
  %v335 = vcombine.high %v327, %v327
  %v336 = vcombine.high %v334, %v334
  %v341 = vpack.c.bf16 %v327, %v327
  %v342 = vpack.c.bf16 %v335, %v335
  %v343 = vpack.c.bf16 %v334, %v334
  %v344 = vpack.c.bf16 %v336, %v336
  %v346 = vlaneseq
  %v347 = vshrl.u32 %v346, 7
  %v348 = vsub.s32 0, %v347
  %v349 = vrot.slane %v157, %v348
  %v350 = vlaneseq
  %v351 = vshrl.u32 %v350, 7
  %v352 = vsub.s32 1, %v351
  %v353 = vrot.slane %v157, %v352
  %v354 = vlaneseq
  %v355 = vshrl.u32 %v354, 7
  %v356 = vsub.s32 2, %v355
  %v357 = vrot.slane %v157, %v356
  %v358 = vlaneseq
  %v359 = vshrl.u32 %v358, 7
  %v360 = vsub.s32 3, %v359
  %v361 = vrot.slane %v157, %v360
  %v494 = vunpack.c.l.b16 %v29
  %v495 = vunpack.c.h.b16 %v29
  %v496 = vunpack.c.l.b16 %v30
  %v497 = vunpack.c.h.b16 %v30
  %v498 = vunpack.c.l.b16 %v31
  %v499 = vunpack.c.h.b16 %v31
  %v500 = vunpack.c.l.b16 %v32
  %v501 = vunpack.c.h.b16 %v32
  %v502 = vunpack.c.l.b16 %v33
  %v503 = vunpack.c.h.b16 %v33
  %v504 = vunpack.c.l.b16 %v34
  %v505 = vunpack.c.h.b16 %v34
  %v506 = vunpack.c.l.b16 %v35
  %v507 = vunpack.c.h.b16 %v35
  %v508 = vunpack.c.l.b16 %v36
  %v509 = vunpack.c.h.b16 %v36
  %v510 = vunpack.c.l.b16 %v37
  %v511 = vunpack.c.h.b16 %v37
  %v512 = vunpack.c.l.b16 %v38
  %v513 = vunpack.c.h.b16 %v38
  %v514 = vunpack.c.l.b16 %v39
  %v515 = vunpack.c.h.b16 %v39
  %v516 = vunpack.c.l.b16 %v40
  %v517 = vunpack.c.h.b16 %v40
  %v518 = vunpack.c.l.b16 %v41
  %v519 = vunpack.c.h.b16 %v41
  %v520 = vunpack.c.l.b16 %v42
  %v521 = vunpack.c.h.b16 %v42
  %v522 = vunpack.c.l.b16 %v43
  %v523 = vunpack.c.h.b16 %v43
  %v524 = vunpack.c.l.b16 %v44
  %v525 = vunpack.c.h.b16 %v44
  %v526 = vunpack.c.l.b16 %v45
  %v527 = vunpack.c.h.b16 %v45
  %v528 = vunpack.c.l.b16 %v46
  %v529 = vunpack.c.h.b16 %v46
  %v530 = vunpack.c.l.b16 %v47
  %v531 = vunpack.c.h.b16 %v47
  %v532 = vunpack.c.l.b16 %v48
  %v533 = vunpack.c.h.b16 %v48
  %v534 = vunpack.c.l.b16 %v49
  %v535 = vunpack.c.h.b16 %v49
  %v536 = vunpack.c.l.b16 %v50
  %v537 = vunpack.c.h.b16 %v50
  %v538 = vunpack.c.l.b16 %v51
  %v539 = vunpack.c.h.b16 %v51
  %v540 = vunpack.c.l.b16 %v52
  %v541 = vunpack.c.h.b16 %v52
  %v542 = vunpack.c.l.b16 %v53
  %v543 = vunpack.c.h.b16 %v53
  %v544 = vunpack.c.l.b16 %v54
  %v545 = vunpack.c.h.b16 %v54
  %v546 = vunpack.c.l.b16 %v55
  %v547 = vunpack.c.h.b16 %v55
  %v548 = vunpack.c.l.b16 %v56
  %v549 = vunpack.c.h.b16 %v56
  %v550 = vunpack.c.l.b16 %v57
  %v551 = vunpack.c.h.b16 %v57
  %v552 = vunpack.c.l.b16 %v58
  %v553 = vunpack.c.h.b16 %v58
  %v554 = vunpack.c.l.b16 %v59
  %v555 = vunpack.c.h.b16 %v59
  %v556 = vunpack.c.l.b16 %v60
  %v557 = vunpack.c.h.b16 %v60
  %v558 = vunpack.c.l.b16 %v61
  %v559 = vunpack.c.h.b16 %v61
  %v560 = vunpack.c.l.b16 %v62
  %v561 = vunpack.c.h.b16 %v62
  %v562 = vunpack.c.l.b16 %v63
  %v563 = vunpack.c.h.b16 %v63
  %v564 = vunpack.c.l.b16 %v64
  %v565 = vunpack.c.h.b16 %v64
  %v566 = vunpack.c.l.b16 %v65
  %v567 = vunpack.c.h.b16 %v65
  %v568 = vunpack.c.l.b16 %v66
  %v569 = vunpack.c.h.b16 %v66
  %v570 = vunpack.c.l.b16 %v67
  %v571 = vunpack.c.h.b16 %v67
  %v572 = vunpack.c.l.b16 %v68
  %v573 = vunpack.c.h.b16 %v68
  %v574 = vunpack.c.l.b16 %v69
  %v575 = vunpack.c.h.b16 %v69
  %v576 = vunpack.c.l.b16 %v70
  %v577 = vunpack.c.h.b16 %v70
  %v578 = vunpack.c.l.b16 %v71
  %v579 = vunpack.c.h.b16 %v71
  %v580 = vunpack.c.l.b16 %v72
  %v581 = vunpack.c.h.b16 %v72
  %v582 = vunpack.c.l.b16 %v73
  %v583 = vunpack.c.h.b16 %v73
  %v584 = vunpack.c.l.b16 %v74
  %v585 = vunpack.c.h.b16 %v74
  %v586 = vunpack.c.l.b16 %v75
  %v587 = vunpack.c.h.b16 %v75
  %v588 = vunpack.c.l.b16 %v76
  %v589 = vunpack.c.h.b16 %v76
  %v590 = vunpack.c.l.b16 %v77
  %v591 = vunpack.c.h.b16 %v77
  %v592 = vunpack.c.l.b16 %v78
  %v593 = vunpack.c.h.b16 %v78
  %v594 = vunpack.c.l.b16 %v79
  %v595 = vunpack.c.h.b16 %v79
  %v596 = vunpack.c.l.b16 %v80
  %v597 = vunpack.c.h.b16 %v80
  %v598 = vunpack.c.l.b16 %v81
  %v599 = vunpack.c.h.b16 %v81
  %v600 = vunpack.c.l.b16 %v82
  %v601 = vunpack.c.h.b16 %v82
  %v602 = vunpack.c.l.b16 %v83
  %v603 = vunpack.c.h.b16 %v83
  %v604 = vunpack.c.l.b16 %v84
  %v605 = vunpack.c.h.b16 %v84
  %v606 = vunpack.c.l.b16 %v85
  %v607 = vunpack.c.h.b16 %v85
  %v608 = vunpack.c.l.b16 %v86
  %v609 = vunpack.c.h.b16 %v86
  %v610 = vunpack.c.l.b16 %v87
  %v611 = vunpack.c.h.b16 %v87
  %v612 = vunpack.c.l.b16 %v88
  %v613 = vunpack.c.h.b16 %v88
  %v614 = vunpack.c.l.b16 %v89
  %v615 = vunpack.c.h.b16 %v89
  %v616 = vunpack.c.l.b16 %v90
  %v617 = vunpack.c.h.b16 %v90
  %v618 = vunpack.c.l.b16 %v91
  %v619 = vunpack.c.h.b16 %v91
  %v620 = vunpack.c.l.b16 %v92
  %v621 = vunpack.c.h.b16 %v92
  %v622 = vunpack.c.l.b16 %v93
  %v623 = vunpack.c.h.b16 %v93
  %v624 = vunpack.c.l.b16 %v94
  %v625 = vunpack.c.h.b16 %v94
  %v626 = vunpack.c.l.b16 %v95
  %v627 = vunpack.c.h.b16 %v95
  %v628 = vunpack.c.l.b16 %v96
  %v629 = vunpack.c.h.b16 %v96
  %v630 = vunpack.c.l.b16 %v97
  %v631 = vunpack.c.h.b16 %v97
  %v632 = vunpack.c.l.b16 %v98
  %v633 = vunpack.c.h.b16 %v98
  %v634 = vunpack.c.l.b16 %v99
  %v635 = vunpack.c.h.b16 %v99
  %v636 = vunpack.c.l.b16 %v100
  %v637 = vunpack.c.h.b16 %v100
  %v638 = vunpack.c.l.b16 %v101
  %v639 = vunpack.c.h.b16 %v101
  %v640 = vunpack.c.l.b16 %v102
  %v641 = vunpack.c.h.b16 %v102
  %v642 = vunpack.c.l.b16 %v103
  %v643 = vunpack.c.h.b16 %v103
  %v644 = vunpack.c.l.b16 %v104
  %v645 = vunpack.c.h.b16 %v104
  %v646 = vunpack.c.l.b16 %v105
  %v647 = vunpack.c.h.b16 %v105
  %v648 = vunpack.c.l.b16 %v106
  %v649 = vunpack.c.h.b16 %v106
  %v650 = vunpack.c.l.b16 %v107
  %v651 = vunpack.c.h.b16 %v107
  %v652 = vunpack.c.l.b16 %v108
  %v653 = vunpack.c.h.b16 %v108
  %v654 = vunpack.c.l.b16 %v109
  %v655 = vunpack.c.h.b16 %v109
  %v656 = vunpack.c.l.b16 %v110
  %v657 = vunpack.c.h.b16 %v110
  %v658 = vunpack.c.l.b16 %v111
  %v659 = vunpack.c.h.b16 %v111
  %v660 = vunpack.c.l.b16 %v112
  %v661 = vunpack.c.h.b16 %v112
  %v662 = vunpack.c.l.b16 %v113
  %v663 = vunpack.c.h.b16 %v113
  %v664 = vunpack.c.l.b16 %v114
  %v665 = vunpack.c.h.b16 %v114
  %v666 = vunpack.c.l.b16 %v115
  %v667 = vunpack.c.h.b16 %v115
  %v668 = vunpack.c.l.b16 %v116
  %v669 = vunpack.c.h.b16 %v116
  %v670 = vunpack.c.l.b16 %v117
  %v671 = vunpack.c.h.b16 %v117
  %v672 = vunpack.c.l.b16 %v118
  %v673 = vunpack.c.h.b16 %v118
  %v674 = vunpack.c.l.b16 %v119
  %v675 = vunpack.c.h.b16 %v119
  %v676 = vunpack.c.l.b16 %v120
  %v677 = vunpack.c.h.b16 %v120
  %v678 = vunpack.c.l.b16 %v121
  %v679 = vunpack.c.h.b16 %v121
  %v680 = vunpack.c.l.b16 %v122
  %v681 = vunpack.c.h.b16 %v122
  %v682 = vunpack.c.l.b16 %v123
  %v683 = vunpack.c.h.b16 %v123
  %v684 = vunpack.c.l.b16 %v124
  %v685 = vunpack.c.h.b16 %v124
  %v686 = vunpack.c.l.b16 %v125
  %v687 = vunpack.c.h.b16 %v125
  %v688 = vunpack.c.l.b16 %v126
  %v689 = vunpack.c.h.b16 %v126
  %v690 = vunpack.c.l.b16 %v127
  %v691 = vunpack.c.h.b16 %v127
  %v692 = vunpack.c.l.b16 %v128
  %v693 = vunpack.c.h.b16 %v128
  %v694 = vunpack.c.l.b16 %v129
  %v695 = vunpack.c.h.b16 %v129
  %v696 = vunpack.c.l.b16 %v130
  %v697 = vunpack.c.h.b16 %v130
  %v698 = vunpack.c.l.b16 %v131
  %v699 = vunpack.c.h.b16 %v131
  %v700 = vunpack.c.l.b16 %v132
  %v701 = vunpack.c.h.b16 %v132
  %v702 = vunpack.c.l.b16 %v133
  %v703 = vunpack.c.h.b16 %v133
  %v704 = vunpack.c.l.b16 %v134
  %v705 = vunpack.c.h.b16 %v134
  %v706 = vunpack.c.l.b16 %v135
  %v707 = vunpack.c.h.b16 %v135
  %v708 = vunpack.c.l.b16 %v136
  %v709 = vunpack.c.h.b16 %v136
  %v710 = vunpack.c.l.b16 %v137
  %v711 = vunpack.c.h.b16 %v137
  %v712 = vunpack.c.l.b16 %v138
  %v713 = vunpack.c.h.b16 %v138
  %v714 = vunpack.c.l.b16 %v139
  %v715 = vunpack.c.h.b16 %v139
  %v716 = vunpack.c.l.b16 %v140
  %v717 = vunpack.c.h.b16 %v140
  %v718 = vunpack.c.l.b16 %v141
  %v719 = vunpack.c.h.b16 %v141
  %v720 = vunpack.c.l.b16 %v142
  %v721 = vunpack.c.h.b16 %v142
  %v722 = vunpack.c.l.b16 %v143
  %v723 = vunpack.c.h.b16 %v143
  %v724 = vunpack.c.l.b16 %v144
  %v725 = vunpack.c.h.b16 %v144
  %v726 = vunpack.c.l.b16 %v145
  %v727 = vunpack.c.h.b16 %v145
  %v728 = vunpack.c.l.b16 %v146
  %v729 = vunpack.c.h.b16 %v146
  %v730 = vunpack.c.l.b16 %v147
  %v731 = vunpack.c.h.b16 %v147
  %v732 = vunpack.c.l.b16 %v148
  %v733 = vunpack.c.h.b16 %v148
  %v734 = vunpack.c.l.b16 %v149
  %v735 = vunpack.c.h.b16 %v149
  %v736 = vunpack.c.l.b16 %v150
  %v737 = vunpack.c.h.b16 %v150
  %v738 = vunpack.c.l.b16 %v151
  %v739 = vunpack.c.h.b16 %v151
  %v740 = vunpack.c.l.b16 %v152
  %v741 = vunpack.c.h.b16 %v152
  %v742 = vunpack.c.l.b16 %v153
  %v743 = vunpack.c.h.b16 %v153
  %v744 = vunpack.c.l.b16 %v154
  %v745 = vunpack.c.h.b16 %v154
  %v746 = vunpack.c.l.b16 %v155
  %v747 = vunpack.c.h.b16 %v155
  %v748 = vunpack.c.l.b16 %v156
  %v749 = vunpack.c.h.b16 %v156
  %v750 = vpack.c.b16 %v498, %v494
  %v751 = vpack.c.b16 %v499, %v495
  %v752 = vpack.c.b16 %v500, %v496
  %v753 = vpack.c.b16 %v501, %v497
  %v754 = vpack.c.b16 %v506, %v502
  %v755 = vpack.c.b16 %v507, %v503
  %v756 = vpack.c.b16 %v508, %v504
  %v757 = vpack.c.b16 %v509, %v505
  %v758 = vpack.c.b16 %v514, %v510
  %v759 = vpack.c.b16 %v515, %v511
  %v760 = vpack.c.b16 %v516, %v512
  %v761 = vpack.c.b16 %v517, %v513
  %v762 = vpack.c.b16 %v522, %v518
  %v763 = vpack.c.b16 %v523, %v519
  %v764 = vpack.c.b16 %v524, %v520
  %v765 = vpack.c.b16 %v525, %v521
  %v766 = vpack.c.b16 %v530, %v526
  %v767 = vpack.c.b16 %v531, %v527
  %v768 = vpack.c.b16 %v532, %v528
  %v769 = vpack.c.b16 %v533, %v529
  %v770 = vpack.c.b16 %v538, %v534
  %v771 = vpack.c.b16 %v539, %v535
  %v772 = vpack.c.b16 %v540, %v536
  %v773 = vpack.c.b16 %v541, %v537
  %v774 = vpack.c.b16 %v546, %v542
  %v775 = vpack.c.b16 %v547, %v543
  %v776 = vpack.c.b16 %v548, %v544
  %v777 = vpack.c.b16 %v549, %v545
  %v778 = vpack.c.b16 %v554, %v550
  %v779 = vpack.c.b16 %v555, %v551
  %v780 = vpack.c.b16 %v556, %v552
  %v781 = vpack.c.b16 %v557, %v553
  %v782 = vpack.c.b16 %v562, %v558
  %v783 = vpack.c.b16 %v563, %v559
  %v784 = vpack.c.b16 %v564, %v560
  %v785 = vpack.c.b16 %v565, %v561
  %v786 = vpack.c.b16 %v570, %v566
  %v787 = vpack.c.b16 %v571, %v567
  %v788 = vpack.c.b16 %v572, %v568
  %v789 = vpack.c.b16 %v573, %v569
  %v790 = vpack.c.b16 %v578, %v574
  %v791 = vpack.c.b16 %v579, %v575
  %v792 = vpack.c.b16 %v580, %v576
  %v793 = vpack.c.b16 %v581, %v577
  %v794 = vpack.c.b16 %v586, %v582
  %v795 = vpack.c.b16 %v587, %v583
  %v796 = vpack.c.b16 %v588, %v584
  %v797 = vpack.c.b16 %v589, %v585
  %v798 = vpack.c.b16 %v594, %v590
  %v799 = vpack.c.b16 %v595, %v591
  %v800 = vpack.c.b16 %v596, %v592
  %v801 = vpack.c.b16 %v597, %v593
  %v802 = vpack.c.b16 %v602, %v598
  %v803 = vpack.c.b16 %v603, %v599
  %v804 = vpack.c.b16 %v604, %v600
  %v805 = vpack.c.b16 %v605, %v601
  %v806 = vpack.c.b16 %v610, %v606
  %v807 = vpack.c.b16 %v611, %v607
  %v808 = vpack.c.b16 %v612, %v608
  %v809 = vpack.c.b16 %v613, %v609
  %v810 = vpack.c.b16 %v618, %v614
  %v811 = vpack.c.b16 %v619, %v615
  %v812 = vpack.c.b16 %v620, %v616
  %v813 = vpack.c.b16 %v621, %v617
  %v814 = vpack.c.b16 %v626, %v622
  %v815 = vpack.c.b16 %v627, %v623
  %v816 = vpack.c.b16 %v628, %v624
  %v817 = vpack.c.b16 %v629, %v625
  %v818 = vpack.c.b16 %v634, %v630
  %v819 = vpack.c.b16 %v635, %v631
  %v820 = vpack.c.b16 %v636, %v632
  %v821 = vpack.c.b16 %v637, %v633
  %v822 = vpack.c.b16 %v642, %v638
  %v823 = vpack.c.b16 %v643, %v639
  %v824 = vpack.c.b16 %v644, %v640
  %v825 = vpack.c.b16 %v645, %v641
  %v826 = vpack.c.b16 %v650, %v646
  %v827 = vpack.c.b16 %v651, %v647
  %v828 = vpack.c.b16 %v652, %v648
  %v829 = vpack.c.b16 %v653, %v649
  %v830 = vpack.c.b16 %v658, %v654
  %v831 = vpack.c.b16 %v659, %v655
  %v832 = vpack.c.b16 %v660, %v656
  %v833 = vpack.c.b16 %v661, %v657
  %v834 = vpack.c.b16 %v666, %v662
  %v835 = vpack.c.b16 %v667, %v663
  %v836 = vpack.c.b16 %v668, %v664
  %v837 = vpack.c.b16 %v669, %v665
  %v838 = vpack.c.b16 %v674, %v670
  %v839 = vpack.c.b16 %v675, %v671
  %v840 = vpack.c.b16 %v676, %v672
  %v841 = vpack.c.b16 %v677, %v673
  %v842 = vpack.c.b16 %v682, %v678
  %v843 = vpack.c.b16 %v683, %v679
  %v844 = vpack.c.b16 %v684, %v680
  %v845 = vpack.c.b16 %v685, %v681
  %v846 = vpack.c.b16 %v690, %v686
  %v847 = vpack.c.b16 %v691, %v687
  %v848 = vpack.c.b16 %v692, %v688
  %v849 = vpack.c.b16 %v693, %v689
  %v850 = vpack.c.b16 %v698, %v694
  %v851 = vpack.c.b16 %v699, %v695
  %v852 = vpack.c.b16 %v700, %v696
  %v853 = vpack.c.b16 %v701, %v697
  %v854 = vpack.c.b16 %v706, %v702
  %v855 = vpack.c.b16 %v707, %v703
  %v856 = vpack.c.b16 %v708, %v704
  %v857 = vpack.c.b16 %v709, %v705
  %v858 = vpack.c.b16 %v714, %v710
  %v859 = vpack.c.b16 %v715, %v711
  %v860 = vpack.c.b16 %v716, %v712
  %v861 = vpack.c.b16 %v717, %v713
  %v862 = vpack.c.b16 %v722, %v718
  %v863 = vpack.c.b16 %v723, %v719
  %v864 = vpack.c.b16 %v724, %v720
  %v865 = vpack.c.b16 %v725, %v721
  %v866 = vpack.c.b16 %v730, %v726
  %v867 = vpack.c.b16 %v731, %v727
  %v868 = vpack.c.b16 %v732, %v728
  %v869 = vpack.c.b16 %v733, %v729
  %v870 = vpack.c.b16 %v738, %v734
  %v871 = vpack.c.b16 %v739, %v735
  %v872 = vpack.c.b16 %v740, %v736
  %v873 = vpack.c.b16 %v741, %v737
  %v874 = vpack.c.b16 %v746, %v742
  %v875 = vpack.c.b16 %v747, %v743
  %v876 = vpack.c.b16 %v748, %v744
  %v877 = vpack.c.b16 %v749, %v745
  %1006 = vmatprep.subr.bf16.mxu0 %v751
  %1007 = vmatpush1.bf16.msra.mxu0 %v750
  %1008 = vmatprep.subr.bf16.mxu0 %v755
  %1009 = vmatpush1.bf16.msra.mxu0 %v754
  %1010 = vmatprep.subr.bf16.mxu0 %v759
  %1011 = vmatpush1.bf16.msra.mxu0 %v758
  %1012 = vmatprep.subr.bf16.mxu0 %v763
  %1013 = vmatpush1.bf16.msra.mxu0 %v762
  %1014 = vmatprep.subr.bf16.mxu0 %v767
  %1015 = vmatpush1.bf16.msra.mxu0 %v766
  %1016 = vmatprep.subr.bf16.mxu0 %v771
  %1017 = vmatpush1.bf16.msra.mxu0 %v770
  %1018 = vmatprep.subr.bf16.mxu0 %v775
  %1019 = vmatpush1.bf16.msra.mxu0 %v774
  %1020 = vmatprep.subr.bf16.mxu0 %v779
  %1021 = vmatpush1.bf16.msra.mxu0 %v778
  %1022 = vmatprep.subr.bf16.mxu0 %v783
  %1023 = vmatpush1.bf16.msra.mxu0 %v782
  %1024 = vmatprep.subr.bf16.mxu0 %v787
  %1025 = vmatpush1.bf16.msra.mxu0 %v786
  %1026 = vmatprep.subr.bf16.mxu0 %v791
  %1027 = vmatpush1.bf16.msra.mxu0 %v790
  %1028 = vmatprep.subr.bf16.mxu0 %v795
  %1029 = vmatpush1.bf16.msra.mxu0 %v794
  %1030 = vmatprep.subr.bf16.mxu0 %v799
  %1031 = vmatpush1.bf16.msra.mxu0 %v798
  %1032 = vmatprep.subr.bf16.mxu0 %v803
  %1033 = vmatpush1.bf16.msra.mxu0 %v802
  %1034 = vmatprep.subr.bf16.mxu0 %v807
  %1035 = vmatpush1.bf16.msra.mxu0 %v806
  %1036 = vmatprep.subr.bf16.mxu0 %v811
  %1037 = vmatpush1.bf16.msra.mxu0 %v810
  %1038 = vmatprep.mubr.bf16.mxu0 %v342
  %1039 = vmatmul.mubr.bf16.gmra.mrb[0].mxu0 %v341
  %v1040 = vpop.f32.mrb[0].mxu0
  %v1041 = vadd.f32 %v349, %v1040
  %v1042 = vpop.f32.mrb[0].mxu0
  %v1043 = vadd.f32 %v353, %v1042
  %v1044 = vpop.f32.mrb[0].mxu0
  %v1045 = vpop.f32.mrb[0].mxu0
  %1046 = vdwg.mxu0
  %1047 = vmatprep.subr.bf16.mxu0 %v815
  %1048 = vmatpush1.bf16.msra.mxu0 %v814
  %1049 = vmatprep.subr.bf16.mxu0 %v819
  %1050 = vmatpush1.bf16.msra.mxu0 %v818
  %1051 = vmatprep.subr.bf16.mxu0 %v823
  %1052 = vmatpush1.bf16.msra.mxu0 %v822
  %1053 = vmatprep.subr.bf16.mxu0 %v827
  %1054 = vmatpush1.bf16.msra.mxu0 %v826
  %1055 = vmatprep.subr.bf16.mxu0 %v831
  %1056 = vmatpush1.bf16.msra.mxu0 %v830
  %1057 = vmatprep.subr.bf16.mxu0 %v835
  %1058 = vmatpush1.bf16.msra.mxu0 %v834
  %1059 = vmatprep.subr.bf16.mxu0 %v839
  %1060 = vmatpush1.bf16.msra.mxu0 %v838
  %1061 = vmatprep.subr.bf16.mxu0 %v843
  %1062 = vmatpush1.bf16.msra.mxu0 %v842
  %1063 = vmatprep.subr.bf16.mxu0 %v847
  %1064 = vmatpush1.bf16.msra.mxu0 %v846
  %1065 = vmatprep.subr.bf16.mxu0 %v851
  %1066 = vmatpush1.bf16.msra.mxu0 %v850
  %1067 = vmatprep.subr.bf16.mxu0 %v855
  %1068 = vmatpush1.bf16.msra.mxu0 %v854
  %1069 = vmatprep.subr.bf16.mxu0 %v859
  %1070 = vmatpush1.bf16.msra.mxu0 %v858
  %1071 = vmatprep.subr.bf16.mxu0 %v863
  %1072 = vmatpush1.bf16.msra.mxu0 %v862
  %1073 = vmatprep.subr.bf16.mxu0 %v867
  %1074 = vmatpush1.bf16.msra.mxu0 %v866
  %1075 = vmatprep.subr.bf16.mxu0 %v871
  %1076 = vmatpush1.bf16.msra.mxu0 %v870
  %1077 = vmatprep.subr.bf16.mxu0 %v875
  %1078 = vmatpush1.bf16.msra.mxu0 %v874
  %1079 = vmatprep.mubr.bf16.mxu0 %v344
  %1080 = vmatmul.mubr.bf16.gmra.mrb[0].mxu0 %v343
  %v1081 = vpop.f32.mrb[0].mxu0
  %v1082 = vadd.f32 %v1041, %v1081
  %v1083 = vpop.f32.mrb[0].mxu0
  %v1084 = vadd.f32 %v1043, %v1083
  %v1085 = vpop.f32.mrb[0].mxu0
  %v1086 = vpop.f32.mrb[0].mxu0
  %1087 = vdwg.mxu0
  %1088 = vmatprep.subr.bf16.mxu0 %v753
  %1089 = vmatpush1.bf16.msra.mxu0 %v752
  %1090 = vmatprep.subr.bf16.mxu0 %v757
  %1091 = vmatpush1.bf16.msra.mxu0 %v756
  %1092 = vmatprep.subr.bf16.mxu0 %v761
  %1093 = vmatpush1.bf16.msra.mxu0 %v760
  %1094 = vmatprep.subr.bf16.mxu0 %v765
  %1095 = vmatpush1.bf16.msra.mxu0 %v764
  %1096 = vmatprep.subr.bf16.mxu0 %v769
  %1097 = vmatpush1.bf16.msra.mxu0 %v768
  %1098 = vmatprep.subr.bf16.mxu0 %v773
  %1099 = vmatpush1.bf16.msra.mxu0 %v772
  %1100 = vmatprep.subr.bf16.mxu0 %v777
  %1101 = vmatpush1.bf16.msra.mxu0 %v776
  %1102 = vmatprep.subr.bf16.mxu0 %v781
  %1103 = vmatpush1.bf16.msra.mxu0 %v780
  %1104 = vmatprep.subr.bf16.mxu0 %v785
  %1105 = vmatpush1.bf16.msra.mxu0 %v784
  %1106 = vmatprep.subr.bf16.mxu0 %v789
  %1107 = vmatpush1.bf16.msra.mxu0 %v788
  %1108 = vmatprep.subr.bf16.mxu0 %v793
  %1109 = vmatpush1.bf16.msra.mxu0 %v792
  %1110 = vmatprep.subr.bf16.mxu0 %v797
  %1111 = vmatpush1.bf16.msra.mxu0 %v796
  %1112 = vmatprep.subr.bf16.mxu0 %v801
  %1113 = vmatpush1.bf16.msra.mxu0 %v800
  %1114 = vmatprep.subr.bf16.mxu0 %v805
  %1115 = vmatpush1.bf16.msra.mxu0 %v804
  %1116 = vmatprep.subr.bf16.mxu0 %v809
  %1117 = vmatpush1.bf16.msra.mxu0 %v808
  %1118 = vmatprep.subr.bf16.mxu0 %v813
  %1119 = vmatpush1.bf16.msra.mxu0 %v812
  %1120 = vmatprep.mubr.bf16.mxu0 %v342
  %1121 = vmatmul.mubr.bf16.gmra.mrb[0].mxu0 %v341
  %v1122 = vpop.f32.mrb[0].mxu0
  %v1123 = vadd.f32 %v357, %v1122
  %v1124 = vpop.f32.mrb[0].mxu0
  %v1125 = vadd.f32 %v361, %v1124
  %v1126 = vpop.f32.mrb[0].mxu0
  %v1127 = vpop.f32.mrb[0].mxu0
  %1128 = vdwg.mxu0
  %1129 = vmatprep.subr.bf16.mxu0 %v817
  %1130 = vmatpush1.bf16.msra.mxu0 %v816
  %1131 = vmatprep.subr.bf16.mxu0 %v821
  %1132 = vmatpush1.bf16.msra.mxu0 %v820
  %1133 = vmatprep.subr.bf16.mxu0 %v825
  %1134 = vmatpush1.bf16.msra.mxu0 %v824
  %1135 = vmatprep.subr.bf16.mxu0 %v829
  %1136 = vmatpush1.bf16.msra.mxu0 %v828
  %1137 = vmatprep.subr.bf16.mxu0 %v833
  %1138 = vmatpush1.bf16.msra.mxu0 %v832
  %1139 = vmatprep.subr.bf16.mxu0 %v837
  %1140 = vmatpush1.bf16.msra.mxu0 %v836
  %1141 = vmatprep.subr.bf16.mxu0 %v841
  %1142 = vmatpush1.bf16.msra.mxu0 %v840
  %1143 = vmatprep.subr.bf16.mxu0 %v845
  %1144 = vmatpush1.bf16.msra.mxu0 %v844
  %1145 = vmatprep.subr.bf16.mxu0 %v849
  %1146 = vmatpush1.bf16.msra.mxu0 %v848
  %1147 = vmatprep.subr.bf16.mxu0 %v853
  %1148 = vmatpush1.bf16.msra.mxu0 %v852
  %1149 = vmatprep.subr.bf16.mxu0 %v857
  %1150 = vmatpush1.bf16.msra.mxu0 %v856
  %1151 = vmatprep.subr.bf16.mxu0 %v861
  %1152 = vmatpush1.bf16.msra.mxu0 %v860
  %1153 = vmatprep.subr.bf16.mxu0 %v865
  %1154 = vmatpush1.bf16.msra.mxu0 %v864
  %1155 = vmatprep.subr.bf16.mxu0 %v869
  %1156 = vmatpush1.bf16.msra.mxu0 %v868
  %1157 = vmatprep.subr.bf16.mxu0 %v873
  %1158 = vmatpush1.bf16.msra.mxu0 %v872
  %1159 = vmatprep.subr.bf16.mxu0 %v877
  %1160 = vmatpush1.bf16.msra.mxu0 %v876
  %1161 = vmatprep.mubr.bf16.mxu0 %v344
  %1162 = vmatmul.mubr.bf16.gmra.mrb[0].mxu0 %v343
  %v1163 = vpop.f32.mrb[0].mxu0
  %v1164 = vadd.f32 %v1123, %v1163
  %v1165 = vpop.f32.mrb[0].mxu0
  %v1166 = vadd.f32 %v1125, %v1165
  %v1167 = vpop.f32.mrb[0].mxu0
  %v1168 = vpop.f32.mrb[0].mxu0
  %1169 = vdwg.mxu0
  %v1170 = vxor.u32 %v1082, 2147483648
  %v1171 = vxor.u32 %v1084, 2147483648
  %v1172 = vxor.u32 %v1164, 2147483648
  %v1173 = vxor.u32 %v1166, 2147483648
  %v1174 = vmul.f32 %v1170, 1.442695
  %v1175 = vpow.pop %v1174
  %v1176 = vmul.f32 %v1171, 1.442695
  %v1177 = vpow.pop %v1176
  %v1178 = vmul.f32 %v1172, 1.442695
  %v1179 = vpow.pop %v1178
  %v1180 = vmul.f32 %v1173, 1.442695
  %v1181 = vpow.pop %v1180
  %v1182 = vadd.f32 %v1175, 1.0
  %v1183 = vadd.f32 %v1177, 1.0
  %v1184 = vadd.f32 %v1179, 1.0
  %v1185 = vadd.f32 %v1181, 1.0
  %v1186 = vrcp.pop %v1182
  %v1187 = vmul.f32 1.0, %v1186
  %v1188 = vrcp.pop %v1183
  %v1189 = vmul.f32 1.0, %v1188
  %v1190 = vrcp.pop %v1184
  %v1191 = vmul.f32 1.0, %v1190
  %v1192 = vrcp.pop %v1185
  %v1193 = vmul.f32 1.0, %v1192
  %v1194 = vmul.f32 %v1082, %v1187
  %v1195 = vmul.f32 %v1084, %v1189
  %v1196 = vmul.f32 %v1164, %v1191
  %v1197 = vmul.f32 %v1166, %v1193
  %v1198 = vpack.c.bf16 %v1194, %v1194
  %v1199 = vpack.c.bf16 %v1195, %v1195
  %v1200 = vpack.c.bf16 %v1196, %v1196
  %v1201 = vpack.c.bf16 %v1197, %v1197
  %1202 = vmatprep.subr.bf16.mxu0 %v751
  %1203 = vmatpush1.bf16.msra.mxu0 %v750
  %1204 = vmatprep.subr.bf16.mxu0 %v755
  %1205 = vmatpush1.bf16.msra.mxu0 %v754
  %1206 = vmatprep.subr.bf16.mxu0 %v759
  %1207 = vmatpush1.bf16.msra.mxu0 %v758
  %1208 = vmatprep.subr.bf16.mxu0 %v763
  %1209 = vmatpush1.bf16.msra.mxu0 %v762
  %1210 = vmatprep.subr.bf16.mxu0 %v767
  %1211 = vmatpush1.bf16.msra.mxu0 %v766
  %1212 = vmatprep.subr.bf16.mxu0 %v771
  %1213 = vmatpush1.bf16.msra.mxu0 %v770
  %1214 = vmatprep.subr.bf16.mxu0 %v775
  %1215 = vmatpush1.bf16.msra.mxu0 %v774
  %1216 = vmatprep.subr.bf16.mxu0 %v779
  %1217 = vmatpush1.bf16.msra.mxu0 %v778
  %1218 = vmatprep.subr.bf16.mxu0 %v783
  %1219 = vmatpush1.bf16.msra.mxu0 %v782
  %1220 = vmatprep.subr.bf16.mxu0 %v787
  %1221 = vmatpush1.bf16.msra.mxu0 %v786
  %1222 = vmatprep.subr.bf16.mxu0 %v791
  %1223 = vmatpush1.bf16.msra.mxu0 %v790
  %1224 = vmatprep.subr.bf16.mxu0 %v795
  %1225 = vmatpush1.bf16.msra.mxu0 %v794
  %1226 = vmatprep.subr.bf16.mxu0 %v799
  %1227 = vmatpush1.bf16.msra.mxu0 %v798
  %1228 = vmatprep.subr.bf16.mxu0 %v803
  %1229 = vmatpush1.bf16.msra.mxu0 %v802
  %1230 = vmatprep.subr.bf16.mxu0 %v807
  %1231 = vmatpush1.bf16.msra.mxu0 %v806
  %1232 = vmatprep.subr.bf16.mxu0 %v811
  %1233 = vmatpush1.bf16.msra.mxu0 %v810
  %1234 = vmatprep.mubr.bf16.mxu0 %v1199
  %1235 = vmatmul.mubr.bf16.gmra.mrb[0].mxu0 %v1198
  %v1236 = vpop.f32.mrb[0].mxu0
  %v1237 = vadd.f32 %v349, %v1236
  %v1238 = vpop.f32.mrb[0].mxu0
  %v1239 = vadd.f32 %v353, %v1238
  %v1240 = vpop.f32.mrb[0].mxu0
  %v1241 = vpop.f32.mrb[0].mxu0
  %1242 = vdwg.mxu0
  %1243 = vmatprep.subr.bf16.mxu0 %v815
  %1244 = vmatpush1.bf16.msra.mxu0 %v814
  %1245 = vmatprep.subr.bf16.mxu0 %v819
  %1246 = vmatpush1.bf16.msra.mxu0 %v818
  %1247 = vmatprep.subr.bf16.mxu0 %v823
  %1248 = vmatpush1.bf16.msra.mxu0 %v822
  %1249 = vmatprep.subr.bf16.mxu0 %v827
  %1250 = vmatpush1.bf16.msra.mxu0 %v826
  %1251 = vmatprep.subr.bf16.mxu0 %v831
  %1252 = vmatpush1.bf16.msra.mxu0 %v830
  %1253 = vmatprep.subr.bf16.mxu0 %v835
  %1254 = vmatpush1.bf16.msra.mxu0 %v834
  %1255 = vmatprep.subr.bf16.mxu0 %v839
  %1256 = vmatpush1.bf16.msra.mxu0 %v838
  %1257 = vmatprep.subr.bf16.mxu0 %v843
  %1258 = vmatpush1.bf16.msra.mxu0 %v842
  %1259 = vmatprep.subr.bf16.mxu0 %v847
  %1260 = vmatpush1.bf16.msra.mxu0 %v846
  %1261 = vmatprep.subr.bf16.mxu0 %v851
  %1262 = vmatpush1.bf16.msra.mxu0 %v850
  %1263 = vmatprep.subr.bf16.mxu0 %v855
  %1264 = vmatpush1.bf16.msra.mxu0 %v854
  %1265 = vmatprep.subr.bf16.mxu0 %v859
  %1266 = vmatpush1.bf16.msra.mxu0 %v858
  %1267 = vmatprep.subr.bf16.mxu0 %v863
  %1268 = vmatpush1.bf16.msra.mxu0 %v862
  %1269 = vmatprep.subr.bf16.mxu0 %v867
  %1270 = vmatpush1.bf16.msra.mxu0 %v866
  %1271 = vmatprep.subr.bf16.mxu0 %v871
  %1272 = vmatpush1.bf16.msra.mxu0 %v870
  %1273 = vmatprep.subr.bf16.mxu0 %v875
  %1274 = vmatpush1.bf16.msra.mxu0 %v874
  %1275 = vmatprep.mubr.bf16.mxu0 %v1201
  %1276 = vmatmul.mubr.bf16.gmra.mrb[0].mxu0 %v1200
  %v1277 = vpop.f32.mrb[0].mxu0
  %v1278 = vadd.f32 %v1237, %v1277
  %v1279 = vpop.f32.mrb[0].mxu0
  %v1280 = vadd.f32 %v1239, %v1279
  %v1281 = vpop.f32.mrb[0].mxu0
  %v1282 = vpop.f32.mrb[0].mxu0
  %1283 = vdwg.mxu0
  %1284 = vmatprep.subr.bf16.mxu0 %v753
  %1285 = vmatpush1.bf16.msra.mxu0 %v752
  %1286 = vmatprep.subr.bf16.mxu0 %v757
  %1287 = vmatpush1.bf16.msra.mxu0 %v756
  %1288 = vmatprep.subr.bf16.mxu0 %v761
  %1289 = vmatpush1.bf16.msra.mxu0 %v760
  %1290 = vmatprep.subr.bf16.mxu0 %v765
  %1291 = vmatpush1.bf16.msra.mxu0 %v764
  %1292 = vmatprep.subr.bf16.mxu0 %v769
  %1293 = vmatpush1.bf16.msra.mxu0 %v768
  %1294 = vmatprep.subr.bf16.mxu0 %v773
  %1295 = vmatpush1.bf16.msra.mxu0 %v772
  %1296 = vmatprep.subr.bf16.mxu0 %v777
  %1297 = vmatpush1.bf16.msra.mxu0 %v776
  %1298 = vmatprep.subr.bf16.mxu0 %v781
  %1299 = vmatpush1.bf16.msra.mxu0 %v780
  %1300 = vmatprep.subr.bf16.mxu0 %v785
  %1301 = vmatpush1.bf16.msra.mxu0 %v784
  %1302 = vmatprep.subr.bf16.mxu0 %v789
  %1303 = vmatpush1.bf16.msra.mxu0 %v788
  %1304 = vmatprep.subr.bf16.mxu0 %v793
  %1305 = vmatpush1.bf16.msra.mxu0 %v792
  %1306 = vmatprep.subr.bf16.mxu0 %v797
  %1307 = vmatpush1.bf16.msra.mxu0 %v796
  %1308 = vmatprep.subr.bf16.mxu0 %v801
  %1309 = vmatpush1.bf16.msra.mxu0 %v800
  %1310 = vmatprep.subr.bf16.mxu0 %v805
  %1311 = vmatpush1.bf16.msra.mxu0 %v804
  %1312 = vmatprep.subr.bf16.mxu0 %v809
  %1313 = vmatpush1.bf16.msra.mxu0 %v808
  %1314 = vmatprep.subr.bf16.mxu0 %v813
  %1315 = vmatpush1.bf16.msra.mxu0 %v812
  %1316 = vmatprep.mubr.bf16.mxu0 %v1199
  %1317 = vmatmul.mubr.bf16.gmra.mrb[0].mxu0 %v1198
  %v1318 = vpop.f32.mrb[0].mxu0
  %v1319 = vadd.f32 %v357, %v1318
  %v1320 = vpop.f32.mrb[0].mxu0
  %v1321 = vadd.f32 %v361, %v1320
  %v1322 = vpop.f32.mrb[0].mxu0
  %v1323 = vpop.f32.mrb[0].mxu0
  %1324 = vdwg.mxu0
  %1325 = vmatprep.subr.bf16.mxu0 %v817
  %1326 = vmatpush1.bf16.msra.mxu0 %v816
  %1327 = vmatprep.subr.bf16.mxu0 %v821
  %1328 = vmatpush1.bf16.msra.mxu0 %v820
  %1329 = vmatprep.subr.bf16.mxu0 %v825
  %1330 = vmatpush1.bf16.msra.mxu0 %v824
  %1331 = vmatprep.subr.bf16.mxu0 %v829
  %1332 = vmatpush1.bf16.msra.mxu0 %v828
  %1333 = vmatprep.subr.bf16.mxu0 %v833
  %1334 = vmatpush1.bf16.msra.mxu0 %v832
  %1335 = vmatprep.subr.bf16.mxu0 %v837
  %1336 = vmatpush1.bf16.msra.mxu0 %v836
  %1337 = vmatprep.subr.bf16.mxu0 %v841
  %1338 = vmatpush1.bf16.msra.mxu0 %v840
  %1339 = vmatprep.subr.bf16.mxu0 %v845
  %1340 = vmatpush1.bf16.msra.mxu0 %v844
  %1341 = vmatprep.subr.bf16.mxu0 %v849
  %1342 = vmatpush1.bf16.msra.mxu0 %v848
  %1343 = vmatprep.subr.bf16.mxu0 %v853
  %1344 = vmatpush1.bf16.msra.mxu0 %v852
  %1345 = vmatprep.subr.bf16.mxu0 %v857
  %1346 = vmatpush1.bf16.msra.mxu0 %v856
  %1347 = vmatprep.subr.bf16.mxu0 %v861
  %1348 = vmatpush1.bf16.msra.mxu0 %v860
  %1349 = vmatprep.subr.bf16.mxu0 %v865
  %1350 = vmatpush1.bf16.msra.mxu0 %v864
  %1351 = vmatprep.subr.bf16.mxu0 %v869
  %1352 = vmatpush1.bf16.msra.mxu0 %v868
  %1353 = vmatprep.subr.bf16.mxu0 %v873
  %1354 = vmatpush1.bf16.msra.mxu0 %v872
  %1355 = vmatprep.subr.bf16.mxu0 %v877
  %1356 = vmatpush1.bf16.msra.mxu0 %v876
  %1357 = vmatprep.mubr.bf16.mxu0 %v1201
  %1358 = vmatmul.mubr.bf16.gmra.mrb[0].mxu0 %v1200
  %v1359 = vpop.f32.mrb[0].mxu0
  %v1360 = vadd.f32 %v1319, %v1359
  %v1361 = vpop.f32.mrb[0].mxu0
  %v1362 = vadd.f32 %v1321, %v1361
  %v1363 = vpop.f32.mrb[0].mxu0
  %v1364 = vpop.f32.mrb[0].mxu0
  %1365 = vdwg.mxu0
  %v1366 = vxor.u32 %v1278, 2147483648
  %v1367 = vxor.u32 %v1280, 2147483648
  %v1368 = vxor.u32 %v1360, 2147483648
  %v1369 = vxor.u32 %v1362, 2147483648
  %v1370 = vmul.f32 %v1366, 1.442695
  %v1371 = vpow.pop %v1370
  %v1372 = vmul.f32 %v1367, 1.442695
  %v1373 = vpow.pop %v1372
  %v1374 = vmul.f32 %v1368, 1.442695
  %v1375 = vpow.pop %v1374
  %v1376 = vmul.f32 %v1369, 1.442695
  %v1377 = vpow.pop %v1376
  %v1378 = vadd.f32 %v1371, 1.0
  %v1379 = vadd.f32 %v1373, 1.0
  %v1380 = vadd.f32 %v1375, 1.0
  %v1381 = vadd.f32 %v1377, 1.0
  %v1382 = vrcp.pop %v1378
  %v1383 = vmul.f32 1.0, %v1382
  %v1384 = vrcp.pop %v1379
  %v1385 = vmul.f32 1.0, %v1384
  %v1386 = vrcp.pop %v1380
  %v1387 = vmul.f32 1.0, %v1386
  %v1388 = vrcp.pop %v1381
  %v1389 = vmul.f32 1.0, %v1388
  %v1390 = vmul.f32 %v1278, %v1383
  %v1391 = vmul.f32 %v1280, %v1385
  %v1392 = vmul.f32 %v1360, %v1387
  %v1393 = vmul.f32 %v1362, %v1389
  %v1394 = vsub.f32 %v1390, %v327
  %v1395 = vsub.f32 %v1391, %v335
  %v1396 = vsub.f32 %v1392, %v334
  %v1397 = vsub.f32 %v1393, %v336
  %v1398 = vmul.f32 %v1394, 0.5
  %v1399 = vmul.f32 %v1395, 0.5
  %v1400 = vmul.f32 %v1396, 0.5
  %v1401 = vmul.f32 %v1397, 0.5
  %v1406 = vcombine.low %v1398, %v1399
  %v1407 = vcombine.low %v1400, %v1401
  %v1409 = vunpack.c.l.s4 1983009808
  %v1410 = vunpack.c.0.s8 %v1409
  %v1411 = vlaneseq
  %v1412 = vshrl.u32 %v1411, 7
  %v1413 = vsub.s32 %v1410, %v1412
  %v1414 = vrot.slane %v1406, %v1413
  %v1416 = vunpack.c.l.s4 1983009808
  %v1417 = vunpack.c.0.s8 %v1416
  %v1418 = vlaneseq
  %v1419 = vshrl.u32 %v1418, 7
  %v1420 = vsub.s32 %v1417, %v1419
  %v1421 = vrot.slane %v1407, %v1420
  %v1422 = vcombine.low %v1414, %v1421
  %v1424 = vadd.f32 %v26, %v1422
  %v1426 = vcombine.high %v1424, %v1424
  %v1428 = vunpack.c.l.s4 1983009808
  %v1429 = vunpack.c.0.s8 %v1428
  %v1430 = vlaneseq
  %v1431 = vshrl.u32 %v1430, 7
  %v1432 = vsub.s32 %v1429, %v1431
  %v1433 = vrot.slane %v1424, %v1432
  %v1435 = vunpack.c.l.s4 1983009808
  %v1436 = vunpack.c.0.s8 %v1435
  %v1437 = vlaneseq
  %v1438 = vshrl.u32 %v1437, 7
  %v1439 = vsub.s32 %v1436, %v1438
  %v1440 = vrot.slane %v1426, %v1439
  %v1441 = vcombine.high %v1433, %v1433
  %v1442 = vcombine.high %v1440, %v1440
  %v1447 = vsel %vm180, %v1433, 0.0
  %v1448 = vsel %vm180, %v1441, 0.0
  %v1449 = vadd.f32 %v1447, %v1448
  %v1450 = vsel %vm180, %v1440, 0.0
  %v1451 = vadd.f32 %v1449, %v1450
  %v1452 = vsel %vm180, %v1442, 0.0
  %v1453 = vadd.f32 %v1451, %v1452
  %1454 = vadd.xlane.f32.xlu0 %v1453
  %v1455 = vpop.xlane.xlu0 %1454
  %v1456 = vmul.f32 %v1455, %v190
  %v1459 = vunpack.c.l.s4 269488144
  %v1460 = vunpack.c.0.s8 %v1459
  %v1461 = vlaneseq
  %v1462 = vshrl.u32 %v1461, 7
  %v1463 = vsub.s32 %v1460, %v1462
  %v1464 = vrot.slane %v1456, %v1463
  %v1466 = vsub.f32 %v1424, %v1464
  %v1467 = vmul.f32 %v1466, %v1466
  %v1469 = vcombine.high %v1467, %v1467
  %v1471 = vunpack.c.l.s4 1983009808
  %v1472 = vunpack.c.0.s8 %v1471
  %v1473 = vlaneseq
  %v1474 = vshrl.u32 %v1473, 7
  %v1475 = vsub.s32 %v1472, %v1474
  %v1476 = vrot.slane %v1467, %v1475
  %v1478 = vunpack.c.l.s4 1983009808
  %v1479 = vunpack.c.0.s8 %v1478
  %v1480 = vlaneseq
  %v1481 = vshrl.u32 %v1480, 7
  %v1482 = vsub.s32 %v1479, %v1481
  %v1483 = vrot.slane %v1469, %v1482
  %v1484 = vcombine.high %v1476, %v1476
  %v1485 = vcombine.high %v1483, %v1483
  %v1490 = vsel %vm180, %v1476, 0.0
  %v1491 = vsel %vm180, %v1484, 0.0
  %v1492 = vadd.f32 %v1490, %v1491
  %v1493 = vsel %vm180, %v1483, 0.0
  %v1494 = vadd.f32 %v1492, %v1493
  %v1495 = vsel %vm180, %v1485, 0.0
  %v1496 = vadd.f32 %v1494, %v1495
  %1497 = vadd.xlane.f32.xlu0 %v1496
  %v1498 = vpop.xlane.xlu0 %1497
  %v1499 = vmul.f32 %v1498, %v190
  %v1500 = vadd.f32 %v1499, 1e-05
  %v1501 = vrsqrt.pop %v1500
  %v1504 = vunpack.c.l.s4 269488144
  %v1505 = vunpack.c.0.s8 %v1504
  %v1506 = vlaneseq
  %v1507 = vshrl.u32 %v1506, 7
  %v1508 = vsub.s32 %v1505, %v1507
  %v1509 = vrot.slane %v1501, %v1508
  %v1511 = vmul.f32 %v1466, %v1509
  %v1512 = vmul.f32 %v1511, %v280
  %v1513 = vadd.f32 %v1512, %v316
  %v1515 = vcombine.high %v1513, %v1513
  %v1517 = vunpack.c.l.s4 1983009808
  %v1518 = vunpack.c.0.s8 %v1517
  %v1519 = vlaneseq
  %v1520 = vshrl.u32 %v1519, 7
  %v1521 = vsub.s32 %v1518, %v1520
  %v1522 = vrot.slane %v1513, %v1521
  %v1524 = vunpack.c.l.s4 1983009808
  %v1525 = vunpack.c.0.s8 %v1524
  %v1526 = vlaneseq
  %v1527 = vshrl.u32 %v1526, 7
  %v1528 = vsub.s32 %v1525, %v1527
  %v1529 = vrot.slane %v1515, %v1528
  %v1530 = vcombine.high %v1522, %v1522
  %v1531 = vcombine.high %v1529, %v1529
  %v1536 = vpack.c.bf16 %v1522, %v1522
  %v1537 = vpack.c.bf16 %v1530, %v1530
  %v1538 = vpack.c.bf16 %v1529, %v1529
  %v1539 = vpack.c.bf16 %v1531, %v1531
  %1540 = vmatprep.subr.bf16.mxu0 %v751
  %1541 = vmatpush1.bf16.msra.mxu0 %v750
  %1542 = vmatprep.subr.bf16.mxu0 %v755
  %1543 = vmatpush1.bf16.msra.mxu0 %v754
  %1544 = vmatprep.subr.bf16.mxu0 %v759
  %1545 = vmatpush1.bf16.msra.mxu0 %v758
  %1546 = vmatprep.subr.bf16.mxu0 %v763
  %1547 = vmatpush1.bf16.msra.mxu0 %v762
  %1548 = vmatprep.subr.bf16.mxu0 %v767
  %1549 = vmatpush1.bf16.msra.mxu0 %v766
  %1550 = vmatprep.subr.bf16.mxu0 %v771
  %1551 = vmatpush1.bf16.msra.mxu0 %v770
  %1552 = vmatprep.subr.bf16.mxu0 %v775
  %1553 = vmatpush1.bf16.msra.mxu0 %v774
  %1554 = vmatprep.subr.bf16.mxu0 %v779
  %1555 = vmatpush1.bf16.msra.mxu0 %v778
  %1556 = vmatprep.subr.bf16.mxu0 %v783
  %1557 = vmatpush1.bf16.msra.mxu0 %v782
  %1558 = vmatprep.subr.bf16.mxu0 %v787
  %1559 = vmatpush1.bf16.msra.mxu0 %v786
  %1560 = vmatprep.subr.bf16.mxu0 %v791
  %1561 = vmatpush1.bf16.msra.mxu0 %v790
  %1562 = vmatprep.subr.bf16.mxu0 %v795
  %1563 = vmatpush1.bf16.msra.mxu0 %v794
  %1564 = vmatprep.subr.bf16.mxu0 %v799
  %1565 = vmatpush1.bf16.msra.mxu0 %v798
  %1566 = vmatprep.subr.bf16.mxu0 %v803
  %1567 = vmatpush1.bf16.msra.mxu0 %v802
  %1568 = vmatprep.subr.bf16.mxu0 %v807
  %1569 = vmatpush1.bf16.msra.mxu0 %v806
  %1570 = vmatprep.subr.bf16.mxu0 %v811
  %1571 = vmatpush1.bf16.msra.mxu0 %v810
  %1572 = vmatprep.mubr.bf16.mxu0 %v1537
  %1573 = vmatmul.mubr.bf16.gmra.mrb[0].mxu0 %v1536
  %v1574 = vpop.f32.mrb[0].mxu0
  %v1575 = vadd.f32 %v349, %v1574
  %v1576 = vpop.f32.mrb[0].mxu0
  %v1577 = vadd.f32 %v353, %v1576
  %v1578 = vpop.f32.mrb[0].mxu0
  %v1579 = vpop.f32.mrb[0].mxu0
  %1580 = vdwg.mxu0
  %1581 = vmatprep.subr.bf16.mxu0 %v815
  %1582 = vmatpush1.bf16.msra.mxu0 %v814
  %1583 = vmatprep.subr.bf16.mxu0 %v819
  %1584 = vmatpush1.bf16.msra.mxu0 %v818
  %1585 = vmatprep.subr.bf16.mxu0 %v823
  %1586 = vmatpush1.bf16.msra.mxu0 %v822
  %1587 = vmatprep.subr.bf16.mxu0 %v827
  %1588 = vmatpush1.bf16.msra.mxu0 %v826
  %1589 = vmatprep.subr.bf16.mxu0 %v831
  %1590 = vmatpush1.bf16.msra.mxu0 %v830
  %1591 = vmatprep.subr.bf16.mxu0 %v835
  %1592 = vmatpush1.bf16.msra.mxu0 %v834
  %1593 = vmatprep.subr.bf16.mxu0 %v839
  %1594 = vmatpush1.bf16.msra.mxu0 %v838
  %1595 = vmatprep.subr.bf16.mxu0 %v843
  %1596 = vmatpush1.bf16.msra.mxu0 %v842
  %1597 = vmatprep.subr.bf16.mxu0 %v847
  %1598 = vmatpush1.bf16.msra.mxu0 %v846
  %1599 = vmatprep.subr.bf16.mxu0 %v851
  %1600 = vmatpush1.bf16.msra.mxu0 %v850
  %1601 = vmatprep.subr.bf16.mxu0 %v855
  %1602 = vmatpush1.bf16.msra.mxu0 %v854
  %1603 = vmatprep.subr.bf16.mxu0 %v859
  %1604 = vmatpush1.bf16.msra.mxu0 %v858
  %1605 = vmatprep.subr.bf16.mxu0 %v863
  %1606 = vmatpush1.bf16.msra.mxu0 %v862
  %1607 = vmatprep.subr.bf16.mxu0 %v867
  %1608 = vmatpush1.bf16.msra.mxu0 %v866
  %1609 = vmatprep.subr.bf16.mxu0 %v871
  %1610 = vmatpush1.bf16.msra.mxu0 %v870
  %1611 = vmatprep.subr.bf16.mxu0 %v875
  %1612 = vmatpush1.bf16.msra.mxu0 %v874
  %1613 = vmatprep.mubr.bf16.mxu0 %v1539
  %1614 = vmatmul.mubr.bf16.gmra.mrb[0].mxu0 %v1538
  %v1615 = vpop.f32.mrb[0].mxu0
  %v1616 = vadd.f32 %v1575, %v1615
  %v1617 = vpop.f32.mrb[0].mxu0
  %v1618 = vadd.f32 %v1577, %v1617
  %v1619 = vpop.f32.mrb[0].mxu0
  %v1620 = vpop.f32.mrb[0].mxu0
  %1621 = vdwg.mxu0
  %1622 = vmatprep.subr.bf16.mxu0 %v753
  %1623 = vmatpush1.bf16.msra.mxu0 %v752
  %1624 = vmatprep.subr.bf16.mxu0 %v757
  %1625 = vmatpush1.bf16.msra.mxu0 %v756
  %1626 = vmatprep.subr.bf16.mxu0 %v761
  %1627 = vmatpush1.bf16.msra.mxu0 %v760
  %1628 = vmatprep.subr.bf16.mxu0 %v765
  %1629 = vmatpush1.bf16.msra.mxu0 %v764
  %1630 = vmatprep.subr.bf16.mxu0 %v769
  %1631 = vmatpush1.bf16.msra.mxu0 %v768
  %1632 = vmatprep.subr.bf16.mxu0 %v773
  %1633 = vmatpush1.bf16.msra.mxu0 %v772
  %1634 = vmatprep.subr.bf16.mxu0 %v777
  %1635 = vmatpush1.bf16.msra.mxu0 %v776
  %1636 = vmatprep.subr.bf16.mxu0 %v781
  %1637 = vmatpush1.bf16.msra.mxu0 %v780
  %1638 = vmatprep.subr.bf16.mxu0 %v785
  %1639 = vmatpush1.bf16.msra.mxu0 %v784
  %1640 = vmatprep.subr.bf16.mxu0 %v789
  %1641 = vmatpush1.bf16.msra.mxu0 %v788
  %1642 = vmatprep.subr.bf16.mxu0 %v793
  %1643 = vmatpush1.bf16.msra.mxu0 %v792
  %1644 = vmatprep.subr.bf16.mxu0 %v797
  %1645 = vmatpush1.bf16.msra.mxu0 %v796
  %1646 = vmatprep.subr.bf16.mxu0 %v801
  %1647 = vmatpush1.bf16.msra.mxu0 %v800
  %1648 = vmatprep.subr.bf16.mxu0 %v805
  %1649 = vmatpush1.bf16.msra.mxu0 %v804
  %1650 = vmatprep.subr.bf16.mxu0 %v809
  %1651 = vmatpush1.bf16.msra.mxu0 %v808
  %1652 = vmatprep.subr.bf16.mxu0 %v813
  %1653 = vmatpush1.bf16.msra.mxu0 %v812
  %1654 = vmatprep.mubr.bf16.mxu0 %v1537
  %1655 = vmatmul.mubr.bf16.gmra.mrb[0].mxu0 %v1536
  %v1656 = vpop.f32.mrb[0].mxu0
  %v1657 = vadd.f32 %v357, %v1656
  %v1658 = vpop.f32.mrb[0].mxu0
  %v1659 = vadd.f32 %v361, %v1658
  %v1660 = vpop.f32.mrb[0].mxu0
  %v1661 = vpop.f32.mrb[0].mxu0
  %1662 = vdwg.mxu0
  %1663 = vmatprep.subr.bf16.mxu0 %v817
  %1664 = vmatpush1.bf16.msra.mxu0 %v816
  %1665 = vmatprep.subr.bf16.mxu0 %v821
  %1666 = vmatpush1.bf16.msra.mxu0 %v820
  %1667 = vmatprep.subr.bf16.mxu0 %v825
  %1668 = vmatpush1.bf16.msra.mxu0 %v824
  %1669 = vmatprep.subr.bf16.mxu0 %v829
  %1670 = vmatpush1.bf16.msra.mxu0 %v828
  %1671 = vmatprep.subr.bf16.mxu0 %v833
  %1672 = vmatpush1.bf16.msra.mxu0 %v832
  %1673 = vmatprep.subr.bf16.mxu0 %v837
  %1674 = vmatpush1.bf16.msra.mxu0 %v836
  %1675 = vmatprep.subr.bf16.mxu0 %v841
  %1676 = vmatpush1.bf16.msra.mxu0 %v840
  %1677 = vmatprep.subr.bf16.mxu0 %v845
  %1678 = vmatpush1.bf16.msra.mxu0 %v844
  %1679 = vmatprep.subr.bf16.mxu0 %v849
  %1680 = vmatpush1.bf16.msra.mxu0 %v848
  %1681 = vmatprep.subr.bf16.mxu0 %v853
  %1682 = vmatpush1.bf16.msra.mxu0 %v852
  %1683 = vmatprep.subr.bf16.mxu0 %v857
  %1684 = vmatpush1.bf16.msra.mxu0 %v856
  %1685 = vmatprep.subr.bf16.mxu0 %v861
  %1686 = vmatpush1.bf16.msra.mxu0 %v860
  %1687 = vmatprep.subr.bf16.mxu0 %v865
  %1688 = vmatpush1.bf16.msra.mxu0 %v864
  %1689 = vmatprep.subr.bf16.mxu0 %v869
  %1690 = vmatpush1.bf16.msra.mxu0 %v868
  %1691 = vmatprep.subr.bf16.mxu0 %v873
  %1692 = vmatpush1.bf16.msra.mxu0 %v872
  %1693 = vmatprep.subr.bf16.mxu0 %v877
  %1694 = vmatpush1.bf16.msra.mxu0 %v876
  %1695 = vmatprep.mubr.bf16.mxu0 %v1539
  %1696 = vmatmul.mubr.bf16.gmra.mrb[0].mxu0 %v1538
  %v1697 = vpop.f32.mrb[0].mxu0
  %v1698 = vadd.f32 %v1657, %v1697
  %v1699 = vpop.f32.mrb[0].mxu0
  %v1700 = vadd.f32 %v1659, %v1699
  %v1701 = vpop.f32.mrb[0].mxu0
  %v1702 = vpop.f32.mrb[0].mxu0
  %1703 = vdwg.mxu0
  %v1704 = vxor.u32 %v1616, 2147483648
  %v1705 = vxor.u32 %v1618, 2147483648
  %v1706 = vxor.u32 %v1698, 2147483648
  %v1707 = vxor.u32 %v1700, 2147483648
  %v1708 = vmul.f32 %v1704, 1.442695
  %v1709 = vpow.pop %v1708
  %v1710 = vmul.f32 %v1705, 1.442695
  %v1711 = vpow.pop %v1710
  %v1712 = vmul.f32 %v1706, 1.442695
  %v1713 = vpow.pop %v1712
  %v1714 = vmul.f32 %v1707, 1.442695
  %v1715 = vpow.pop %v1714
  %v1716 = vadd.f32 %v1709, 1.0
  %v1717 = vadd.f32 %v1711, 1.0
  %v1718 = vadd.f32 %v1713, 1.0
  %v1719 = vadd.f32 %v1715, 1.0
  %v1720 = vrcp.pop %v1716
  %v1721 = vmul.f32 1.0, %v1720
  %v1722 = vrcp.pop %v1717
  %v1723 = vmul.f32 1.0, %v1722
  %v1724 = vrcp.pop %v1718
  %v1725 = vmul.f32 1.0, %v1724
  %v1726 = vrcp.pop %v1719
  %v1727 = vmul.f32 1.0, %v1726
  %v1728 = vmul.f32 %v1616, %v1721
  %v1729 = vmul.f32 %v1618, %v1723
  %v1730 = vmul.f32 %v1698, %v1725
  %v1731 = vmul.f32 %v1700, %v1727
  %v1732 = vpack.c.bf16 %v1728, %v1728
  %v1733 = vpack.c.bf16 %v1729, %v1729
  %v1734 = vpack.c.bf16 %v1730, %v1730
  %v1735 = vpack.c.bf16 %v1731, %v1731
  %1736 = vmatprep.subr.bf16.mxu0 %v751
  %1737 = vmatpush1.bf16.msra.mxu0 %v750
  %1738 = vmatprep.subr.bf16.mxu0 %v755
  %1739 = vmatpush1.bf16.msra.mxu0 %v754
  %1740 = vmatprep.subr.bf16.mxu0 %v759
  %1741 = vmatpush1.bf16.msra.mxu0 %v758
  %1742 = vmatprep.subr.bf16.mxu0 %v763
  %1743 = vmatpush1.bf16.msra.mxu0 %v762
  %1744 = vmatprep.subr.bf16.mxu0 %v767
  %1745 = vmatpush1.bf16.msra.mxu0 %v766
  %1746 = vmatprep.subr.bf16.mxu0 %v771
  %1747 = vmatpush1.bf16.msra.mxu0 %v770
  %1748 = vmatprep.subr.bf16.mxu0 %v775
  %1749 = vmatpush1.bf16.msra.mxu0 %v774
  %1750 = vmatprep.subr.bf16.mxu0 %v779
  %1751 = vmatpush1.bf16.msra.mxu0 %v778
  %1752 = vmatprep.subr.bf16.mxu0 %v783
  %1753 = vmatpush1.bf16.msra.mxu0 %v782
  %1754 = vmatprep.subr.bf16.mxu0 %v787
  %1755 = vmatpush1.bf16.msra.mxu0 %v786
  %1756 = vmatprep.subr.bf16.mxu0 %v791
  %1757 = vmatpush1.bf16.msra.mxu0 %v790
  %1758 = vmatprep.subr.bf16.mxu0 %v795
  %1759 = vmatpush1.bf16.msra.mxu0 %v794
  %1760 = vmatprep.subr.bf16.mxu0 %v799
  %1761 = vmatpush1.bf16.msra.mxu0 %v798
  %1762 = vmatprep.subr.bf16.mxu0 %v803
  %1763 = vmatpush1.bf16.msra.mxu0 %v802
  %1764 = vmatprep.subr.bf16.mxu0 %v807
  %1765 = vmatpush1.bf16.msra.mxu0 %v806
  %1766 = vmatprep.subr.bf16.mxu0 %v811
  %1767 = vmatpush1.bf16.msra.mxu0 %v810
  %1768 = vmatprep.mubr.bf16.mxu0 %v1733
  %1769 = vmatmul.mubr.bf16.gmra.mrb[0].mxu0 %v1732
  %v1770 = vpop.f32.mrb[0].mxu0
  %v1771 = vadd.f32 %v349, %v1770
  %v1772 = vpop.f32.mrb[0].mxu0
  %v1773 = vadd.f32 %v353, %v1772
  %v1774 = vpop.f32.mrb[0].mxu0
  %v1775 = vpop.f32.mrb[0].mxu0
  %1776 = vdwg.mxu0
  %1777 = vmatprep.subr.bf16.mxu0 %v815
  %1778 = vmatpush1.bf16.msra.mxu0 %v814
  %1779 = vmatprep.subr.bf16.mxu0 %v819
  %1780 = vmatpush1.bf16.msra.mxu0 %v818
  %1781 = vmatprep.subr.bf16.mxu0 %v823
  %1782 = vmatpush1.bf16.msra.mxu0 %v822
  %1783 = vmatprep.subr.bf16.mxu0 %v827
  %1784 = vmatpush1.bf16.msra.mxu0 %v826
  %1785 = vmatprep.subr.bf16.mxu0 %v831
  %1786 = vmatpush1.bf16.msra.mxu0 %v830
  %1787 = vmatprep.subr.bf16.mxu0 %v835
  %1788 = vmatpush1.bf16.msra.mxu0 %v834
  %1789 = vmatprep.subr.bf16.mxu0 %v839
  %1790 = vmatpush1.bf16.msra.mxu0 %v838
  %1791 = vmatprep.subr.bf16.mxu0 %v843
  %1792 = vmatpush1.bf16.msra.mxu0 %v842
  %1793 = vmatprep.subr.bf16.mxu0 %v847
  %1794 = vmatpush1.bf16.msra.mxu0 %v846
  %1795 = vmatprep.subr.bf16.mxu0 %v851
  %1796 = vmatpush1.bf16.msra.mxu0 %v850
  %1797 = vmatprep.subr.bf16.mxu0 %v855
  %1798 = vmatpush1.bf16.msra.mxu0 %v854
  %1799 = vmatprep.subr.bf16.mxu0 %v859
  %1800 = vmatpush1.bf16.msra.mxu0 %v858
  %1801 = vmatprep.subr.bf16.mxu0 %v863
  %1802 = vmatpush1.bf16.msra.mxu0 %v862
  %1803 = vmatprep.subr.bf16.mxu0 %v867
  %1804 = vmatpush1.bf16.msra.mxu0 %v866
  %1805 = vmatprep.subr.bf16.mxu0 %v871
  %1806 = vmatpush1.bf16.msra.mxu0 %v870
  %1807 = vmatprep.subr.bf16.mxu0 %v875
  %1808 = vmatpush1.bf16.msra.mxu0 %v874
  %1809 = vmatprep.mubr.bf16.mxu0 %v1735
  %1810 = vmatmul.mubr.bf16.gmra.mrb[0].mxu0 %v1734
  %v1811 = vpop.f32.mrb[0].mxu0
  %v1812 = vadd.f32 %v1771, %v1811
  %v1813 = vpop.f32.mrb[0].mxu0
  %v1814 = vadd.f32 %v1773, %v1813
  %v1815 = vpop.f32.mrb[0].mxu0
  %v1816 = vpop.f32.mrb[0].mxu0
  %1817 = vdwg.mxu0
  %1818 = vmatprep.subr.bf16.mxu0 %v753
  %1819 = vmatpush1.bf16.msra.mxu0 %v752
  %1820 = vmatprep.subr.bf16.mxu0 %v757
  %1821 = vmatpush1.bf16.msra.mxu0 %v756
  %1822 = vmatprep.subr.bf16.mxu0 %v761
  %1823 = vmatpush1.bf16.msra.mxu0 %v760
  %1824 = vmatprep.subr.bf16.mxu0 %v765
  %1825 = vmatpush1.bf16.msra.mxu0 %v764
  %1826 = vmatprep.subr.bf16.mxu0 %v769
  %1827 = vmatpush1.bf16.msra.mxu0 %v768
  %1828 = vmatprep.subr.bf16.mxu0 %v773
  %1829 = vmatpush1.bf16.msra.mxu0 %v772
  %1830 = vmatprep.subr.bf16.mxu0 %v777
  %1831 = vmatpush1.bf16.msra.mxu0 %v776
  %1832 = vmatprep.subr.bf16.mxu0 %v781
  %1833 = vmatpush1.bf16.msra.mxu0 %v780
  %1834 = vmatprep.subr.bf16.mxu0 %v785
  %1835 = vmatpush1.bf16.msra.mxu0 %v784
  %1836 = vmatprep.subr.bf16.mxu0 %v789
  %1837 = vmatpush1.bf16.msra.mxu0 %v788
  %1838 = vmatprep.subr.bf16.mxu0 %v793
  %1839 = vmatpush1.bf16.msra.mxu0 %v792
  %1840 = vmatprep.subr.bf16.mxu0 %v797
  %1841 = vmatpush1.bf16.msra.mxu0 %v796
  %1842 = vmatprep.subr.bf16.mxu0 %v801
  %1843 = vmatpush1.bf16.msra.mxu0 %v800
  %1844 = vmatprep.subr.bf16.mxu0 %v805
  %1845 = vmatpush1.bf16.msra.mxu0 %v804
  %1846 = vmatprep.subr.bf16.mxu0 %v809
  %1847 = vmatpush1.bf16.msra.mxu0 %v808
  %1848 = vmatprep.subr.bf16.mxu0 %v813
  %1849 = vmatpush1.bf16.msra.mxu0 %v812
  %1850 = vmatprep.mubr.bf16.mxu0 %v1733
  %1851 = vmatmul.mubr.bf16.gmra.mrb[0].mxu0 %v1732
  %v1852 = vpop.f32.mrb[0].mxu0
  %v1853 = vadd.f32 %v357, %v1852
  %v1854 = vpop.f32.mrb[0].mxu0
  %v1855 = vadd.f32 %v361, %v1854
  %v1856 = vpop.f32.mrb[0].mxu0
  %v1857 = vpop.f32.mrb[0].mxu0
  %1858 = vdwg.mxu0
  %1859 = vmatprep.subr.bf16.mxu0 %v817
  %1860 = vmatpush1.bf16.msra.mxu0 %v816
  %1861 = vmatprep.subr.bf16.mxu0 %v821
  %1862 = vmatpush1.bf16.msra.mxu0 %v820
  %1863 = vmatprep.subr.bf16.mxu0 %v825
  %1864 = vmatpush1.bf16.msra.mxu0 %v824
  %1865 = vmatprep.subr.bf16.mxu0 %v829
  %1866 = vmatpush1.bf16.msra.mxu0 %v828
  %1867 = vmatprep.subr.bf16.mxu0 %v833
  %1868 = vmatpush1.bf16.msra.mxu0 %v832
  %1869 = vmatprep.subr.bf16.mxu0 %v837
  %1870 = vmatpush1.bf16.msra.mxu0 %v836
  %1871 = vmatprep.subr.bf16.mxu0 %v841
  %1872 = vmatpush1.bf16.msra.mxu0 %v840
  %1873 = vmatprep.subr.bf16.mxu0 %v845
  %1874 = vmatpush1.bf16.msra.mxu0 %v844
  %1875 = vmatprep.subr.bf16.mxu0 %v849
  %1876 = vmatpush1.bf16.msra.mxu0 %v848
  %1877 = vmatprep.subr.bf16.mxu0 %v853
  %1878 = vmatpush1.bf16.msra.mxu0 %v852
  %1879 = vmatprep.subr.bf16.mxu0 %v857
  %1880 = vmatpush1.bf16.msra.mxu0 %v856
  %1881 = vmatprep.subr.bf16.mxu0 %v861
  %1882 = vmatpush1.bf16.msra.mxu0 %v860
  %1883 = vmatprep.subr.bf16.mxu0 %v865
  %1884 = vmatpush1.bf16.msra.mxu0 %v864
  %1885 = vmatprep.subr.bf16.mxu0 %v869
  %1886 = vmatpush1.bf16.msra.mxu0 %v868
  %1887 = vmatprep.subr.bf16.mxu0 %v873
  %1888 = vmatpush1.bf16.msra.mxu0 %v872
  %1889 = vmatprep.subr.bf16.mxu0 %v877
  %1890 = vmatpush1.bf16.msra.mxu0 %v876
  %1891 = vmatprep.mubr.bf16.mxu0 %v1735
  %1892 = vmatmul.mubr.bf16.gmra.mrb[0].mxu0 %v1734
  %v1893 = vpop.f32.mrb[0].mxu0
  %v1894 = vadd.f32 %v1853, %v1893
  %v1895 = vpop.f32.mrb[0].mxu0
  %v1896 = vadd.f32 %v1855, %v1895
  %v1897 = vpop.f32.mrb[0].mxu0
  %v1898 = vpop.f32.mrb[0].mxu0
  %1899 = vdwg.mxu0
  %v1900 = vxor.u32 %v1812, 2147483648
  %v1901 = vxor.u32 %v1814, 2147483648
  %v1902 = vxor.u32 %v1894, 2147483648
  %v1903 = vxor.u32 %v1896, 2147483648
  %v1904 = vmul.f32 %v1900, 1.442695
  %v1905 = vpow.pop %v1904
  %v1906 = vmul.f32 %v1901, 1.442695
  %v1907 = vpow.pop %v1906
  %v1908 = vmul.f32 %v1902, 1.442695
  %v1909 = vpow.pop %v1908
  %v1910 = vmul.f32 %v1903, 1.442695
  %v1911 = vpow.pop %v1910
  %v1912 = vadd.f32 %v1905, 1.0
  %v1913 = vadd.f32 %v1907, 1.0
  %v1914 = vadd.f32 %v1909, 1.0
  %v1915 = vadd.f32 %v1911, 1.0
  %v1916 = vrcp.pop %v1912
  %v1917 = vmul.f32 1.0, %v1916
  %v1918 = vrcp.pop %v1913
  %v1919 = vmul.f32 1.0, %v1918
  %v1920 = vrcp.pop %v1914
  %v1921 = vmul.f32 1.0, %v1920
  %v1922 = vrcp.pop %v1915
  %v1923 = vmul.f32 1.0, %v1922
  %v1924 = vmul.f32 %v1812, %v1917
  %v1925 = vmul.f32 %v1814, %v1919
  %v1926 = vmul.f32 %v1894, %v1921
  %v1927 = vmul.f32 %v1896, %v1923
  %v1928 = vsub.f32 %v1924, %v1522
  %v1929 = vsub.f32 %v1925, %v1530
  %v1930 = vsub.f32 %v1926, %v1529
  %v1931 = vsub.f32 %v1927, %v1531
  %v1932 = vmul.f32 %v1928, 0.5
  %v1933 = vmul.f32 %v1929, 0.5
  %v1934 = vmul.f32 %v1930, 0.5
  %v1935 = vmul.f32 %v1931, 0.5
  %v1940 = vcombine.low %v1932, %v1933
  %v1941 = vcombine.low %v1934, %v1935
  %v1943 = vunpack.c.l.s4 1983009808
  %v1944 = vunpack.c.0.s8 %v1943
  %v1945 = vlaneseq
  %v1946 = vshrl.u32 %v1945, 7
  %v1947 = vsub.s32 %v1944, %v1946
  %v1948 = vrot.slane %v1940, %v1947
  %v1950 = vunpack.c.l.s4 1983009808
  %v1951 = vunpack.c.0.s8 %v1950
  %v1952 = vlaneseq
  %v1953 = vshrl.u32 %v1952, 7
  %v1954 = vsub.s32 %v1951, %v1953
  %v1955 = vrot.slane %v1941, %v1954
  %v1956 = vcombine.low %v1948, %v1955
  %v1958 = vadd.f32 %v1424, %v1956
  %v1959 = vld [vmem:[%s5] sm:$0xf]
  %v1960 = vld [vmem:[%s6] sm:$0xf]
  %v1962 = vcombine.high %v1958, %v1958
  %v1964 = vunpack.c.l.s4 1983009808
  %v1965 = vunpack.c.0.s8 %v1964
  %v1966 = vlaneseq
  %v1967 = vshrl.u32 %v1966, 7
  %v1968 = vsub.s32 %v1965, %v1967
  %v1969 = vrot.slane %v1958, %v1968
  %v1971 = vunpack.c.l.s4 1983009808
  %v1972 = vunpack.c.0.s8 %v1971
  %v1973 = vlaneseq
  %v1974 = vshrl.u32 %v1973, 7
  %v1975 = vsub.s32 %v1972, %v1974
  %v1976 = vrot.slane %v1962, %v1975
  %v1977 = vcombine.high %v1969, %v1969
  %v1978 = vcombine.high %v1976, %v1976
  %v1983 = vsel %vm180, %v1969, 0.0
  %v1984 = vsel %vm180, %v1977, 0.0
  %v1985 = vadd.f32 %v1983, %v1984
  %v1986 = vsel %vm180, %v1976, 0.0
  %v1987 = vadd.f32 %v1985, %v1986
  %v1988 = vsel %vm180, %v1978, 0.0
  %v1989 = vadd.f32 %v1987, %v1988
  %1990 = vadd.xlane.f32.xlu0 %v1989
  %v1991 = vpop.xlane.xlu0 %1990
  %v1992 = vmul.f32 %v1991, %v190
  %v1995 = vunpack.c.l.s4 269488144
  %v1996 = vunpack.c.0.s8 %v1995
  %v1997 = vlaneseq
  %v1998 = vshrl.u32 %v1997, 7
  %v1999 = vsub.s32 %v1996, %v1998
  %v2000 = vrot.slane %v1992, %v1999
  %v2002 = vsub.f32 %v1958, %v2000
  %v2003 = vmul.f32 %v2002, %v2002
  %v2005 = vcombine.high %v2003, %v2003
  %v2007 = vunpack.c.l.s4 1983009808
  %v2008 = vunpack.c.0.s8 %v2007
  %v2009 = vlaneseq
  %v2010 = vshrl.u32 %v2009, 7
  %v2011 = vsub.s32 %v2008, %v2010
  %v2012 = vrot.slane %v2003, %v2011
  %v2014 = vunpack.c.l.s4 1983009808
  %v2015 = vunpack.c.0.s8 %v2014
  %v2016 = vlaneseq
  %v2017 = vshrl.u32 %v2016, 7
  %v2018 = vsub.s32 %v2015, %v2017
  %v2019 = vrot.slane %v2005, %v2018
  %v2020 = vcombine.high %v2012, %v2012
  %v2021 = vcombine.high %v2019, %v2019
  %v2026 = vsel %vm180, %v2012, 0.0
  %v2027 = vsel %vm180, %v2020, 0.0
  %v2028 = vadd.f32 %v2026, %v2027
  %v2029 = vsel %vm180, %v2019, 0.0
  %v2030 = vadd.f32 %v2028, %v2029
  %v2031 = vsel %vm180, %v2021, 0.0
  %v2032 = vadd.f32 %v2030, %v2031
  %2033 = vadd.xlane.f32.xlu0 %v2032
  %v2034 = vpop.xlane.xlu0 %2033
  %v2035 = vmul.f32 %v2034, %v190
  %v2036 = vadd.f32 %v2035, 1e-05
  %v2037 = vrsqrt.pop %v2036
  %v2040 = vunpack.c.l.s4 269488144
  %v2041 = vunpack.c.0.s8 %v2040
  %v2042 = vlaneseq
  %v2043 = vshrl.u32 %v2042, 7
  %v2044 = vsub.s32 %v2041, %v2043
  %v2045 = vrot.slane %v2037, %v2044
  %v2047 = vmul.f32 %v2002, %v2045
  %v2049 = vlaneseq
  %v2050 = vshrl.u32 %v2049, 7
  %v2051 = vsub.s32 0, %v2050
  %v2052 = vrot.slane %v1959, %v2051
  %v2053 = vlaneseq
  %v2054 = vshrl.u32 %v2053, 7
  %v2055 = vsub.s32 1, %v2054
  %v2056 = vrot.slane %v1959, %v2055
  %v2057 = vlaneseq
  %v2058 = vshrl.u32 %v2057, 7
  %v2059 = vsub.s32 2, %v2058
  %v2060 = vrot.slane %v1959, %v2059
  %v2061 = vlaneseq
  %v2062 = vshrl.u32 %v2061, 7
  %v2063 = vsub.s32 3, %v2062
  %v2064 = vrot.slane %v1959, %v2063
  %v2065 = vcombine.low %v2052, %v2056
  %v2066 = vcombine.low %v2060, %v2064
  %v2068 = vunpack.c.l.s4 1983009808
  %v2069 = vunpack.c.0.s8 %v2068
  %v2070 = vlaneseq
  %v2071 = vshrl.u32 %v2070, 7
  %v2072 = vsub.s32 %v2069, %v2071
  %v2073 = vrot.slane %v2065, %v2072
  %v2075 = vunpack.c.l.s4 1983009808
  %v2076 = vunpack.c.0.s8 %v2075
  %v2077 = vlaneseq
  %v2078 = vshrl.u32 %v2077, 7
  %v2079 = vsub.s32 %v2076, %v2078
  %v2080 = vrot.slane %v2066, %v2079
  %v2081 = vcombine.low %v2073, %v2080
  %v2083 = vmul.f32 %v2047, %v2081
  %v2085 = vlaneseq
  %v2086 = vshrl.u32 %v2085, 7
  %v2087 = vsub.s32 0, %v2086
  %v2088 = vrot.slane %v1960, %v2087
  %v2089 = vlaneseq
  %v2090 = vshrl.u32 %v2089, 7
  %v2091 = vsub.s32 1, %v2090
  %v2092 = vrot.slane %v1960, %v2091
  %v2093 = vlaneseq
  %v2094 = vshrl.u32 %v2093, 7
  %v2095 = vsub.s32 2, %v2094
  %v2096 = vrot.slane %v1960, %v2095
  %v2097 = vlaneseq
  %v2098 = vshrl.u32 %v2097, 7
  %v2099 = vsub.s32 3, %v2098
  %v2100 = vrot.slane %v1960, %v2099
  %v2101 = vcombine.low %v2088, %v2092
  %v2102 = vcombine.low %v2096, %v2100
  %v2104 = vunpack.c.l.s4 1983009808
  %v2105 = vunpack.c.0.s8 %v2104
  %v2106 = vlaneseq
  %v2107 = vshrl.u32 %v2106, 7
  %v2108 = vsub.s32 %v2105, %v2107
  %v2109 = vrot.slane %v2101, %v2108
  %v2111 = vunpack.c.l.s4 1983009808
  %v2112 = vunpack.c.0.s8 %v2111
  %v2113 = vlaneseq
  %v2114 = vshrl.u32 %v2113, 7
  %v2115 = vsub.s32 %v2112, %v2114
  %v2116 = vrot.slane %v2102, %v2115
  %v2117 = vcombine.low %v2109, %v2116
  %v2119 = vadd.f32 %v2083, %v2117
  %2120 = vst [vmem:[%s7] sm:$0xff] %v2119
  // Predicated region
  $region30: #{model_forward.4} parent=0 // pred_check
    _
  $region31: #{model_forward.4} parent=0 // pred_check_branch
    %2122 = sbr.rel (0) target = $region33
  $region32: #{model_forward.4} parent=0 // pred_region
    _
  $region33: #{model_forward.4} parent=0 // pred_fallthru
    _
  // Predicated region
  $region34: #{model_forward.4} parent=0 // pred_check
    _
  $region35: #{model_forward.4} parent=0 // pred_check_branch
    %2124 = sbr.rel (0) target = $region37
  $region36: #{model_forward.4} parent=0 // pred_region
    _
  $region37: #{model_forward.4} parent=0 // pred_fallthru
    _

</llo_original>
